<compile_context>
chip_gen: v5e
topology: v5e:2x2
jax: 0.10.0
libtpu: 0.0.40
codegen_flags: <defaults>
</compile_context>

<pallas_src>
import functools

import jax
import jax.numpy as jnp
from jax.experimental import pallas as pl
from jax.experimental.pallas import tpu as pltpu

EPS = 1e-5  # nn.InstanceNorm2d default eps


def _in_relu(y, normalize):
    """InstanceNorm2d(affine=False) over spatial axis 0 (one-pass stats) + ReLU."""
    if normalize:
        mean = jnp.mean(y, axis=0, keepdims=True)
        var = jnp.mean(y * y, axis=0, keepdims=True) - mean * mean
        y = (y - mean) * jax.lax.rsqrt(var + EPS)
    return jnp.maximum(y, 0.0)


def _resblock_kernel(xp_ref, w1_ref, w2_ref, wi_ref, bi_ref, out_ref, h1_ref,
                     *, H, W, normalize):
    # xp_ref:  (1, H+2, W+2, Cin) bf16  halo-padded input, one sample
    # w1_ref:  (9, Cin, C)        bf16  conv1 taps, tap index t = ky*3 + kx
    # w2_ref:  (9, C,   C)        bf16  conv2 taps
    # wi_ref:  (Cin, C)           bf16  1x1 identity conv
    # bi_ref:  (1, C)             f32   identity bias
    # out_ref: (1, H, W, C)       f32
    # h1_ref:  (H+2, W+2, C)      bf16  VMEM scratch (halo-padded intermediate)
    P = H * W
    Cin = xp_ref.shape[-1]
    C = out_ref.shape[-1]

    xp = xp_ref[0]                                            # (H+2, W+2, Cin)

    # ---- conv1: 9 shifted taps, contraction over Cin (MXU, bf16 -> f32) ----
    acc = jnp.zeros((P, C), jnp.float32)
    for ky in range(3):
        for kx in range(3):
            slab = xp[ky:ky + H, kx:kx + W, :].reshape(P, Cin)
            acc = acc + jnp.dot(slab, w1_ref[ky * 3 + kx],
                                preferred_element_type=jnp.float32)
    y1 = _in_relu(acc, normalize)                             # (P, C) f32

    # ---- intermediate stays in halo-padded VMEM scratch (no HBM traffic) ----
    h1_ref[...] = jnp.zeros((H + 2, W + 2, C), h1_ref.dtype)
    h1_ref[1:H + 1, 1:W + 1, :] = y1.reshape(H, W, C).astype(h1_ref.dtype)
    h1 = h1_ref[...]                                          # (H+2, W+2, C)

    # ---- conv2: 9 shifted taps, contraction over C ----
    acc2 = jnp.zeros((P, C), jnp.float32)
    for ky in range(3):
        for kx in range(3):
            slab = h1[ky:ky + H, kx:kx + W, :].reshape(P, C)
            acc2 = acc2 + jnp.dot(slab, w2_ref[ky * 3 + kx],
                                  preferred_element_type=jnp.float32)
    y2 = _in_relu(acc2, normalize)                            # (P, C) f32

    # ---- identity 1x1 conv (with bias) + skip + final ReLU ----
    xc = xp[1:H + 1, 1:W + 1, :].reshape(P, Cin)              # unpadded input
    res = jnp.dot(xc, wi_ref[...], preferred_element_type=jnp.float32)
    res = res + bi_ref[...]
    out = jnp.maximum(y2 + res, 0.0)
    out_ref[0] = out.reshape(H, W, C).astype(out_ref.dtype)


def res_block(x_nchw, params, *, normalize=True):
    """ResBlock forward, stride=1.  x: (N, Cin, H, W) f32 -> (N, C, H, W) f32."""
    N, Cin, H, W = x_nchw.shape
    w1, w2, wi, bi = params["w1"], params["w2"], params["wi"], params["bi"]
    C = w1.shape[-1]

    # NCHW -> NHWC, halo-pad once, cast matmul operands to bf16.
    x = jnp.transpose(x_nchw, (0, 2, 3, 1))
    xp = jnp.pad(x, ((0, 0), (1, 1), (1, 1), (0, 0))).astype(jnp.bfloat16)
    w1t = w1.reshape(9, Cin, C).astype(jnp.bfloat16)          # (ky,kx) -> tap
    w2t = w2.reshape(9, C, C).astype(jnp.bfloat16)
    wib = wi.astype(jnp.bfloat16)
    bib = bi.reshape(1, C).astype(jnp.float32)

    Hp, Wp = H + 2, W + 2
    out = pl.pallas_call(
        functools.partial(_resblock_kernel, H=H, W=W, normalize=normalize),
        out_shape=jax.ShapeDtypeStruct((N, H, W, C), jnp.float32),
        grid=(N,),
        in_specs=[
            pl.BlockSpec((1, Hp, Wp, Cin), lambda n: (n, 0, 0, 0)),
            pl.BlockSpec((9, Cin, C), lambda n: (0, 0, 0)),   # weights resident
            pl.BlockSpec((9, C, C), lambda n: (0, 0, 0)),     # weights resident
            pl.BlockSpec((Cin, C), lambda n: (0, 0)),
            pl.BlockSpec((1, C), lambda n: (0, 0)),
        ],
        out_specs=pl.BlockSpec((1, H, W, C), lambda n: (n, 0, 0, 0)),
        scratch_shapes=[pltpu.VMEM((Hp, Wp, C), jnp.bfloat16)],
        compiler_params=pltpu.CompilerParams(
            dimension_semantics=("parallel",),
            vmem_limit_bytes=32 * 1024 * 1024,
        ),
    )(xp, w1t, w2t, wib, bib)
    return jnp.transpose(out, (0, 3, 1, 2))                   # back to NCHW


# --------------------------- pure-JAX f32 reference ---------------------------
def _res_block_ref(x_nchw, params, *, normalize=True):
    x = jnp.transpose(x_nchw, (0, 2, 3, 1))

    def conv3(h, w):
        return jax.lax.conv_general_dilated(
            h, w, window_strides=(1, 1), padding=((1, 1), (1, 1)),
            dimension_numbers=("NHWC", "HWIO", "NHWC"))

    def in_relu(h):
        if normalize:
            m = jnp.mean(h, axis=(1, 2), keepdims=True)
            v = jnp.var(h, axis=(1, 2), keepdims=True)
            h = (h - m) * jax.lax.rsqrt(v + EPS)
        return jax.nn.relu(h)

    h = in_relu(conv3(x, params["w1"]))
    h = in_relu(conv3(h, params["w2"]))
    res = jnp.einsum("nhwc,cd->nhwd", x, params["wi"]) + params["bi"]
    out = jax.nn.relu(h + res)
    return jnp.transpose(out, (0, 3, 1, 2))


def init_params(key, cin, cout):
    ks = jax.random.split(key, 4)

    def uni(k, shape, fan_in):
        b = 1.0 / (fan_in ** 0.5)
        return jax.random.uniform(k, shape, jnp.float32, -b, b)

    return {
        "w1": uni(ks[0], (3, 3, cin, cout), 9 * cin),    # conv1 (HWIO), no bias
        "w2": uni(ks[1], (3, 3, cout, cout), 9 * cout),  # conv2 (HWIO), no bias
        "wi": uni(ks[2], (cin, cout), cin),              # 1x1 identity conv
        "bi": uni(ks[3], (cout,), cin),                  # identity conv bias
    }


if __name__ == "__main__":
    key = jax.random.PRNGKey(0)
    pkey, xkey = jax.random.split(key)

    N, Cin, C, H, W = 2, 4, 32, 16, 16
    params = init_params(pkey, Cin, C)
    x = jax.random.normal(xkey, (N, Cin, H, W), jnp.float32)

    out = res_block(x, params, normalize=True)
    jax.block_until_ready(out)
    assert out.shape == (N, C, H, W) and out.dtype == jnp.float32

    ref = _res_block_ref(x, params, normalize=True)
    err = float(jnp.max(jnp.abs(out - ref)))
    assert err < 1e-1, f"max abs err vs f32 reference: {err}"

    print("KERNEL_OK")
</pallas_src>

<mosaic_0001>
module attributes {stable_mosaic.version = 11 : i64} {
  func.func @_resblock_kernel(%arg0: i32, %arg1: memref<1x18x18x4xbf16, #tpu.memory_space<vmem>>, %arg2: memref<9x4x32xbf16, #tpu.memory_space<vmem>>, %arg3: memref<9x32x32xbf16, #tpu.memory_space<vmem>>, %arg4: memref<4x32xbf16, #tpu.memory_space<vmem>>, %arg5: memref<1x32xf32, #tpu.memory_space<vmem>>, %arg6: memref<1x16x16x32xf32, #tpu.memory_space<vmem>>, %arg7: memref<18x18x32xbf16, #tpu.memory_space<vmem>>) attributes {dimension_semantics = [#tpu.dimension_semantics<parallel>], iteration_bounds = array<i64: 2>, scalar_prefetch = 0 : i64, scratch_operands = 1 : i64, tpu.core_type = #tpu.core_type<tc>, window_params = [{transform_indices = @transform_0, window_bounds = array<i64: 1, 18, 18, 4>}, {pipeline_mode = #tpu.pipeline_mode<synchronous>, transform_indices = @transform_1, window_bounds = array<i64: 9, 4, 32>}, {pipeline_mode = #tpu.pipeline_mode<synchronous>, transform_indices = @transform_2, window_bounds = array<i64: 9, 32, 32>}, {pipeline_mode = #tpu.pipeline_mode<synchronous>, transform_indices = @transform_3, window_bounds = array<i64: 4, 32>}, {pipeline_mode = #tpu.pipeline_mode<synchronous>, transform_indices = @transform_4, window_bounds = array<i64: 1, 32>}, {transform_indices = @transform_5, window_bounds = array<i64: 1, 16, 16, 32>}]} {
    %c0 = arith.constant 0 : index
    %c0_0 = arith.constant 0 : index
    %c0_1 = arith.constant 0 : index
    %c0_2 = arith.constant 0 : index
    %0 = vector.load %arg1[%c0, %c0_0, %c0_1, %c0_2] : memref<1x18x18x4xbf16, #tpu.memory_space<vmem>>, vector<1x18x18x4xbf16>
    %1 = vector.shape_cast %0 : vector<1x18x18x4xbf16> to vector<18x18x4xbf16>
    %cst = arith.constant 0.000000e+00 : f32
    %2 = vector.broadcast %cst : f32 to vector<256x32xf32>
    %3 = vector.extract_strided_slice %1 {offsets = [0, 0, 0], sizes = [16, 16, 4], strides = [1, 1, 1]} : vector<18x18x4xbf16> to vector<16x16x4xbf16>
    %4 = vector.shape_cast %3 : vector<16x16x4xbf16> to vector<256x4xbf16>
    %c0_3 = arith.constant 0 : index
    %c0_4 = arith.constant 0 : index
    %c0_5 = arith.constant 0 : index
    %5 = vector.load %arg2[%c0_3, %c0_4, %c0_5] : memref<9x4x32xbf16, #tpu.memory_space<vmem>>, vector<1x4x32xbf16>
    %6 = vector.shape_cast %5 : vector<1x4x32xbf16> to vector<4x32xbf16>
    %cst_6 = arith.constant dense<0.000000e+00> : vector<256x32xf32>
    %7 = tpu.matmul %4, %6, %cst_6 {dimension_numbers = #tpu.dot_dimension_numbers<[1], [0], [0], [1], [0, 0, 1, 1], [], []>} : vector<256x4xbf16>, vector<4x32xbf16>, vector<256x32xf32> -> vector<256x32xf32>
    %8 = arith.addf %2, %7 : vector<256x32xf32>
    %9 = vector.extract_strided_slice %1 {offsets = [0, 1, 0], sizes = [16, 16, 4], strides = [1, 1, 1]} : vector<18x18x4xbf16> to vector<16x16x4xbf16>
    %10 = vector.shape_cast %9 : vector<16x16x4xbf16> to vector<256x4xbf16>
    %c1 = arith.constant 1 : index
    %c0_7 = arith.constant 0 : index
    %c0_8 = arith.constant 0 : index
    %11 = vector.load %arg2[%c1, %c0_7, %c0_8] : memref<9x4x32xbf16, #tpu.memory_space<vmem>>, vector<1x4x32xbf16>
    %12 = vector.shape_cast %11 : vector<1x4x32xbf16> to vector<4x32xbf16>
    %cst_9 = arith.constant dense<0.000000e+00> : vector<256x32xf32>
    %13 = tpu.matmul %10, %12, %cst_9 {dimension_numbers = #tpu.dot_dimension_numbers<[1], [0], [0], [1], [0, 0, 1, 1], [], []>} : vector<256x4xbf16>, vector<4x32xbf16>, vector<256x32xf32> -> vector<256x32xf32>
    %14 = arith.addf %8, %13 : vector<256x32xf32>
    %15 = vector.extract_strided_slice %1 {offsets = [0, 2, 0], sizes = [16, 16, 4], strides = [1, 1, 1]} : vector<18x18x4xbf16> to vector<16x16x4xbf16>
    %16 = vector.shape_cast %15 : vector<16x16x4xbf16> to vector<256x4xbf16>
    %c2 = arith.constant 2 : index
    %c0_10 = arith.constant 0 : index
    %c0_11 = arith.constant 0 : index
    %17 = vector.load %arg2[%c2, %c0_10, %c0_11] : memref<9x4x32xbf16, #tpu.memory_space<vmem>>, vector<1x4x32xbf16>
    %18 = vector.shape_cast %17 : vector<1x4x32xbf16> to vector<4x32xbf16>
    %cst_12 = arith.constant dense<0.000000e+00> : vector<256x32xf32>
    %19 = tpu.matmul %16, %18, %cst_12 {dimension_numbers = #tpu.dot_dimension_numbers<[1], [0], [0], [1], [0, 0, 1, 1], [], []>} : vector<256x4xbf16>, vector<4x32xbf16>, vector<256x32xf32> -> vector<256x32xf32>
    %20 = arith.addf %14, %19 : vector<256x32xf32>
    %21 = vector.extract_strided_slice %1 {offsets = [1, 0, 0], sizes = [16, 16, 4], strides = [1, 1, 1]} : vector<18x18x4xbf16> to vector<16x16x4xbf16>
    %22 = vector.shape_cast %21 : vector<16x16x4xbf16> to vector<256x4xbf16>
    %c3 = arith.constant 3 : index
    %c0_13 = arith.constant 0 : index
    %c0_14 = arith.constant 0 : index
    %23 = vector.load %arg2[%c3, %c0_13, %c0_14] : memref<9x4x32xbf16, #tpu.memory_space<vmem>>, vector<1x4x32xbf16>
    %24 = vector.shape_cast %23 : vector<1x4x32xbf16> to vector<4x32xbf16>
    %cst_15 = arith.constant dense<0.000000e+00> : vector<256x32xf32>
    %25 = tpu.matmul %22, %24, %cst_15 {dimension_numbers = #tpu.dot_dimension_numbers<[1], [0], [0], [1], [0, 0, 1, 1], [], []>} : vector<256x4xbf16>, vector<4x32xbf16>, vector<256x32xf32> -> vector<256x32xf32>
    %26 = arith.addf %20, %25 : vector<256x32xf32>
    %27 = vector.extract_strided_slice %1 {offsets = [1, 1, 0], sizes = [16, 16, 4], strides = [1, 1, 1]} : vector<18x18x4xbf16> to vector<16x16x4xbf16>
    %28 = vector.shape_cast %27 : vector<16x16x4xbf16> to vector<256x4xbf16>
    %c4 = arith.constant 4 : index
    %c0_16 = arith.constant 0 : index
    %c0_17 = arith.constant 0 : index
    %29 = vector.load %arg2[%c4, %c0_16, %c0_17] : memref<9x4x32xbf16, #tpu.memory_space<vmem>>, vector<1x4x32xbf16>
    %30 = vector.shape_cast %29 : vector<1x4x32xbf16> to vector<4x32xbf16>
    %cst_18 = arith.constant dense<0.000000e+00> : vector<256x32xf32>
    %31 = tpu.matmul %28, %30, %cst_18 {dimension_numbers = #tpu.dot_dimension_numbers<[1], [0], [0], [1], [0, 0, 1, 1], [], []>} : vector<256x4xbf16>, vector<4x32xbf16>, vector<256x32xf32> -> vector<256x32xf32>
    %32 = arith.addf %26, %31 : vector<256x32xf32>
    %33 = vector.extract_strided_slice %1 {offsets = [1, 2, 0], sizes = [16, 16, 4], strides = [1, 1, 1]} : vector<18x18x4xbf16> to vector<16x16x4xbf16>
    %34 = vector.shape_cast %33 : vector<16x16x4xbf16> to vector<256x4xbf16>
    %c5 = arith.constant 5 : index
    %c0_19 = arith.constant 0 : index
    %c0_20 = arith.constant 0 : index
    %35 = vector.load %arg2[%c5, %c0_19, %c0_20] : memref<9x4x32xbf16, #tpu.memory_space<vmem>>, vector<1x4x32xbf16>
    %36 = vector.shape_cast %35 : vector<1x4x32xbf16> to vector<4x32xbf16>
    %cst_21 = arith.constant dense<0.000000e+00> : vector<256x32xf32>
    %37 = tpu.matmul %34, %36, %cst_21 {dimension_numbers = #tpu.dot_dimension_numbers<[1], [0], [0], [1], [0, 0, 1, 1], [], []>} : vector<256x4xbf16>, vector<4x32xbf16>, vector<256x32xf32> -> vector<256x32xf32>
    %38 = arith.addf %32, %37 : vector<256x32xf32>
    %39 = vector.extract_strided_slice %1 {offsets = [2, 0, 0], sizes = [16, 16, 4], strides = [1, 1, 1]} : vector<18x18x4xbf16> to vector<16x16x4xbf16>
    %40 = vector.shape_cast %39 : vector<16x16x4xbf16> to vector<256x4xbf16>
    %c6 = arith.constant 6 : index
    %c0_22 = arith.constant 0 : index
    %c0_23 = arith.constant 0 : index
    %41 = vector.load %arg2[%c6, %c0_22, %c0_23] : memref<9x4x32xbf16, #tpu.memory_space<vmem>>, vector<1x4x32xbf16>
    %42 = vector.shape_cast %41 : vector<1x4x32xbf16> to vector<4x32xbf16>
    %cst_24 = arith.constant dense<0.000000e+00> : vector<256x32xf32>
    %43 = tpu.matmul %40, %42, %cst_24 {dimension_numbers = #tpu.dot_dimension_numbers<[1], [0], [0], [1], [0, 0, 1, 1], [], []>} : vector<256x4xbf16>, vector<4x32xbf16>, vector<256x32xf32> -> vector<256x32xf32>
    %44 = arith.addf %38, %43 : vector<256x32xf32>
    %45 = vector.extract_strided_slice %1 {offsets = [2, 1, 0], sizes = [16, 16, 4], strides = [1, 1, 1]} : vector<18x18x4xbf16> to vector<16x16x4xbf16>
    %46 = vector.shape_cast %45 : vector<16x16x4xbf16> to vector<256x4xbf16>
    %c7 = arith.constant 7 : index
    %c0_25 = arith.constant 0 : index
    %c0_26 = arith.constant 0 : index
    %47 = vector.load %arg2[%c7, %c0_25, %c0_26] : memref<9x4x32xbf16, #tpu.memory_space<vmem>>, vector<1x4x32xbf16>
    %48 = vector.shape_cast %47 : vector<1x4x32xbf16> to vector<4x32xbf16>
    %cst_27 = arith.constant dense<0.000000e+00> : vector<256x32xf32>
    %49 = tpu.matmul %46, %48, %cst_27 {dimension_numbers = #tpu.dot_dimension_numbers<[1], [0], [0], [1], [0, 0, 1, 1], [], []>} : vector<256x4xbf16>, vector<4x32xbf16>, vector<256x32xf32> -> vector<256x32xf32>
    %50 = arith.addf %44, %49 : vector<256x32xf32>
    %51 = vector.extract_strided_slice %1 {offsets = [2, 2, 0], sizes = [16, 16, 4], strides = [1, 1, 1]} : vector<18x18x4xbf16> to vector<16x16x4xbf16>
    %52 = vector.shape_cast %51 : vector<16x16x4xbf16> to vector<256x4xbf16>
    %c8 = arith.constant 8 : index
    %c0_28 = arith.constant 0 : index
    %c0_29 = arith.constant 0 : index
    %53 = vector.load %arg2[%c8, %c0_28, %c0_29] : memref<9x4x32xbf16, #tpu.memory_space<vmem>>, vector<1x4x32xbf16>
    %54 = vector.shape_cast %53 : vector<1x4x32xbf16> to vector<4x32xbf16>
    %cst_30 = arith.constant dense<0.000000e+00> : vector<256x32xf32>
    %55 = tpu.matmul %52, %54, %cst_30 {dimension_numbers = #tpu.dot_dimension_numbers<[1], [0], [0], [1], [0, 0, 1, 1], [], []>} : vector<256x4xbf16>, vector<4x32xbf16>, vector<256x32xf32> -> vector<256x32xf32>
    %56 = arith.addf %50, %55 : vector<256x32xf32>
    %cst_31 = arith.constant dense<0.000000e+00> : vector<32xf32>
    %57 = vector.multi_reduction <add>, %56, %cst_31 [0] : vector<256x32xf32> to vector<32xf32>
    %58 = vector.shape_cast %57 : vector<32xf32> to vector<1x32xf32>
    %cst_32 = arith.constant 2.560000e+02 : f32
    %59 = vector.broadcast %cst_32 : f32 to vector<1x32xf32>
    %60 = arith.divf %58, %59 : vector<1x32xf32>
    %61 = arith.mulf %56, %56 : vector<256x32xf32>
    %cst_33 = arith.constant dense<0.000000e+00> : vector<32xf32>
    %62 = vector.multi_reduction <add>, %61, %cst_33 [0] : vector<256x32xf32> to vector<32xf32>
    %63 = vector.shape_cast %62 : vector<32xf32> to vector<1x32xf32>
    %cst_34 = arith.constant 2.560000e+02 : f32
    %64 = vector.broadcast %cst_34 : f32 to vector<1x32xf32>
    %65 = arith.divf %63, %64 : vector<1x32xf32>
    %66 = arith.mulf %60, %60 : vector<1x32xf32>
    %67 = arith.subf %65, %66 : vector<1x32xf32>
    %68 = vector.broadcast %60 : vector<1x32xf32> to vector<256x32xf32>
    %69 = arith.subf %56, %68 : vector<256x32xf32>
    %cst_35 = arith.constant 9.99999974E-6 : f32
    %70 = vector.broadcast %cst_35 : f32 to vector<1x32xf32>
    %71 = arith.addf %67, %70 : vector<1x32xf32>
    %72 = math.rsqrt %71 : vector<1x32xf32>
    %73 = vector.broadcast %72 : vector<1x32xf32> to vector<256x32xf32>
    %74 = arith.mulf %69, %73 : vector<256x32xf32>
    %cst_36 = arith.constant 0.000000e+00 : f32
    %75 = vector.broadcast %cst_36 : f32 to vector<256x32xf32>
    %76 = arith.maximumf %74, %75 : vector<256x32xf32>
    %cst_37 = arith.constant 0.000000e+00 : bf16
    %77 = vector.broadcast %cst_37 : bf16 to vector<18x18x32xbf16>
    %c0_38 = arith.constant 0 : index
    %c0_39 = arith.constant 0 : index
    %c0_40 = arith.constant 0 : index
    %78 = vector.load %arg7[%c0_38, %c0_39, %c0_40] : memref<18x18x32xbf16, #tpu.memory_space<vmem>>, vector<18x18x32xbf16>
    tpu.vector_store %arg7[%c0_38, %c0_39, %c0_40], %77 {strides = array<i32>} : memref<18x18x32xbf16, #tpu.memory_space<vmem>>, vector<18x18x32xbf16>,
    %79 = vector.shape_cast %76 : vector<256x32xf32> to vector<16x16x32xf32>
    %80 = arith.truncf %79 : vector<16x16x32xf32> to vector<16x16x32xbf16>
    %c1_41 = arith.constant 1 : index
    %c1_42 = arith.constant 1 : index
    %c0_43 = arith.constant 0 : index
    %81 = vector.load %arg7[%c1_41, %c1_42, %c0_43] : memref<18x18x32xbf16, #tpu.memory_space<vmem>>, vector<16x16x32xbf16>
    tpu.vector_store %arg7[%c1_41, %c1_42, %c0_43], %80 {strides = array<i32>} : memref<18x18x32xbf16, #tpu.memory_space<vmem>>, vector<16x16x32xbf16>,
    %c0_44 = arith.constant 0 : index
    %c0_45 = arith.constant 0 : index
    %c0_46 = arith.constant 0 : index
    %82 = vector.load %arg7[%c0_44, %c0_45, %c0_46] : memref<18x18x32xbf16, #tpu.memory_space<vmem>>, vector<18x18x32xbf16>
    %cst_47 = arith.constant 0.000000e+00 : f32
    %83 = vector.broadcast %cst_47 : f32 to vector<256x32xf32>
    %84 = vector.extract_strided_slice %82 {offsets = [0, 0, 0], sizes = [16, 16, 32], strides = [1, 1, 1]} : vector<18x18x32xbf16> to vector<16x16x32xbf16>
    %85 = vector.shape_cast %84 : vector<16x16x32xbf16> to vector<256x32xbf16>
    %c0_48 = arith.constant 0 : index
    %c0_49 = arith.constant 0 : index
    %c0_50 = arith.constant 0 : index
    %86 = vector.load %arg3[%c0_48, %c0_49, %c0_50] : memref<9x32x32xbf16, #tpu.memory_space<vmem>>, vector<1x32x32xbf16>
    %87 = vector.shape_cast %86 : vector<1x32x32xbf16> to vector<32x32xbf16>
    %cst_51 = arith.constant dense<0.000000e+00> : vector<256x32xf32>
    %88 = tpu.matmul %85, %87, %cst_51 {dimension_numbers = #tpu.dot_dimension_numbers<[1], [0], [0], [1], [0, 0, 1, 1], [], []>} : vector<256x32xbf16>, vector<32x32xbf16>, vector<256x32xf32> -> vector<256x32xf32>
    %89 = arith.addf %83, %88 : vector<256x32xf32>
    %90 = vector.extract_strided_slice %82 {offsets = [0, 1, 0], sizes = [16, 16, 32], strides = [1, 1, 1]} : vector<18x18x32xbf16> to vector<16x16x32xbf16>
    %91 = vector.shape_cast %90 : vector<16x16x32xbf16> to vector<256x32xbf16>
    %c1_52 = arith.constant 1 : index
    %c0_53 = arith.constant 0 : index
    %c0_54 = arith.constant 0 : index
    %92 = vector.load %arg3[%c1_52, %c0_53, %c0_54] : memref<9x32x32xbf16, #tpu.memory_space<vmem>>, vector<1x32x32xbf16>
    %93 = vector.shape_cast %92 : vector<1x32x32xbf16> to vector<32x32xbf16>
    %cst_55 = arith.constant dense<0.000000e+00> : vector<256x32xf32>
    %94 = tpu.matmul %91, %93, %cst_55 {dimension_numbers = #tpu.dot_dimension_numbers<[1], [0], [0], [1], [0, 0, 1, 1], [], []>} : vector<256x32xbf16>, vector<32x32xbf16>, vector<256x32xf32> -> vector<256x32xf32>
    %95 = arith.addf %89, %94 : vector<256x32xf32>
    %96 = vector.extract_strided_slice %82 {offsets = [0, 2, 0], sizes = [16, 16, 32], strides = [1, 1, 1]} : vector<18x18x32xbf16> to vector<16x16x32xbf16>
    %97 = vector.shape_cast %96 : vector<16x16x32xbf16> to vector<256x32xbf16>
    %c2_56 = arith.constant 2 : index
    %c0_57 = arith.constant 0 : index
    %c0_58 = arith.constant 0 : index
    %98 = vector.load %arg3[%c2_56, %c0_57, %c0_58] : memref<9x32x32xbf16, #tpu.memory_space<vmem>>, vector<1x32x32xbf16>
    %99 = vector.shape_cast %98 : vector<1x32x32xbf16> to vector<32x32xbf16>
    %cst_59 = arith.constant dense<0.000000e+00> : vector<256x32xf32>
    %100 = tpu.matmul %97, %99, %cst_59 {dimension_numbers = #tpu.dot_dimension_numbers<[1], [0], [0], [1], [0, 0, 1, 1], [], []>} : vector<256x32xbf16>, vector<32x32xbf16>, vector<256x32xf32> -> vector<256x32xf32>
    %101 = arith.addf %95, %100 : vector<256x32xf32>
    %102 = vector.extract_strided_slice %82 {offsets = [1, 0, 0], sizes = [16, 16, 32], strides = [1, 1, 1]} : vector<18x18x32xbf16> to vector<16x16x32xbf16>
    %103 = vector.shape_cast %102 : vector<16x16x32xbf16> to vector<256x32xbf16>
    %c3_60 = arith.constant 3 : index
    %c0_61 = arith.constant 0 : index
    %c0_62 = arith.constant 0 : index
    %104 = vector.load %arg3[%c3_60, %c0_61, %c0_62] : memref<9x32x32xbf16, #tpu.memory_space<vmem>>, vector<1x32x32xbf16>
    %105 = vector.shape_cast %104 : vector<1x32x32xbf16> to vector<32x32xbf16>
    %cst_63 = arith.constant dense<0.000000e+00> : vector<256x32xf32>
    %106 = tpu.matmul %103, %105, %cst_63 {dimension_numbers = #tpu.dot_dimension_numbers<[1], [0], [0], [1], [0, 0, 1, 1], [], []>} : vector<256x32xbf16>, vector<32x32xbf16>, vector<256x32xf32> -> vector<256x32xf32>
    %107 = arith.addf %101, %106 : vector<256x32xf32>
    %108 = vector.extract_strided_slice %82 {offsets = [1, 1, 0], sizes = [16, 16, 32], strides = [1, 1, 1]} : vector<18x18x32xbf16> to vector<16x16x32xbf16>
    %109 = vector.shape_cast %108 : vector<16x16x32xbf16> to vector<256x32xbf16>
    %c4_64 = arith.constant 4 : index
    %c0_65 = arith.constant 0 : index
    %c0_66 = arith.constant 0 : index
    %110 = vector.load %arg3[%c4_64, %c0_65, %c0_66] : memref<9x32x32xbf16, #tpu.memory_space<vmem>>, vector<1x32x32xbf16>
    %111 = vector.shape_cast %110 : vector<1x32x32xbf16> to vector<32x32xbf16>
    %cst_67 = arith.constant dense<0.000000e+00> : vector<256x32xf32>
    %112 = tpu.matmul %109, %111, %cst_67 {dimension_numbers = #tpu.dot_dimension_numbers<[1], [0], [0], [1], [0, 0, 1, 1], [], []>} : vector<256x32xbf16>, vector<32x32xbf16>, vector<256x32xf32> -> vector<256x32xf32>
    %113 = arith.addf %107, %112 : vector<256x32xf32>
    %114 = vector.extract_strided_slice %82 {offsets = [1, 2, 0], sizes = [16, 16, 32], strides = [1, 1, 1]} : vector<18x18x32xbf16> to vector<16x16x32xbf16>
    %115 = vector.shape_cast %114 : vector<16x16x32xbf16> to vector<256x32xbf16>
    %c5_68 = arith.constant 5 : index
    %c0_69 = arith.constant 0 : index
    %c0_70 = arith.constant 0 : index
    %116 = vector.load %arg3[%c5_68, %c0_69, %c0_70] : memref<9x32x32xbf16, #tpu.memory_space<vmem>>, vector<1x32x32xbf16>
    %117 = vector.shape_cast %116 : vector<1x32x32xbf16> to vector<32x32xbf16>
    %cst_71 = arith.constant dense<0.000000e+00> : vector<256x32xf32>
    %118 = tpu.matmul %115, %117, %cst_71 {dimension_numbers = #tpu.dot_dimension_numbers<[1], [0], [0], [1], [0, 0, 1, 1], [], []>} : vector<256x32xbf16>, vector<32x32xbf16>, vector<256x32xf32> -> vector<256x32xf32>
    %119 = arith.addf %113, %118 : vector<256x32xf32>
    %120 = vector.extract_strided_slice %82 {offsets = [2, 0, 0], sizes = [16, 16, 32], strides = [1, 1, 1]} : vector<18x18x32xbf16> to vector<16x16x32xbf16>
    %121 = vector.shape_cast %120 : vector<16x16x32xbf16> to vector<256x32xbf16>
    %c6_72 = arith.constant 6 : index
    %c0_73 = arith.constant 0 : index
    %c0_74 = arith.constant 0 : index
    %122 = vector.load %arg3[%c6_72, %c0_73, %c0_74] : memref<9x32x32xbf16, #tpu.memory_space<vmem>>, vector<1x32x32xbf16>
    %123 = vector.shape_cast %122 : vector<1x32x32xbf16> to vector<32x32xbf16>
    %cst_75 = arith.constant dense<0.000000e+00> : vector<256x32xf32>
    %124 = tpu.matmul %121, %123, %cst_75 {dimension_numbers = #tpu.dot_dimension_numbers<[1], [0], [0], [1], [0, 0, 1, 1], [], []>} : vector<256x32xbf16>, vector<32x32xbf16>, vector<256x32xf32> -> vector<256x32xf32>
    %125 = arith.addf %119, %124 : vector<256x32xf32>
    %126 = vector.extract_strided_slice %82 {offsets = [2, 1, 0], sizes = [16, 16, 32], strides = [1, 1, 1]} : vector<18x18x32xbf16> to vector<16x16x32xbf16>
    %127 = vector.shape_cast %126 : vector<16x16x32xbf16> to vector<256x32xbf16>
    %c7_76 = arith.constant 7 : index
    %c0_77 = arith.constant 0 : index
    %c0_78 = arith.constant 0 : index
    %128 = vector.load %arg3[%c7_76, %c0_77, %c0_78] : memref<9x32x32xbf16, #tpu.memory_space<vmem>>, vector<1x32x32xbf16>
    %129 = vector.shape_cast %128 : vector<1x32x32xbf16> to vector<32x32xbf16>
    %cst_79 = arith.constant dense<0.000000e+00> : vector<256x32xf32>
    %130 = tpu.matmul %127, %129, %cst_79 {dimension_numbers = #tpu.dot_dimension_numbers<[1], [0], [0], [1], [0, 0, 1, 1], [], []>} : vector<256x32xbf16>, vector<32x32xbf16>, vector<256x32xf32> -> vector<256x32xf32>
    %131 = arith.addf %125, %130 : vector<256x32xf32>
    %132 = vector.extract_strided_slice %82 {offsets = [2, 2, 0], sizes = [16, 16, 32], strides = [1, 1, 1]} : vector<18x18x32xbf16> to vector<16x16x32xbf16>
    %133 = vector.shape_cast %132 : vector<16x16x32xbf16> to vector<256x32xbf16>
    %c8_80 = arith.constant 8 : index
    %c0_81 = arith.constant 0 : index
    %c0_82 = arith.constant 0 : index
    %134 = vector.load %arg3[%c8_80, %c0_81, %c0_82] : memref<9x32x32xbf16, #tpu.memory_space<vmem>>, vector<1x32x32xbf16>
    %135 = vector.shape_cast %134 : vector<1x32x32xbf16> to vector<32x32xbf16>
    %cst_83 = arith.constant dense<0.000000e+00> : vector<256x32xf32>
    %136 = tpu.matmul %133, %135, %cst_83 {dimension_numbers = #tpu.dot_dimension_numbers<[1], [0], [0], [1], [0, 0, 1, 1], [], []>} : vector<256x32xbf16>, vector<32x32xbf16>, vector<256x32xf32> -> vector<256x32xf32>
    %137 = arith.addf %131, %136 : vector<256x32xf32>
    %cst_84 = arith.constant dense<0.000000e+00> : vector<32xf32>
    %138 = vector.multi_reduction <add>, %137, %cst_84 [0] : vector<256x32xf32> to vector<32xf32>
    %139 = vector.shape_cast %138 : vector<32xf32> to vector<1x32xf32>
    %cst_85 = arith.constant 2.560000e+02 : f32
    %140 = vector.broadcast %cst_85 : f32 to vector<1x32xf32>
    %141 = arith.divf %139, %140 : vector<1x32xf32>
    %142 = arith.mulf %137, %137 : vector<256x32xf32>
    %cst_86 = arith.constant dense<0.000000e+00> : vector<32xf32>
    %143 = vector.multi_reduction <add>, %142, %cst_86 [0] : vector<256x32xf32> to vector<32xf32>
    %144 = vector.shape_cast %143 : vector<32xf32> to vector<1x32xf32>
    %cst_87 = arith.constant 2.560000e+02 : f32
    %145 = vector.broadcast %cst_87 : f32 to vector<1x32xf32>
    %146 = arith.divf %144, %145 : vector<1x32xf32>
    %147 = arith.mulf %141, %141 : vector<1x32xf32>
    %148 = arith.subf %146, %147 : vector<1x32xf32>
    %149 = vector.broadcast %141 : vector<1x32xf32> to vector<256x32xf32>
    %150 = arith.subf %137, %149 : vector<256x32xf32>
    %cst_88 = arith.constant 9.99999974E-6 : f32
    %151 = vector.broadcast %cst_88 : f32 to vector<1x32xf32>
    %152 = arith.addf %148, %151 : vector<1x32xf32>
    %153 = math.rsqrt %152 : vector<1x32xf32>
    %154 = vector.broadcast %153 : vector<1x32xf32> to vector<256x32xf32>
    %155 = arith.mulf %150, %154 : vector<256x32xf32>
    %cst_89 = arith.constant 0.000000e+00 : f32
    %156 = vector.broadcast %cst_89 : f32 to vector<256x32xf32>
    %157 = arith.maximumf %155, %156 : vector<256x32xf32>
    %158 = vector.extract_strided_slice %1 {offsets = [1, 1, 0], sizes = [16, 16, 4], strides = [1, 1, 1]} : vector<18x18x4xbf16> to vector<16x16x4xbf16>
    %159 = vector.shape_cast %158 : vector<16x16x4xbf16> to vector<256x4xbf16>
    %c0_90 = arith.constant 0 : index
    %c0_91 = arith.constant 0 : index
    %160 = vector.load %arg4[%c0_90, %c0_91] : memref<4x32xbf16, #tpu.memory_space<vmem>>, vector<4x32xbf16>
    %cst_92 = arith.constant dense<0.000000e+00> : vector<256x32xf32>
    %161 = tpu.matmul %159, %160, %cst_92 {dimension_numbers = #tpu.dot_dimension_numbers<[1], [0], [0], [1], [0, 0, 1, 1], [], []>} : vector<256x4xbf16>, vector<4x32xbf16>, vector<256x32xf32> -> vector<256x32xf32>
    %c0_93 = arith.constant 0 : index
    %c0_94 = arith.constant 0 : index
    %162 = vector.load %arg5[%c0_93, %c0_94] : memref<1x32xf32, #tpu.memory_space<vmem>>, vector<1x32xf32>
    %163 = vector.broadcast %162 : vector<1x32xf32> to vector<256x32xf32>
    %164 = arith.addf %161, %163 : vector<256x32xf32>
    %165 = arith.addf %157, %164 : vector<256x32xf32>
    %cst_95 = arith.constant 0.000000e+00 : f32
    %166 = vector.broadcast %cst_95 : f32 to vector<256x32xf32>
    %167 = arith.maximumf %165, %166 : vector<256x32xf32>
    %168 = vector.shape_cast %167 : vector<256x32xf32> to vector<16x16x32xf32>
    %c0_96 = arith.constant 0 : index
    %c0_97 = arith.constant 0 : index
    %c0_98 = arith.constant 0 : index
    %c0_99 = arith.constant 0 : index
    %169 = vector.load %arg6[%c0_96, %c0_97, %c0_98, %c0_99] : memref<1x16x16x32xf32, #tpu.memory_space<vmem>>, vector<1x16x16x32xf32>
    %170 = vector.shape_cast %169 : vector<1x16x16x32xf32> to vector<16x16x32xf32>
    %171 = vector.shape_cast %168 : vector<16x16x32xf32> to vector<1x16x16x32xf32>
    tpu.vector_store %arg6[%c0_96, %c0_97, %c0_98, %c0_99], %171 {strides = array<i32>} : memref<1x16x16x32xf32, #tpu.memory_space<vmem>>, vector<1x16x16x32xf32>,
    return
  }
  func.func @transform_0(%arg0: i32) -> (i32, i32, i32, i32) {
    %c0_i32 = arith.constant 0 : i32
    %c0_i32_0 = arith.constant 0 : i32
    %c0_i32_1 = arith.constant 0 : i32
    %c0_i32_2 = arith.constant 0 : i32
    return %arg0, %c0_i32, %c0_i32_0, %c0_i32_1 : i32, i32, i32, i32
  }
  func.func @transform_1(%arg0: i32) -> (i32, i32, i32) {
    %c0_i32 = arith.constant 0 : i32
    %c0_i32_0 = arith.constant 0 : i32
    %c0_i32_1 = arith.constant 0 : i32
    %c0_i32_2 = arith.constant 0 : i32
    return %c0_i32, %c0_i32_0, %c0_i32_1 : i32, i32, i32
  }
  func.func @transform_2(%arg0: i32) -> (i32, i32, i32) {
    %c0_i32 = arith.constant 0 : i32
    %c0_i32_0 = arith.constant 0 : i32
    %c0_i32_1 = arith.constant 0 : i32
    %c0_i32_2 = arith.constant 0 : i32
    return %c0_i32, %c0_i32_0, %c0_i32_1 : i32, i32, i32
  }
  func.func @transform_3(%arg0: i32) -> (i32, i32) {
    %c0_i32 = arith.constant 0 : i32
    %c0_i32_0 = arith.constant 0 : i32
    %c0_i32_1 = arith.constant 0 : i32
    return %c0_i32, %c0_i32_0 : i32, i32
  }
  func.func @transform_4(%arg0: i32) -> (i32, i32) {
    %c0_i32 = arith.constant 0 : i32
    %c0_i32_0 = arith.constant 0 : i32
    %c0_i32_1 = arith.constant 0 : i32
    return %c0_i32, %c0_i32_0 : i32, i32
  }
  func.func @transform_5(%arg0: i32) -> (i32, i32, i32, i32) {
    %c0_i32 = arith.constant 0 : i32
    %c0_i32_0 = arith.constant 0 : i32
    %c0_i32_1 = arith.constant 0 : i32
    %c0_i32_2 = arith.constant 0 : i32
    return %arg0, %c0_i32, %c0_i32_0, %c0_i32_1 : i32, i32, i32, i32
  }
}

</mosaic_0001>

<llo_original>
// kernel: tpu_custom_call.1
$region0: #{tpu_custom_call.1}
  #allocation0 [shape = 'u32[]', space=smem, size = 0x4, offset = 0x4, fixed_abs, tag = 'smem constant byte address 0x4 - core index']
  #allocation1 [shape = 'u32[72,128]{1,0:T(1,128)}', space=vmem, size = 0x9000, scoped, tag = 'internal scratch']
  #allocation2 [shape = 'bf16[18,18,32]{2,1,0:T(8,128)(2,1)}', space=vmem, size = 0x1b000, scoped, tag = 'scratch operand']
  %s0 = inlined_call_operand.vmem [shape: bf16[2,18,18,4], index: 0, kind: input, shape index: {}]
  %s1 = inlined_call_operand.vmem [shape: bf16[9,4,32], index: 1, kind: input, shape index: {}]
  %s2 = inlined_call_operand.vmem [shape: bf16[9,32,32], index: 2, kind: input, shape index: {}]
  %s3 = inlined_call_operand.vmem [shape: bf16[4,32], index: 3, kind: input, shape index: {}]
  %s4 = inlined_call_operand.vmem [shape: f32[1,32], index: 4, kind: input, shape index: {}]
  %s5 = inlined_call_operand.hbm [shape: f32[2,16,16,32], index: 5, kind: output, shape index: {}]
  %s6 = sld [smem:[#allocation0]]
  $region53: #{tpu_custom_call.1} parent=0
    _
  %s8 = ssub.s32 1, %s6
  %s9 = scalar_select 0, %s8, %s6
  $region1: #{tpu_custom_call.1} parent=0
    #allocation3 [shape = 'u8[262144]{0}', space=vmem, size = 0x40000, scoped, tag = 'output window, operand 0']
    #allocation4 [shape = 's32[2]{0}', space=sflag, size = 0x8, scoped, tag = 'scoped memory for tpu_custom_call.1']
    %10 = vsyncpa [#allocation4], 0
    %s11 = scalar_lea.sflag [#allocation4], 1
    %12 = vsyncpa %s11, 0
    loop: start=0, step=1, limit=4
    $region2: #{tpu_custom_call.1} parent=1 // loop_pre_header
      _
    $region3: #{tpu_custom_call.1} parent=1 // loop_header
      %s14 = sphi 0, %s18
      %p15 = scmp.ge.s32.totalorder %s14, 4
      %s24 = sphi 0, %s26
      %s27 = sphi 0, %s24
      %s28 = sphi 0, %s27
      %s44 = sphi 0, %s28
      %s48 = sphi 0, %s48
      %s50 = sphi 0, %s48
      %s51 = sphi 0, %s50
      %s65 = sphi 0, %s51
      %s69 = sphi 0, %s69
      %s71 = sphi 0, %s69
      %s72 = sphi 0, %s71
      %s86 = sphi 0, %s72
      %s90 = sphi 0, %s90
      %s92 = sphi 0, %s90
      %s93 = sphi 0, %s92
      %s107 = sphi 0, %s93
      %s111 = sphi 0, %s111
      %s113 = sphi 0, %s111
      %s114 = sphi 0, %s113
      %s128 = sphi 0, %s114
      %s134 = sphi 0, %s136
      %s137 = sphi 0, %s134
      %s138 = sphi 0, %s137
      %s154 = sphi 0, %s138
    $region4: #{tpu_custom_call.1} parent=1 // loop_header_branch
      %17 = sbr.rel (%p15) target = $region8
    $region5: #{tpu_custom_call.1} parent=1 // loop_body
      %s19 = ssub.s32 %s14, 1
      %s20 = ssub.s32 %s14, 2
      %s21 = sadd.s32 %s14, 1
      %s22 = ssub.s32 %s14, %s21
      %p23 = scmp.eq.s32.totalorder %s22, 0
      %s25 = sadd.s32 %s24, 1
      %s26 = scalar_select %p23, %s24, %s25
      %p29 = pneg %p23
      %p30 = scmp.eq.s32.totalorder %s14, 1
      %p31 = por %p29, %p30
      %p32 = scmp.ne.s32.totalorder %s24, %s27
      %p33 = scmp.eq.s32.totalorder %s14, 0
      %p34 = por %p32, %p33
      %p35 = scmp.ne.s32.totalorder %s24, %s27
      %p36 = scmp.eq.s32.totalorder %s19, 1
      %p37 = por %p35, %p36
      %p38 = scmp.ne.s32.totalorder %s27, %s28
      %p39 = scmp.eq.s32.totalorder %s19, 0
      %p40 = por %p38, %p39
      %p41 = scmp.ne.s32.totalorder %s27, %s28
      %p42 = scmp.eq.s32.totalorder %s20, 1
      %p43 = por %p41, %p42
      %p45 = scmp.ne.s32.totalorder %s28, %s44
      %p46 = scmp.eq.s32.totalorder %s20, 0
      %p47 = por %p45, %p46
      %s49 = sadd.s32 %s48, 1
      %p52 = scmp.eq.s32.totalorder %s14, 1
      %p53 = scmp.ne.s32.totalorder %s48, %s50
      %p54 = scmp.eq.s32.totalorder %s14, 0
      %p55 = por %p53, %p54
      %p56 = scmp.ne.s32.totalorder %s48, %s50
      %p57 = scmp.eq.s32.totalorder %s19, 1
      %p58 = por %p56, %p57
      %p59 = scmp.ne.s32.totalorder %s50, %s51
      %p60 = scmp.eq.s32.totalorder %s19, 0
      %p61 = por %p59, %p60
      %p62 = scmp.ne.s32.totalorder %s50, %s51
      %p63 = scmp.eq.s32.totalorder %s20, 1
      %p64 = por %p62, %p63
      %p66 = scmp.ne.s32.totalorder %s51, %s65
      %p67 = scmp.eq.s32.totalorder %s20, 0
      %p68 = por %p66, %p67
      %s70 = sadd.s32 %s69, 1
      %p73 = scmp.eq.s32.totalorder %s14, 1
      %p74 = scmp.ne.s32.totalorder %s69, %s71
      %p75 = scmp.eq.s32.totalorder %s14, 0
      %p76 = por %p74, %p75
      %p77 = scmp.ne.s32.totalorder %s69, %s71
      %p78 = scmp.eq.s32.totalorder %s19, 1
      %p79 = por %p77, %p78
      %p80 = scmp.ne.s32.totalorder %s71, %s72
      %p81 = scmp.eq.s32.totalorder %s19, 0
      %p82 = por %p80, %p81
      %p83 = scmp.ne.s32.totalorder %s71, %s72
      %p84 = scmp.eq.s32.totalorder %s20, 1
      %p85 = por %p83, %p84
      %p87 = scmp.ne.s32.totalorder %s72, %s86
      %p88 = scmp.eq.s32.totalorder %s20, 0
      %p89 = por %p87, %p88
      %s91 = sadd.s32 %s90, 1
      %p94 = scmp.eq.s32.totalorder %s14, 1
      %p95 = scmp.ne.s32.totalorder %s90, %s92
      %p96 = scmp.eq.s32.totalorder %s14, 0
      %p97 = por %p95, %p96
      %p98 = scmp.ne.s32.totalorder %s90, %s92
      %p99 = scmp.eq.s32.totalorder %s19, 1
      %p100 = por %p98, %p99
      %p101 = scmp.ne.s32.totalorder %s92, %s93
      %p102 = scmp.eq.s32.totalorder %s19, 0
      %p103 = por %p101, %p102
      %p104 = scmp.ne.s32.totalorder %s92, %s93
      %p105 = scmp.eq.s32.totalorder %s20, 1
      %p106 = por %p104, %p105
      %p108 = scmp.ne.s32.totalorder %s93, %s107
      %p109 = scmp.eq.s32.totalorder %s20, 0
      %p110 = por %p108, %p109
      %s112 = sadd.s32 %s111, 1
      %p115 = scmp.eq.s32.totalorder %s14, 1
      %p116 = scmp.ne.s32.totalorder %s111, %s113
      %p117 = scmp.eq.s32.totalorder %s14, 0
      %p118 = por %p116, %p117
      %p119 = scmp.ne.s32.totalorder %s111, %s113
      %p120 = scmp.eq.s32.totalorder %s19, 1
      %p121 = por %p119, %p120
      %p122 = scmp.ne.s32.totalorder %s113, %s114
      %p123 = scmp.eq.s32.totalorder %s19, 0
      %p124 = por %p122, %p123
      %p125 = scmp.ne.s32.totalorder %s113, %s114
      %p126 = scmp.eq.s32.totalorder %s20, 1
      %p127 = por %p125, %p126
      %p129 = scmp.ne.s32.totalorder %s114, %s128
      %p130 = scmp.eq.s32.totalorder %s20, 0
      %p131 = por %p129, %p130
      %s132 = ssub.s32 %s14, %s21
      %p133 = scmp.eq.s32.totalorder %s132, 0
      %s135 = sadd.s32 %s134, 1
      %s136 = scalar_select %p133, %s134, %s135
      %p139 = pneg %p133
      %p140 = scmp.eq.s32.totalorder %s14, 1
      %p141 = por %p139, %p140
      %p142 = scmp.ne.s32.totalorder %s134, %s137
      %p143 = scmp.eq.s32.totalorder %s14, 0
      %p144 = por %p142, %p143
      %p145 = scmp.ne.s32.totalorder %s134, %s137
      %p146 = scmp.eq.s32.totalorder %s19, 1
      %p147 = por %p145, %p146
      %p148 = scmp.ne.s32.totalorder %s137, %s138
      %p149 = scmp.eq.s32.totalorder %s19, 0
      %p150 = por %p148, %p149
      %p151 = scmp.ne.s32.totalorder %s137, %s138
      %p152 = scmp.eq.s32.totalorder %s20, 1
      %p153 = por %p151, %p152
      %p155 = scmp.ne.s32.totalorder %s138, %s154
      %p156 = scmp.eq.s32.totalorder %s20, 0
      %p157 = por %p155, %p156
      %p158 = scmp.le.s32.totalorder 1, %s14
      %p159 = scmp.lt.s32.totalorder %s14, 3
      %p160 = pnand %p158, %p159
      %p161 = pneg %p160
      // Predicated region
      $region9: #{tpu_custom_call.1} parent=5 // pred_check
        _
      $region10: #{tpu_custom_call.1} parent=5 // pred_check_branch
        %163 = sbr.rel (%p160) target = $region12
      $region11: #{tpu_custom_call.1} parent=5 // pred_region
        %s164 = ssub.s32 %s14, 1
        // Predicated region
        $region13: #{tpu_custom_call.1} parent=11 // pred_check
          %p165 = pneg %p61
        $region14: #{tpu_custom_call.1} parent=11 // pred_check_branch
          %167 = sbr.rel (%p165) target = $region16
        $region15: #{tpu_custom_call.1} parent=11 // pred_region
          _
        $region16: #{tpu_custom_call.1} parent=11 // pred_fallthru
          _
        // Predicated region
        $region17: #{tpu_custom_call.1} parent=11 // pred_check
          %p168 = pneg %p82
        $region18: #{tpu_custom_call.1} parent=11 // pred_check_branch
          %170 = sbr.rel (%p168) target = $region20
        $region19: #{tpu_custom_call.1} parent=11 // pred_region
          _
        $region20: #{tpu_custom_call.1} parent=11 // pred_fallthru
          _
        // Predicated region
        $region21: #{tpu_custom_call.1} parent=11 // pred_check
          %p171 = pneg %p103
        $region22: #{tpu_custom_call.1} parent=11 // pred_check_branch
          %173 = sbr.rel (%p171) target = $region24
        $region23: #{tpu_custom_call.1} parent=11 // pred_region
          _
        $region24: #{tpu_custom_call.1} parent=11 // pred_fallthru
          _
        // Predicated region
        $region25: #{tpu_custom_call.1} parent=11 // pred_check
          %p174 = pneg %p124
        $region26: #{tpu_custom_call.1} parent=11 // pred_check_branch
          %176 = sbr.rel (%p174) target = $region28
        $region27: #{tpu_custom_call.1} parent=11 // pred_region
          _
        $region28: #{tpu_custom_call.1} parent=11 // pred_fallthru
          _
      $region12: #{tpu_custom_call.1} parent=5 // pred_fallthru
        _
      %p177 = scmp.lt.s32.totalorder %s14, 2
      // Predicated region
      $region29: #{tpu_custom_call.1} parent=5 // pred_check
        %p178 = pneg %p177
      $region30: #{tpu_custom_call.1} parent=5 // pred_check_branch
        %180 = sbr.rel (%p178) target = $region32
      $region31: #{tpu_custom_call.1} parent=5 // pred_region
        // Predicated region
        $region33: #{tpu_custom_call.1} parent=31 // pred_check
          %p181 = pneg %p34
        $region34: #{tpu_custom_call.1} parent=31 // pred_check_branch
          %183 = sbr.rel (%p181) target = $region36
        $region35: #{tpu_custom_call.1} parent=31 // pred_region
          %p184 = scmp.lt.s32.totalorder %s14, 1
          %s185 = scalar_select %p184, %s14, 1
          %s186 = smul.addr %s185, 54
          %s187 = smul.addr %s186, 4
          %s188 = scalar_lea.vmem %s0, %s187
        $region36: #{tpu_custom_call.1} parent=31 // pred_fallthru
          _
      $region32: #{tpu_custom_call.1} parent=5 // pred_fallthru
        _
      %p189 = scmp.le.s32.totalorder 1, %s14
      %p190 = scmp.lt.s32.totalorder %s14, 3
      %p191 = pnand %p189, %p190
      %p192 = pneg %p191
      // Predicated region
      $region37: #{tpu_custom_call.1} parent=5 // pred_check
        _
      $region38: #{tpu_custom_call.1} parent=5 // pred_check_branch
        %194 = sbr.rel (%p191) target = $region40
      $region39: #{tpu_custom_call.1} parent=5 // pred_region
        %s195 = ssub.s32 %s14, 1
        %p196 = scmp.lt.s32.totalorder %s19, 1
        %s197 = scalar_select %p196, %s19, 1
        %s198 = smul.addr %s197, 54
        %s199 = smul.addr %s198, 4
        %s200 = scalar_lea.vmem %s0, %s199
        %p201 = pneg %p40
        %p202 = pneg %p37
        %p203 = pneg %p61
        %p204 = pneg %p58
        %p205 = pneg %p82
        %p206 = pneg %p79
        %p207 = pneg %p103
        %p208 = pneg %p100
        %p209 = pneg %p124
        %p210 = pneg %p121
        %p211 = pneg %p150
        %p212 = pneg %p147
        %s213 = sand.u32 %s137, 1
        %s214 = scalar_lea.sflag [#allocation4], %s213
        %s215 = sand.u32 %s137, 1
        %s216 = smul.addr %s215, 256
        %s217 = scalar_lea.vmem [#allocation3], %s216
        %p218 = scmp.lt.s32.totalorder %s19, 1
        %s219 = scalar_select %p218, %s19, 1
        %s220 = smul.addr %s219, 54
        %s221 = smul.addr %s220, 4
        %s222 = scalar_lea.vmem %s0, %s221
        %v224 = vld [vmem:[%s222] sm:$0xf]
        %v225 = vld [vmem:[%s222 + $0x4] sm:$0xf]
        %v226 = vld [vmem:[%s222 + $0x8] sm:$0x1]
        %v227 = vld [vmem:[%s222 + $0xc] sm:$0xf]
        %v228 = vld [vmem:[%s222 + $0x10] sm:$0xf]
        %v229 = vld [vmem:[%s222 + $0x14] sm:$0x1]
        %v230 = vld [vmem:[%s222 + $0x18] sm:$0xf]
        %v231 = vld [vmem:[%s222 + $0x1c] sm:$0xf]
        %v232 = vld [vmem:[%s222 + $0x20] sm:$0x1]
        %v233 = vld [vmem:[%s222 + $0x24] sm:$0xf]
        %v234 = vld [vmem:[%s222 + $0x28] sm:$0xf]
        %v235 = vld [vmem:[%s222 + $0x2c] sm:$0x1]
        %v236 = vld [vmem:[%s222 + $0x30] sm:$0xf]
        %v237 = vld [vmem:[%s222 + $0x34] sm:$0xf]
        %v238 = vld [vmem:[%s222 + $0x38] sm:$0x1]
        %v239 = vld [vmem:[%s222 + $0x3c] sm:$0xf]
        %v240 = vld [vmem:[%s222 + $0x40] sm:$0xf]
        %v241 = vld [vmem:[%s222 + $0x44] sm:$0x1]
        %v242 = vld [vmem:[%s222 + $0x48] sm:$0xf]
        %v243 = vld [vmem:[%s222 + $0x4c] sm:$0xf]
        %v244 = vld [vmem:[%s222 + $0x50] sm:$0x1]
        %v245 = vld [vmem:[%s222 + $0x54] sm:$0xf]
        %v246 = vld [vmem:[%s222 + $0x58] sm:$0xf]
        %v247 = vld [vmem:[%s222 + $0x5c] sm:$0x1]
        %v248 = vld [vmem:[%s222 + $0x60] sm:$0xf]
        %v249 = vld [vmem:[%s222 + $0x64] sm:$0xf]
        %v250 = vld [vmem:[%s222 + $0x68] sm:$0x1]
        %v251 = vld [vmem:[%s222 + $0x6c] sm:$0xf]
        %v252 = vld [vmem:[%s222 + $0x70] sm:$0xf]
        %v253 = vld [vmem:[%s222 + $0x74] sm:$0x1]
        %v254 = vld [vmem:[%s222 + $0x78] sm:$0xf]
        %v255 = vld [vmem:[%s222 + $0x7c] sm:$0xf]
        %v256 = vld [vmem:[%s222 + $0x80] sm:$0x1]
        %v257 = vld [vmem:[%s222 + $0x84] sm:$0xf]
        %v258 = vld [vmem:[%s222 + $0x88] sm:$0xf]
        %v259 = vld [vmem:[%s222 + $0x8c] sm:$0x1]
        %v260 = vld [vmem:[%s222 + $0x90] sm:$0xf]
        %v261 = vld [vmem:[%s222 + $0x94] sm:$0xf]
        %v262 = vld [vmem:[%s222 + $0x98] sm:$0x1]
        %v263 = vld [vmem:[%s222 + $0x9c] sm:$0xf]
        %v264 = vld [vmem:[%s222 + $0xa0] sm:$0xf]
        %v265 = vld [vmem:[%s222 + $0xa4] sm:$0x1]
        %v266 = vld [vmem:[%s222 + $0xa8] sm:$0xf]
        %v267 = vld [vmem:[%s222 + $0xac] sm:$0xf]
        %v268 = vld [vmem:[%s222 + $0xb0] sm:$0x1]
        %v269 = vld [vmem:[%s222 + $0xb4] sm:$0xf]
        %v270 = vld [vmem:[%s222 + $0xb8] sm:$0xf]
        %v271 = vld [vmem:[%s222 + $0xbc] sm:$0x1]
        %v272 = vld [vmem:[%s222 + $0xc0] sm:$0xf]
        %v273 = vld [vmem:[%s222 + $0xc4] sm:$0xf]
        %v274 = vld [vmem:[%s222 + $0xc8] sm:$0x1]
        %v275 = vld [vmem:[%s222 + $0xcc] sm:$0xf]
        %v276 = vld [vmem:[%s222 + $0xd0] sm:$0xf]
        %v277 = vld [vmem:[%s222 + $0xd4] sm:$0x1]
        %v278 = vld [vmem:[%s1] sm:$0x3]
        %vm279 = vsmask.f32 3328
        %vm280 = vsmask.f32 7440
        %vm281 = vmor %vm279, %vm280
        %v283 = vshrl.u32 %v224, 16
        %v285 = vrot.slane %v283, 4
        %v286 = vshll.u32 %v224, 16
        %v288 = vrot.slane %v286, 5
        %v289 = vor.u32 %v285, %v288
        %v290 = vrot.slane %v289, 4
        %v292 = vshll.u32 %v225, 16
        %v294 = vrot.slane %v292, 5
        %v295 = vsel %vm281, %v290, %v294
        %v296 = vshrl.u32 %v225, 16
        %v298 = vrot.slane %v296, 4
        %v299 = vor.u32 %v298, %v294
        %v300 = vrot.slane %v299, 4
        %v302 = vshll.u32 %v226, 16
        %v304 = vrot.slane %v302, 5
        %v305 = vsel %vm281, %v300, %v304
        %v307 = vshrl.u32 %v227, 16
        %v309 = vrot.slane %v307, 4
        %v310 = vshll.u32 %v227, 16
        %v312 = vrot.slane %v310, 5
        %v313 = vor.u32 %v309, %v312
        %v314 = vrot.slane %v313, 4
        %v316 = vshll.u32 %v228, 16
        %v318 = vrot.slane %v316, 5
        %v319 = vsel %vm281, %v314, %v318
        %v320 = vshrl.u32 %v228, 16
        %v322 = vrot.slane %v320, 4
        %v323 = vor.u32 %v322, %v318
        %v324 = vrot.slane %v323, 4
        %v326 = vshll.u32 %v229, 16
        %v328 = vrot.slane %v326, 5
        %v329 = vsel %vm281, %v324, %v328
        %v331 = vshrl.u32 %v230, 16
        %v333 = vrot.slane %v331, 4
        %v334 = vshll.u32 %v230, 16
        %v336 = vrot.slane %v334, 5
        %v337 = vor.u32 %v333, %v336
        %v338 = vrot.slane %v337, 4
        %v340 = vshll.u32 %v231, 16
        %v342 = vrot.slane %v340, 5
        %v343 = vsel %vm281, %v338, %v342
        %v344 = vshrl.u32 %v231, 16
        %v346 = vrot.slane %v344, 4
        %v347 = vor.u32 %v346, %v342
        %v348 = vrot.slane %v347, 4
        %v350 = vshll.u32 %v232, 16
        %v352 = vrot.slane %v350, 5
        %v353 = vsel %vm281, %v348, %v352
        %v355 = vshrl.u32 %v233, 16
        %v357 = vrot.slane %v355, 4
        %v358 = vshll.u32 %v233, 16
        %v360 = vrot.slane %v358, 5
        %v361 = vor.u32 %v357, %v360
        %v362 = vrot.slane %v361, 4
        %v364 = vshll.u32 %v234, 16
        %v366 = vrot.slane %v364, 5
        %v367 = vsel %vm281, %v362, %v366
        %v368 = vshrl.u32 %v234, 16
        %v370 = vrot.slane %v368, 4
        %v371 = vor.u32 %v370, %v366
        %v372 = vrot.slane %v371, 4
        %v374 = vshll.u32 %v235, 16
        %v376 = vrot.slane %v374, 5
        %v377 = vsel %vm281, %v372, %v376
        %v379 = vshrl.u32 %v236, 16
        %v381 = vrot.slane %v379, 4
        %v382 = vshll.u32 %v236, 16
        %v384 = vrot.slane %v382, 5
        %v385 = vor.u32 %v381, %v384
        %v386 = vrot.slane %v385, 4
        %v388 = vshll.u32 %v237, 16
        %v390 = vrot.slane %v388, 5
        %v391 = vsel %vm281, %v386, %v390
        %v392 = vshrl.u32 %v237, 16
        %v394 = vrot.slane %v392, 4
        %v395 = vor.u32 %v394, %v390
        %v396 = vrot.slane %v395, 4
        %v398 = vshll.u32 %v238, 16
        %v400 = vrot.slane %v398, 5
        %v401 = vsel %vm281, %v396, %v400
        %v403 = vshrl.u32 %v239, 16
        %v405 = vrot.slane %v403, 4
        %v406 = vshll.u32 %v239, 16
        %v408 = vrot.slane %v406, 5
        %v409 = vor.u32 %v405, %v408
        %v410 = vrot.slane %v409, 4
        %v412 = vshll.u32 %v240, 16
        %v414 = vrot.slane %v412, 5
        %v415 = vsel %vm281, %v410, %v414
        %v416 = vshrl.u32 %v240, 16
        %v418 = vrot.slane %v416, 4
        %v419 = vor.u32 %v418, %v414
        %v420 = vrot.slane %v419, 4
        %v422 = vshll.u32 %v241, 16
        %v424 = vrot.slane %v422, 5
        %v425 = vsel %vm281, %v420, %v424
        %v427 = vshrl.u32 %v242, 16
        %v429 = vrot.slane %v427, 4
        %v430 = vshll.u32 %v242, 16
        %v432 = vrot.slane %v430, 5
        %v433 = vor.u32 %v429, %v432
        %v434 = vrot.slane %v433, 4
        %v436 = vshll.u32 %v243, 16
        %v438 = vrot.slane %v436, 5
        %v439 = vsel %vm281, %v434, %v438
        %v440 = vshrl.u32 %v243, 16
        %v442 = vrot.slane %v440, 4
        %v443 = vor.u32 %v442, %v438
        %v444 = vrot.slane %v443, 4
        %v446 = vshll.u32 %v244, 16
        %v448 = vrot.slane %v446, 5
        %v449 = vsel %vm281, %v444, %v448
        %v451 = vshrl.u32 %v245, 16
        %v453 = vrot.slane %v451, 4
        %v454 = vshll.u32 %v245, 16
        %v456 = vrot.slane %v454, 5
        %v457 = vor.u32 %v453, %v456
        %v458 = vrot.slane %v457, 4
        %v460 = vshll.u32 %v246, 16
        %v462 = vrot.slane %v460, 5
        %v463 = vsel %vm281, %v458, %v462
        %v464 = vshrl.u32 %v246, 16
        %v466 = vrot.slane %v464, 4
        %v467 = vor.u32 %v466, %v462
        %v468 = vrot.slane %v467, 4
        %v470 = vshll.u32 %v247, 16
        %v472 = vrot.slane %v470, 5
        %v473 = vsel %vm281, %v468, %v472
        %v475 = vshrl.u32 %v248, 16
        %v477 = vrot.slane %v475, 4
        %v478 = vshll.u32 %v248, 16
        %v480 = vrot.slane %v478, 5
        %v481 = vor.u32 %v477, %v480
        %v482 = vrot.slane %v481, 4
        %v484 = vshll.u32 %v249, 16
        %v486 = vrot.slane %v484, 5
        %v487 = vsel %vm281, %v482, %v486
        %v488 = vshrl.u32 %v249, 16
        %v490 = vrot.slane %v488, 4
        %v491 = vor.u32 %v490, %v486
        %v492 = vrot.slane %v491, 4
        %v494 = vshll.u32 %v250, 16
        %v496 = vrot.slane %v494, 5
        %v497 = vsel %vm281, %v492, %v496
        %v499 = vshrl.u32 %v251, 16
        %v501 = vrot.slane %v499, 4
        %v502 = vshll.u32 %v251, 16
        %v504 = vrot.slane %v502, 5
        %v505 = vor.u32 %v501, %v504
        %v506 = vrot.slane %v505, 4
        %v508 = vshll.u32 %v252, 16
        %v510 = vrot.slane %v508, 5
        %v511 = vsel %vm281, %v506, %v510
        %v512 = vshrl.u32 %v252, 16
        %v514 = vrot.slane %v512, 4
        %v515 = vor.u32 %v514, %v510
        %v516 = vrot.slane %v515, 4
        %v518 = vshll.u32 %v253, 16
        %v520 = vrot.slane %v518, 5
        %v521 = vsel %vm281, %v516, %v520
        %v523 = vshrl.u32 %v254, 16
        %v525 = vrot.slane %v523, 4
        %v526 = vshll.u32 %v254, 16
        %v528 = vrot.slane %v526, 5
        %v529 = vor.u32 %v525, %v528
        %v530 = vrot.slane %v529, 4
        %v532 = vshll.u32 %v255, 16
        %v534 = vrot.slane %v532, 5
        %v535 = vsel %vm281, %v530, %v534
        %v536 = vshrl.u32 %v255, 16
        %v538 = vrot.slane %v536, 4
        %v539 = vor.u32 %v538, %v534
        %v540 = vrot.slane %v539, 4
        %v542 = vshll.u32 %v256, 16
        %v544 = vrot.slane %v542, 5
        %v545 = vsel %vm281, %v540, %v544
        %v547 = vshrl.u32 %v257, 16
        %v549 = vrot.slane %v547, 4
        %v550 = vshll.u32 %v257, 16
        %v552 = vrot.slane %v550, 5
        %v553 = vor.u32 %v549, %v552
        %v554 = vrot.slane %v553, 4
        %v556 = vshll.u32 %v258, 16
        %v558 = vrot.slane %v556, 5
        %v559 = vsel %vm281, %v554, %v558
        %v560 = vshrl.u32 %v258, 16
        %v562 = vrot.slane %v560, 4
        %v563 = vor.u32 %v562, %v558
        %v564 = vrot.slane %v563, 4
        %v566 = vshll.u32 %v259, 16
        %v568 = vrot.slane %v566, 5
        %v569 = vsel %vm281, %v564, %v568
        %v571 = vshrl.u32 %v260, 16
        %v573 = vrot.slane %v571, 4
        %v574 = vshll.u32 %v260, 16
        %v576 = vrot.slane %v574, 5
        %v577 = vor.u32 %v573, %v576
        %v578 = vrot.slane %v577, 4
        %v580 = vshll.u32 %v261, 16
        %v582 = vrot.slane %v580, 5
        %v583 = vsel %vm281, %v578, %v582
        %v584 = vshrl.u32 %v261, 16
        %v586 = vrot.slane %v584, 4
        %v587 = vor.u32 %v586, %v582
        %v588 = vrot.slane %v587, 4
        %v590 = vshll.u32 %v262, 16
        %v592 = vrot.slane %v590, 5
        %v593 = vsel %vm281, %v588, %v592
        %v595 = vshrl.u32 %v263, 16
        %v597 = vrot.slane %v595, 4
        %v598 = vshll.u32 %v263, 16
        %v600 = vrot.slane %v598, 5
        %v601 = vor.u32 %v597, %v600
        %v602 = vrot.slane %v601, 4
        %v604 = vshll.u32 %v264, 16
        %v606 = vrot.slane %v604, 5
        %v607 = vsel %vm281, %v602, %v606
        %v608 = vshrl.u32 %v264, 16
        %v610 = vrot.slane %v608, 4
        %v611 = vor.u32 %v610, %v606
        %v612 = vrot.slane %v611, 4
        %v614 = vshll.u32 %v265, 16
        %v616 = vrot.slane %v614, 5
        %v617 = vsel %vm281, %v612, %v616
        %v619 = vshrl.u32 %v266, 16
        %v621 = vrot.slane %v619, 4
        %v622 = vshll.u32 %v266, 16
        %v624 = vrot.slane %v622, 5
        %v625 = vor.u32 %v621, %v624
        %v626 = vrot.slane %v625, 4
        %v628 = vshll.u32 %v267, 16
        %v630 = vrot.slane %v628, 5
        %v631 = vsel %vm281, %v626, %v630
        %v632 = vshrl.u32 %v267, 16
        %v634 = vrot.slane %v632, 4
        %v635 = vor.u32 %v634, %v630
        %v636 = vrot.slane %v635, 4
        %v638 = vshll.u32 %v268, 16
        %v640 = vrot.slane %v638, 5
        %v641 = vsel %vm281, %v636, %v640
        %v643 = vshrl.u32 %v269, 16
        %v645 = vrot.slane %v643, 4
        %v646 = vshll.u32 %v269, 16
        %v648 = vrot.slane %v646, 5
        %v649 = vor.u32 %v645, %v648
        %v650 = vrot.slane %v649, 4
        %v652 = vshll.u32 %v270, 16
        %v654 = vrot.slane %v652, 5
        %v655 = vsel %vm281, %v650, %v654
        %v656 = vshrl.u32 %v270, 16
        %v658 = vrot.slane %v656, 4
        %v659 = vor.u32 %v658, %v654
        %v660 = vrot.slane %v659, 4
        %v662 = vshll.u32 %v271, 16
        %v664 = vrot.slane %v662, 5
        %v665 = vsel %vm281, %v660, %v664
        %s666 = scalar_lea.vmem %s1, 2
        %v667 = vld [vmem:[%s666] sm:$0x3]
        %v668 = vunpack.c.l.b16 %v295
        %v669 = vunpack.c.l.b16 %v305
        %v670 = vunpack.c.l.b16 %v319
        %v671 = vunpack.c.l.b16 %v329
        %v672 = vunpack.c.l.b16 %v343
        %v673 = vunpack.c.l.b16 %v353
        %v674 = vunpack.c.l.b16 %v367
        %v675 = vunpack.c.l.b16 %v377
        %v676 = vunpack.c.l.b16 %v391
        %v677 = vunpack.c.l.b16 %v401
        %v678 = vunpack.c.l.b16 %v415
        %v679 = vunpack.c.l.b16 %v425
        %v680 = vunpack.c.l.b16 %v439
        %v681 = vunpack.c.l.b16 %v449
        %v682 = vunpack.c.l.b16 %v463
        %v683 = vunpack.c.l.b16 %v473
        %v684 = vunpack.c.l.b16 %v487
        %v685 = vunpack.c.l.b16 %v497
        %v686 = vunpack.c.l.b16 %v511
        %v687 = vunpack.c.l.b16 %v521
        %v688 = vunpack.c.l.b16 %v535
        %v689 = vunpack.c.l.b16 %v545
        %v690 = vunpack.c.l.b16 %v559
        %v691 = vunpack.c.l.b16 %v569
        %v692 = vunpack.c.l.b16 %v583
        %v693 = vunpack.c.l.b16 %v593
        %v694 = vunpack.c.l.b16 %v607
        %v695 = vunpack.c.l.b16 %v617
        %v696 = vunpack.c.l.b16 %v631
        %v697 = vunpack.c.l.b16 %v641
        %v698 = vunpack.c.l.b16 %v655
        %v699 = vunpack.c.l.b16 %v665
        %v700 = vpack.c.b16 %v669, %v668
        %v701 = vpack.c.b16 %v671, %v670
        %v702 = vpack.c.b16 %v673, %v672
        %v703 = vpack.c.b16 %v675, %v674
        %v704 = vpack.c.b16 %v677, %v676
        %v705 = vpack.c.b16 %v679, %v678
        %v706 = vpack.c.b16 %v681, %v680
        %v707 = vpack.c.b16 %v683, %v682
        %v708 = vpack.c.b16 %v685, %v684
        %v709 = vpack.c.b16 %v687, %v686
        %v710 = vpack.c.b16 %v689, %v688
        %v711 = vpack.c.b16 %v691, %v690
        %v712 = vpack.c.b16 %v693, %v692
        %v713 = vpack.c.b16 %v695, %v694
        %v714 = vpack.c.b16 %v697, %v696
        %v715 = vpack.c.b16 %v699, %v698
        %vm716 = vcmask 31744
        %v718 = vsel %vm716, %v700, 0
        %v721 = vsel %vm716, %v701, 0
        %v724 = vsel %vm716, %v702, 0
        %v727 = vsel %vm716, %v703, 0
        %v730 = vsel %vm716, %v704, 0
        %v733 = vsel %vm716, %v705, 0
        %v736 = vsel %vm716, %v706, 0
        %v739 = vsel %vm716, %v707, 0
        %v742 = vsel %vm716, %v708, 0
        %v745 = vsel %vm716, %v709, 0
        %v748 = vsel %vm716, %v710, 0
        %v751 = vsel %vm716, %v711, 0
        %v754 = vsel %vm716, %v712, 0
        %v757 = vsel %vm716, %v713, 0
        %v760 = vsel %vm716, %v714, 0
        %v763 = vsel %vm716, %v715, 0
        %vm765 = vcmask 1041408
        %v767 = vsel %vm765, %v667, 0
        %769 = vmatpush.bf16.msra.mxu0 0
        %770 = vmatpush.bf16.msra.mxu0 0
        %771 = vmatpush.bf16.msra.mxu0 0
        %772 = vmatpush.bf16.msra.mxu0 0
        %773 = vmatpush.bf16.msra.mxu0 0
        %774 = vmatpush.bf16.msra.mxu0 0
        %775 = vmatpush.bf16.msra.mxu0 0
        %776 = vmatpush.bf16.msra.mxu0 %v767
        %777 = vmatmul.bf16.gmra.mxu0 %v718
        %v778 = vpop.f32.mrf.mxu0
        %v779 = vadd.f32 0.0, %v778
        %v780 = vpop.f32.mrf.mxu0
        %v781 = vadd.f32 0.0, %v780
        %782 = vmatmul.bf16.gmra.mxu0 %v721
        %v783 = vpop.f32.mrf.mxu0
        %v784 = vadd.f32 0.0, %v783
        %v785 = vpop.f32.mrf.mxu0
        %v786 = vadd.f32 0.0, %v785
        %787 = vmatmul.bf16.gmra.mxu0 %v724
        %v788 = vpop.f32.mrf.mxu0
        %v789 = vadd.f32 0.0, %v788
        %v790 = vpop.f32.mrf.mxu0
        %v791 = vadd.f32 0.0, %v790
        %792 = vmatmul.bf16.gmra.mxu0 %v727
        %v793 = vpop.f32.mrf.mxu0
        %v794 = vadd.f32 0.0, %v793
        %v795 = vpop.f32.mrf.mxu0
        %v796 = vadd.f32 0.0, %v795
        %797 = vmatmul.bf16.gmra.mxu0 %v730
        %v798 = vpop.f32.mrf.mxu0
        %v799 = vadd.f32 0.0, %v798
        %v800 = vpop.f32.mrf.mxu0
        %v801 = vadd.f32 0.0, %v800
        %802 = vmatmul.bf16.gmra.mxu0 %v733
        %v803 = vpop.f32.mrf.mxu0
        %v804 = vadd.f32 0.0, %v803
        %v805 = vpop.f32.mrf.mxu0
        %v806 = vadd.f32 0.0, %v805
        %807 = vmatmul.bf16.gmra.mxu0 %v736
        %v808 = vpop.f32.mrf.mxu0
        %v809 = vadd.f32 0.0, %v808
        %v810 = vpop.f32.mrf.mxu0
        %v811 = vadd.f32 0.0, %v810
        %812 = vmatmul.bf16.gmra.mxu0 %v739
        %v813 = vpop.f32.mrf.mxu0
        %v814 = vadd.f32 0.0, %v813
        %v815 = vpop.f32.mrf.mxu0
        %v816 = vadd.f32 0.0, %v815
        %817 = vmatmul.bf16.gmra.mxu0 %v742
        %v818 = vpop.f32.mrf.mxu0
        %v819 = vadd.f32 0.0, %v818
        %v820 = vpop.f32.mrf.mxu0
        %v821 = vadd.f32 0.0, %v820
        %822 = vmatmul.bf16.gmra.mxu0 %v745
        %v823 = vpop.f32.mrf.mxu0
        %v824 = vadd.f32 0.0, %v823
        %v825 = vpop.f32.mrf.mxu0
        %v826 = vadd.f32 0.0, %v825
        %827 = vmatmul.bf16.gmra.mxu0 %v748
        %v828 = vpop.f32.mrf.mxu0
        %v829 = vadd.f32 0.0, %v828
        %v830 = vpop.f32.mrf.mxu0
        %v831 = vadd.f32 0.0, %v830
        %832 = vmatmul.bf16.gmra.mxu0 %v751
        %v833 = vpop.f32.mrf.mxu0
        %v834 = vadd.f32 0.0, %v833
        %v835 = vpop.f32.mrf.mxu0
        %v836 = vadd.f32 0.0, %v835
        %837 = vmatmul.bf16.gmra.mxu0 %v754
        %v838 = vpop.f32.mrf.mxu0
        %v839 = vadd.f32 0.0, %v838
        %v840 = vpop.f32.mrf.mxu0
        %v841 = vadd.f32 0.0, %v840
        %842 = vmatmul.bf16.gmra.mxu0 %v757
        %v843 = vpop.f32.mrf.mxu0
        %v844 = vadd.f32 0.0, %v843
        %v845 = vpop.f32.mrf.mxu0
        %v846 = vadd.f32 0.0, %v845
        %847 = vmatmul.bf16.gmra.mxu0 %v760
        %v848 = vpop.f32.mrf.mxu0
        %v849 = vadd.f32 0.0, %v848
        %v850 = vpop.f32.mrf.mxu0
        %v851 = vadd.f32 0.0, %v850
        %852 = vmatmul.bf16.gmra.mxu0 %v763
        %v853 = vpop.f32.mrf.mxu0
        %v854 = vadd.f32 0.0, %v853
        %v855 = vpop.f32.mrf.mxu0
        %v856 = vadd.f32 0.0, %v855
        %857 = vdwg.mxu0
        %v890 = vunpack.c.l.b16 %v224
        %v891 = vunpack.c.l.b16 %v225
        %v892 = vunpack.c.l.b16 %v227
        %v893 = vunpack.c.l.b16 %v228
        %v894 = vunpack.c.l.b16 %v230
        %v895 = vunpack.c.l.b16 %v231
        %v896 = vunpack.c.l.b16 %v233
        %v897 = vunpack.c.l.b16 %v234
        %v898 = vunpack.c.l.b16 %v236
        %v899 = vunpack.c.l.b16 %v237
        %v900 = vunpack.c.l.b16 %v239
        %v901 = vunpack.c.l.b16 %v240
        %v902 = vunpack.c.l.b16 %v242
        %v903 = vunpack.c.l.b16 %v243
        %v904 = vunpack.c.l.b16 %v245
        %v905 = vunpack.c.l.b16 %v246
        %v906 = vunpack.c.l.b16 %v248
        %v907 = vunpack.c.l.b16 %v249
        %v908 = vunpack.c.l.b16 %v251
        %v909 = vunpack.c.l.b16 %v252
        %v910 = vunpack.c.l.b16 %v254
        %v911 = vunpack.c.l.b16 %v255
        %v912 = vunpack.c.l.b16 %v257
        %v913 = vunpack.c.l.b16 %v258
        %v914 = vunpack.c.l.b16 %v260
        %v915 = vunpack.c.l.b16 %v261
        %v916 = vunpack.c.l.b16 %v263
        %v917 = vunpack.c.l.b16 %v264
        %v918 = vunpack.c.l.b16 %v266
        %v919 = vunpack.c.l.b16 %v267
        %v920 = vunpack.c.l.b16 %v269
        %v921 = vunpack.c.l.b16 %v270
        %v922 = vpack.c.b16 %v891, %v890
        %v923 = vpack.c.b16 %v893, %v892
        %v924 = vpack.c.b16 %v895, %v894
        %v925 = vpack.c.b16 %v897, %v896
        %v926 = vpack.c.b16 %v899, %v898
        %v927 = vpack.c.b16 %v901, %v900
        %v928 = vpack.c.b16 %v903, %v902
        %v929 = vpack.c.b16 %v905, %v904
        %v930 = vpack.c.b16 %v907, %v906
        %v931 = vpack.c.b16 %v909, %v908
        %v932 = vpack.c.b16 %v911, %v910
        %v933 = vpack.c.b16 %v913, %v912
        %v934 = vpack.c.b16 %v915, %v914
        %v935 = vpack.c.b16 %v917, %v916
        %v936 = vpack.c.b16 %v919, %v918
        %v937 = vpack.c.b16 %v921, %v920
        %v939 = vsel %vm716, %v922, 0
        %v942 = vsel %vm716, %v923, 0
        %v945 = vsel %vm716, %v924, 0
        %v948 = vsel %vm716, %v925, 0
        %v951 = vsel %vm716, %v926, 0
        %v954 = vsel %vm716, %v927, 0
        %v957 = vsel %vm716, %v928, 0
        %v960 = vsel %vm716, %v929, 0
        %v963 = vsel %vm716, %v930, 0
        %v966 = vsel %vm716, %v931, 0
        %v969 = vsel %vm716, %v932, 0
        %v972 = vsel %vm716, %v933, 0
        %v975 = vsel %vm716, %v934, 0
        %v978 = vsel %vm716, %v935, 0
        %v981 = vsel %vm716, %v936, 0
        %v984 = vsel %vm716, %v937, 0
        %v987 = vsel %vm765, %v278, 0
        %989 = vmatpush.bf16.msra.mxu0 0
        %990 = vmatpush.bf16.msra.mxu0 0
        %991 = vmatpush.bf16.msra.mxu0 0
        %992 = vmatpush.bf16.msra.mxu0 0
        %993 = vmatpush.bf16.msra.mxu0 0
        %994 = vmatpush.bf16.msra.mxu0 0
        %995 = vmatpush.bf16.msra.mxu0 0
        %996 = vmatpush.bf16.msra.mxu0 %v987
        %997 = vmatmul.bf16.gmra.mxu0 %v939
        %v998 = vpop.f32.mrf.mxu0
        %v999 = vadd.f32 %v779, %v998
        %v1000 = vpop.f32.mrf.mxu0
        %v1001 = vadd.f32 %v781, %v1000
        %1002 = vmatmul.bf16.gmra.mxu0 %v942
        %v1003 = vpop.f32.mrf.mxu0
        %v1004 = vadd.f32 %v784, %v1003
        %v1005 = vpop.f32.mrf.mxu0
        %v1006 = vadd.f32 %v786, %v1005
        %1007 = vmatmul.bf16.gmra.mxu0 %v945
        %v1008 = vpop.f32.mrf.mxu0
        %v1009 = vadd.f32 %v789, %v1008
        %v1010 = vpop.f32.mrf.mxu0
        %v1011 = vadd.f32 %v791, %v1010
        %1012 = vmatmul.bf16.gmra.mxu0 %v948
        %v1013 = vpop.f32.mrf.mxu0
        %v1014 = vadd.f32 %v794, %v1013
        %v1015 = vpop.f32.mrf.mxu0
        %v1016 = vadd.f32 %v796, %v1015
        %1017 = vmatmul.bf16.gmra.mxu0 %v951
        %v1018 = vpop.f32.mrf.mxu0
        %v1019 = vadd.f32 %v799, %v1018
        %v1020 = vpop.f32.mrf.mxu0
        %v1021 = vadd.f32 %v801, %v1020
        %1022 = vmatmul.bf16.gmra.mxu0 %v954
        %v1023 = vpop.f32.mrf.mxu0
        %v1024 = vadd.f32 %v804, %v1023
        %v1025 = vpop.f32.mrf.mxu0
        %v1026 = vadd.f32 %v806, %v1025
        %1027 = vmatmul.bf16.gmra.mxu0 %v957
        %v1028 = vpop.f32.mrf.mxu0
        %v1029 = vadd.f32 %v809, %v1028
        %v1030 = vpop.f32.mrf.mxu0
        %v1031 = vadd.f32 %v811, %v1030
        %1032 = vmatmul.bf16.gmra.mxu0 %v960
        %v1033 = vpop.f32.mrf.mxu0
        %v1034 = vadd.f32 %v814, %v1033
        %v1035 = vpop.f32.mrf.mxu0
        %v1036 = vadd.f32 %v816, %v1035
        %1037 = vmatmul.bf16.gmra.mxu0 %v963
        %v1038 = vpop.f32.mrf.mxu0
        %v1039 = vadd.f32 %v819, %v1038
        %v1040 = vpop.f32.mrf.mxu0
        %v1041 = vadd.f32 %v821, %v1040
        %1042 = vmatmul.bf16.gmra.mxu0 %v966
        %v1043 = vpop.f32.mrf.mxu0
        %v1044 = vadd.f32 %v824, %v1043
        %v1045 = vpop.f32.mrf.mxu0
        %v1046 = vadd.f32 %v826, %v1045
        %1047 = vmatmul.bf16.gmra.mxu0 %v969
        %v1048 = vpop.f32.mrf.mxu0
        %v1049 = vadd.f32 %v829, %v1048
        %v1050 = vpop.f32.mrf.mxu0
        %v1051 = vadd.f32 %v831, %v1050
        %1052 = vmatmul.bf16.gmra.mxu0 %v972
        %v1053 = vpop.f32.mrf.mxu0
        %v1054 = vadd.f32 %v834, %v1053
        %v1055 = vpop.f32.mrf.mxu0
        %v1056 = vadd.f32 %v836, %v1055
        %1057 = vmatmul.bf16.gmra.mxu0 %v975
        %v1058 = vpop.f32.mrf.mxu0
        %v1059 = vadd.f32 %v839, %v1058
        %v1060 = vpop.f32.mrf.mxu0
        %v1061 = vadd.f32 %v841, %v1060
        %1062 = vmatmul.bf16.gmra.mxu0 %v978
        %v1063 = vpop.f32.mrf.mxu0
        %v1064 = vadd.f32 %v844, %v1063
        %v1065 = vpop.f32.mrf.mxu0
        %v1066 = vadd.f32 %v846, %v1065
        %1067 = vmatmul.bf16.gmra.mxu0 %v981
        %v1068 = vpop.f32.mrf.mxu0
        %v1069 = vadd.f32 %v849, %v1068
        %v1070 = vpop.f32.mrf.mxu0
        %v1071 = vadd.f32 %v851, %v1070
        %1072 = vmatmul.bf16.gmra.mxu0 %v984
        %v1073 = vpop.f32.mrf.mxu0
        %v1074 = vadd.f32 %v854, %v1073
        %v1075 = vpop.f32.mrf.mxu0
        %v1076 = vadd.f32 %v856, %v1075
        %1077 = vdwg.mxu0
        %vm1094 = vcmask 1042432
        %vm1095 = vcmask 1046532
        %vm1096 = vmor %vm1094, %vm1095
        %v1097 = vrot.slane %v224, 5
        %v1098 = vrot.slane %v1097, 4
        %v1099 = vrot.slane %v225, 5
        %v1100 = vsel %vm1096, %v1098, %v1099
        %v1101 = vrot.slane %v1099, 4
        %v1102 = vrot.slane %v226, 5
        %v1103 = vsel %vm1096, %v1101, %v1102
        %v1104 = vrot.slane %v227, 5
        %v1105 = vrot.slane %v1104, 4
        %v1106 = vrot.slane %v228, 5
        %v1107 = vsel %vm1096, %v1105, %v1106
        %v1108 = vrot.slane %v1106, 4
        %v1109 = vrot.slane %v229, 5
        %v1110 = vsel %vm1096, %v1108, %v1109
        %v1111 = vrot.slane %v230, 5
        %v1112 = vrot.slane %v1111, 4
        %v1113 = vrot.slane %v231, 5
        %v1114 = vsel %vm1096, %v1112, %v1113
        %v1115 = vrot.slane %v1113, 4
        %v1116 = vrot.slane %v232, 5
        %v1117 = vsel %vm1096, %v1115, %v1116
        %v1118 = vrot.slane %v233, 5
        %v1119 = vrot.slane %v1118, 4
        %v1120 = vrot.slane %v234, 5
        %v1121 = vsel %vm1096, %v1119, %v1120
        %v1122 = vrot.slane %v1120, 4
        %v1123 = vrot.slane %v235, 5
        %v1124 = vsel %vm1096, %v1122, %v1123
        %v1125 = vrot.slane %v236, 5
        %v1126 = vrot.slane %v1125, 4
        %v1127 = vrot.slane %v237, 5
        %v1128 = vsel %vm1096, %v1126, %v1127
        %v1129 = vrot.slane %v1127, 4
        %v1130 = vrot.slane %v238, 5
        %v1131 = vsel %vm1096, %v1129, %v1130
        %v1132 = vrot.slane %v239, 5
        %v1133 = vrot.slane %v1132, 4
        %v1134 = vrot.slane %v240, 5
        %v1135 = vsel %vm1096, %v1133, %v1134
        %v1136 = vrot.slane %v1134, 4
        %v1137 = vrot.slane %v241, 5
        %v1138 = vsel %vm1096, %v1136, %v1137
        %v1139 = vrot.slane %v242, 5
        %v1140 = vrot.slane %v1139, 4
        %v1141 = vrot.slane %v243, 5
        %v1142 = vsel %vm1096, %v1140, %v1141
        %v1143 = vrot.slane %v1141, 4
        %v1144 = vrot.slane %v244, 5
        %v1145 = vsel %vm1096, %v1143, %v1144
        %v1146 = vrot.slane %v245, 5
        %v1147 = vrot.slane %v1146, 4
        %v1148 = vrot.slane %v246, 5
        %v1149 = vsel %vm1096, %v1147, %v1148
        %v1150 = vrot.slane %v1148, 4
        %v1151 = vrot.slane %v247, 5
        %v1152 = vsel %vm1096, %v1150, %v1151
        %v1153 = vrot.slane %v248, 5
        %v1154 = vrot.slane %v1153, 4
        %v1155 = vrot.slane %v249, 5
        %v1156 = vsel %vm1096, %v1154, %v1155
        %v1157 = vrot.slane %v1155, 4
        %v1158 = vrot.slane %v250, 5
        %v1159 = vsel %vm1096, %v1157, %v1158
        %v1160 = vrot.slane %v251, 5
        %v1161 = vrot.slane %v1160, 4
        %v1162 = vrot.slane %v252, 5
        %v1163 = vsel %vm1096, %v1161, %v1162
        %v1164 = vrot.slane %v1162, 4
        %v1165 = vrot.slane %v253, 5
        %v1166 = vsel %vm1096, %v1164, %v1165
        %v1167 = vrot.slane %v254, 5
        %v1168 = vrot.slane %v1167, 4
        %v1169 = vrot.slane %v255, 5
        %v1170 = vsel %vm1096, %v1168, %v1169
        %v1171 = vrot.slane %v1169, 4
        %v1172 = vrot.slane %v256, 5
        %v1173 = vsel %vm1096, %v1171, %v1172
        %v1174 = vrot.slane %v257, 5
        %v1175 = vrot.slane %v1174, 4
        %v1176 = vrot.slane %v258, 5
        %v1177 = vsel %vm1096, %v1175, %v1176
        %v1178 = vrot.slane %v1176, 4
        %v1179 = vrot.slane %v259, 5
        %v1180 = vsel %vm1096, %v1178, %v1179
        %v1181 = vrot.slane %v260, 5
        %v1182 = vrot.slane %v1181, 4
        %v1183 = vrot.slane %v261, 5
        %v1184 = vsel %vm1096, %v1182, %v1183
        %v1185 = vrot.slane %v1183, 4
        %v1186 = vrot.slane %v262, 5
        %v1187 = vsel %vm1096, %v1185, %v1186
        %v1188 = vrot.slane %v263, 5
        %v1189 = vrot.slane %v1188, 4
        %v1190 = vrot.slane %v264, 5
        %v1191 = vsel %vm1096, %v1189, %v1190
        %v1192 = vrot.slane %v1190, 4
        %v1193 = vrot.slane %v265, 5
        %v1194 = vsel %vm1096, %v1192, %v1193
        %v1195 = vrot.slane %v266, 5
        %v1196 = vrot.slane %v1195, 4
        %v1197 = vrot.slane %v267, 5
        %v1198 = vsel %vm1096, %v1196, %v1197
        %v1199 = vrot.slane %v1197, 4
        %v1200 = vrot.slane %v268, 5
        %v1201 = vsel %vm1096, %v1199, %v1200
        %v1202 = vrot.slane %v269, 5
        %v1203 = vrot.slane %v1202, 4
        %v1204 = vrot.slane %v270, 5
        %v1205 = vsel %vm1096, %v1203, %v1204
        %v1206 = vrot.slane %v1204, 4
        %v1207 = vrot.slane %v271, 5
        %v1208 = vsel %vm1096, %v1206, %v1207
        %s1209 = scalar_lea.vmem %s1, 4
        %v1210 = vld [vmem:[%s1209] sm:$0x3]
        %v1211 = vunpack.c.l.b16 %v1100
        %v1212 = vunpack.c.l.b16 %v1103
        %v1213 = vunpack.c.l.b16 %v1107
        %v1214 = vunpack.c.l.b16 %v1110
        %v1215 = vunpack.c.l.b16 %v1114
        %v1216 = vunpack.c.l.b16 %v1117
        %v1217 = vunpack.c.l.b16 %v1121
        %v1218 = vunpack.c.l.b16 %v1124
        %v1219 = vunpack.c.l.b16 %v1128
        %v1220 = vunpack.c.l.b16 %v1131
        %v1221 = vunpack.c.l.b16 %v1135
        %v1222 = vunpack.c.l.b16 %v1138
        %v1223 = vunpack.c.l.b16 %v1142
        %v1224 = vunpack.c.l.b16 %v1145
        %v1225 = vunpack.c.l.b16 %v1149
        %v1226 = vunpack.c.l.b16 %v1152
        %v1227 = vunpack.c.l.b16 %v1156
        %v1228 = vunpack.c.l.b16 %v1159
        %v1229 = vunpack.c.l.b16 %v1163
        %v1230 = vunpack.c.l.b16 %v1166
        %v1231 = vunpack.c.l.b16 %v1170
        %v1232 = vunpack.c.l.b16 %v1173
        %v1233 = vunpack.c.l.b16 %v1177
        %v1234 = vunpack.c.l.b16 %v1180
        %v1235 = vunpack.c.l.b16 %v1184
        %v1236 = vunpack.c.l.b16 %v1187
        %v1237 = vunpack.c.l.b16 %v1191
        %v1238 = vunpack.c.l.b16 %v1194
        %v1239 = vunpack.c.l.b16 %v1198
        %v1240 = vunpack.c.l.b16 %v1201
        %v1241 = vunpack.c.l.b16 %v1205
        %v1242 = vunpack.c.l.b16 %v1208
        %v1243 = vpack.c.b16 %v1212, %v1211
        %v1244 = vpack.c.b16 %v1214, %v1213
        %v1245 = vpack.c.b16 %v1216, %v1215
        %v1246 = vpack.c.b16 %v1218, %v1217
        %v1247 = vpack.c.b16 %v1220, %v1219
        %v1248 = vpack.c.b16 %v1222, %v1221
        %v1249 = vpack.c.b16 %v1224, %v1223
        %v1250 = vpack.c.b16 %v1226, %v1225
        %v1251 = vpack.c.b16 %v1228, %v1227
        %v1252 = vpack.c.b16 %v1230, %v1229
        %v1253 = vpack.c.b16 %v1232, %v1231
        %v1254 = vpack.c.b16 %v1234, %v1233
        %v1255 = vpack.c.b16 %v1236, %v1235
        %v1256 = vpack.c.b16 %v1238, %v1237
        %v1257 = vpack.c.b16 %v1240, %v1239
        %v1258 = vpack.c.b16 %v1242, %v1241
        %v1260 = vsel %vm716, %v1243, 0
        %v1263 = vsel %vm716, %v1244, 0
        %v1266 = vsel %vm716, %v1245, 0
        %v1269 = vsel %vm716, %v1246, 0
        %v1272 = vsel %vm716, %v1247, 0
        %v1275 = vsel %vm716, %v1248, 0
        %v1278 = vsel %vm716, %v1249, 0
        %v1281 = vsel %vm716, %v1250, 0
        %v1284 = vsel %vm716, %v1251, 0
        %v1287 = vsel %vm716, %v1252, 0
        %v1290 = vsel %vm716, %v1253, 0
        %v1293 = vsel %vm716, %v1254, 0
        %v1296 = vsel %vm716, %v1255, 0
        %v1299 = vsel %vm716, %v1256, 0
        %v1302 = vsel %vm716, %v1257, 0
        %v1305 = vsel %vm716, %v1258, 0
        %v1308 = vsel %vm765, %v1210, 0
        %1310 = vmatpush.bf16.msra.mxu0 0
        %1311 = vmatpush.bf16.msra.mxu0 0
        %1312 = vmatpush.bf16.msra.mxu0 0
        %1313 = vmatpush.bf16.msra.mxu0 0
        %1314 = vmatpush.bf16.msra.mxu0 0
        %1315 = vmatpush.bf16.msra.mxu0 0
        %1316 = vmatpush.bf16.msra.mxu0 0
        %1317 = vmatpush.bf16.msra.mxu0 %v1308
        %1318 = vmatmul.bf16.gmra.mxu0 %v1260
        %v1319 = vpop.f32.mrf.mxu0
        %v1320 = vadd.f32 0.0, %v1319
        %v1321 = vpop.f32.mrf.mxu0
        %v1322 = vadd.f32 0.0, %v1321
        %1323 = vmatmul.bf16.gmra.mxu0 %v1263
        %v1324 = vpop.f32.mrf.mxu0
        %v1325 = vadd.f32 0.0, %v1324
        %v1326 = vpop.f32.mrf.mxu0
        %v1327 = vadd.f32 0.0, %v1326
        %1328 = vmatmul.bf16.gmra.mxu0 %v1266
        %v1329 = vpop.f32.mrf.mxu0
        %v1330 = vadd.f32 0.0, %v1329
        %v1331 = vpop.f32.mrf.mxu0
        %v1332 = vadd.f32 0.0, %v1331
        %1333 = vmatmul.bf16.gmra.mxu0 %v1269
        %v1334 = vpop.f32.mrf.mxu0
        %v1335 = vadd.f32 0.0, %v1334
        %v1336 = vpop.f32.mrf.mxu0
        %v1337 = vadd.f32 0.0, %v1336
        %1338 = vmatmul.bf16.gmra.mxu0 %v1272
        %v1339 = vpop.f32.mrf.mxu0
        %v1340 = vadd.f32 0.0, %v1339
        %v1341 = vpop.f32.mrf.mxu0
        %v1342 = vadd.f32 0.0, %v1341
        %1343 = vmatmul.bf16.gmra.mxu0 %v1275
        %v1344 = vpop.f32.mrf.mxu0
        %v1345 = vadd.f32 0.0, %v1344
        %v1346 = vpop.f32.mrf.mxu0
        %v1347 = vadd.f32 0.0, %v1346
        %1348 = vmatmul.bf16.gmra.mxu0 %v1278
        %v1349 = vpop.f32.mrf.mxu0
        %v1350 = vadd.f32 0.0, %v1349
        %v1351 = vpop.f32.mrf.mxu0
        %v1352 = vadd.f32 0.0, %v1351
        %1353 = vmatmul.bf16.gmra.mxu0 %v1281
        %v1354 = vpop.f32.mrf.mxu0
        %v1355 = vadd.f32 0.0, %v1354
        %v1356 = vpop.f32.mrf.mxu0
        %v1357 = vadd.f32 0.0, %v1356
        %1358 = vmatmul.bf16.gmra.mxu0 %v1284
        %v1359 = vpop.f32.mrf.mxu0
        %v1360 = vadd.f32 0.0, %v1359
        %v1361 = vpop.f32.mrf.mxu0
        %v1362 = vadd.f32 0.0, %v1361
        %1363 = vmatmul.bf16.gmra.mxu0 %v1287
        %v1364 = vpop.f32.mrf.mxu0
        %v1365 = vadd.f32 0.0, %v1364
        %v1366 = vpop.f32.mrf.mxu0
        %v1367 = vadd.f32 0.0, %v1366
        %1368 = vmatmul.bf16.gmra.mxu0 %v1290
        %v1369 = vpop.f32.mrf.mxu0
        %v1370 = vadd.f32 0.0, %v1369
        %v1371 = vpop.f32.mrf.mxu0
        %v1372 = vadd.f32 0.0, %v1371
        %1373 = vmatmul.bf16.gmra.mxu0 %v1293
        %v1374 = vpop.f32.mrf.mxu0
        %v1375 = vadd.f32 0.0, %v1374
        %v1376 = vpop.f32.mrf.mxu0
        %v1377 = vadd.f32 0.0, %v1376
        %1378 = vmatmul.bf16.gmra.mxu0 %v1296
        %v1379 = vpop.f32.mrf.mxu0
        %v1380 = vadd.f32 0.0, %v1379
        %v1381 = vpop.f32.mrf.mxu0
        %v1382 = vadd.f32 0.0, %v1381
        %1383 = vmatmul.bf16.gmra.mxu0 %v1299
        %v1384 = vpop.f32.mrf.mxu0
        %v1385 = vadd.f32 0.0, %v1384
        %v1386 = vpop.f32.mrf.mxu0
        %v1387 = vadd.f32 0.0, %v1386
        %1388 = vmatmul.bf16.gmra.mxu0 %v1302
        %v1389 = vpop.f32.mrf.mxu0
        %v1390 = vadd.f32 0.0, %v1389
        %v1391 = vpop.f32.mrf.mxu0
        %v1392 = vadd.f32 0.0, %v1391
        %1393 = vmatmul.bf16.gmra.mxu0 %v1305
        %v1394 = vpop.f32.mrf.mxu0
        %v1395 = vadd.f32 0.0, %v1394
        %v1396 = vpop.f32.mrf.mxu0
        %v1397 = vadd.f32 0.0, %v1396
        %1398 = vdwg.mxu0
        %v1399 = vadd.f32 %v999, %v1320
        %v1400 = vadd.f32 %v1001, %v1322
        %v1401 = vadd.f32 %v1004, %v1325
        %v1402 = vadd.f32 %v1006, %v1327
        %v1403 = vadd.f32 %v1009, %v1330
        %v1404 = vadd.f32 %v1011, %v1332
        %v1405 = vadd.f32 %v1014, %v1335
        %v1406 = vadd.f32 %v1016, %v1337
        %v1407 = vadd.f32 %v1019, %v1340
        %v1408 = vadd.f32 %v1021, %v1342
        %v1409 = vadd.f32 %v1024, %v1345
        %v1410 = vadd.f32 %v1026, %v1347
        %v1411 = vadd.f32 %v1029, %v1350
        %v1412 = vadd.f32 %v1031, %v1352
        %v1413 = vadd.f32 %v1034, %v1355
        %v1414 = vadd.f32 %v1036, %v1357
        %v1415 = vadd.f32 %v1039, %v1360
        %v1416 = vadd.f32 %v1041, %v1362
        %v1417 = vadd.f32 %v1044, %v1365
        %v1418 = vadd.f32 %v1046, %v1367
        %v1419 = vadd.f32 %v1049, %v1370
        %v1420 = vadd.f32 %v1051, %v1372
        %v1421 = vadd.f32 %v1054, %v1375
        %v1422 = vadd.f32 %v1056, %v1377
        %v1423 = vadd.f32 %v1059, %v1380
        %v1424 = vadd.f32 %v1061, %v1382
        %v1425 = vadd.f32 %v1064, %v1385
        %v1426 = vadd.f32 %v1066, %v1387
        %v1427 = vadd.f32 %v1069, %v1390
        %v1428 = vadd.f32 %v1071, %v1392
        %v1429 = vadd.f32 %v1074, %v1395
        %v1430 = vadd.f32 %v1076, %v1397
        %s1431 = scalar_lea.vmem %s1, 6
        %v1432 = vld [vmem:[%s1431] sm:$0x3]
        %v1435 = vunpack.c.l.b16 %v272
        %v1436 = vunpack.c.l.b16 %v273
        %v1437 = vpack.c.b16 %v1436, %v1435
        %v1439 = vsel %vm716, %v1437, 0
        %v1442 = vsel %vm765, %v1432, 0
        %1444 = vmatpush.bf16.msra.mxu0 0
        %1445 = vmatpush.bf16.msra.mxu0 0
        %1446 = vmatpush.bf16.msra.mxu0 0
        %1447 = vmatpush.bf16.msra.mxu0 0
        %1448 = vmatpush.bf16.msra.mxu0 0
        %1449 = vmatpush.bf16.msra.mxu0 0
        %1450 = vmatpush.bf16.msra.mxu0 0
        %1451 = vmatpush.bf16.msra.mxu0 %v1442
        %1452 = vmatmul.bf16.gmra.mxu0 %v942
        %v1453 = vpop.f32.mrf.mxu0
        %v1454 = vadd.f32 0.0, %v1453
        %v1455 = vpop.f32.mrf.mxu0
        %v1456 = vadd.f32 0.0, %v1455
        %1457 = vmatmul.bf16.gmra.mxu0 %v945
        %v1458 = vpop.f32.mrf.mxu0
        %v1459 = vadd.f32 0.0, %v1458
        %v1460 = vpop.f32.mrf.mxu0
        %v1461 = vadd.f32 0.0, %v1460
        %1462 = vmatmul.bf16.gmra.mxu0 %v948
        %v1463 = vpop.f32.mrf.mxu0
        %v1464 = vadd.f32 0.0, %v1463
        %v1465 = vpop.f32.mrf.mxu0
        %v1466 = vadd.f32 0.0, %v1465
        %1467 = vmatmul.bf16.gmra.mxu0 %v951
        %v1468 = vpop.f32.mrf.mxu0
        %v1469 = vadd.f32 0.0, %v1468
        %v1470 = vpop.f32.mrf.mxu0
        %v1471 = vadd.f32 0.0, %v1470
        %1472 = vmatmul.bf16.gmra.mxu0 %v954
        %v1473 = vpop.f32.mrf.mxu0
        %v1474 = vadd.f32 0.0, %v1473
        %v1475 = vpop.f32.mrf.mxu0
        %v1476 = vadd.f32 0.0, %v1475
        %1477 = vmatmul.bf16.gmra.mxu0 %v957
        %v1478 = vpop.f32.mrf.mxu0
        %v1479 = vadd.f32 0.0, %v1478
        %v1480 = vpop.f32.mrf.mxu0
        %v1481 = vadd.f32 0.0, %v1480
        %1482 = vmatmul.bf16.gmra.mxu0 %v960
        %v1483 = vpop.f32.mrf.mxu0
        %v1484 = vadd.f32 0.0, %v1483
        %v1485 = vpop.f32.mrf.mxu0
        %v1486 = vadd.f32 0.0, %v1485
        %1487 = vmatmul.bf16.gmra.mxu0 %v963
        %v1488 = vpop.f32.mrf.mxu0
        %v1489 = vadd.f32 0.0, %v1488
        %v1490 = vpop.f32.mrf.mxu0
        %v1491 = vadd.f32 0.0, %v1490
        %1492 = vmatmul.bf16.gmra.mxu0 %v966
        %v1493 = vpop.f32.mrf.mxu0
        %v1494 = vadd.f32 0.0, %v1493
        %v1495 = vpop.f32.mrf.mxu0
        %v1496 = vadd.f32 0.0, %v1495
        %1497 = vmatmul.bf16.gmra.mxu0 %v969
        %v1498 = vpop.f32.mrf.mxu0
        %v1499 = vadd.f32 0.0, %v1498
        %v1500 = vpop.f32.mrf.mxu0
        %v1501 = vadd.f32 0.0, %v1500
        %1502 = vmatmul.bf16.gmra.mxu0 %v972
        %v1503 = vpop.f32.mrf.mxu0
        %v1504 = vadd.f32 0.0, %v1503
        %v1505 = vpop.f32.mrf.mxu0
        %v1506 = vadd.f32 0.0, %v1505
        %1507 = vmatmul.bf16.gmra.mxu0 %v975
        %v1508 = vpop.f32.mrf.mxu0
        %v1509 = vadd.f32 0.0, %v1508
        %v1510 = vpop.f32.mrf.mxu0
        %v1511 = vadd.f32 0.0, %v1510
        %1512 = vmatmul.bf16.gmra.mxu0 %v978
        %v1513 = vpop.f32.mrf.mxu0
        %v1514 = vadd.f32 0.0, %v1513
        %v1515 = vpop.f32.mrf.mxu0
        %v1516 = vadd.f32 0.0, %v1515
        %1517 = vmatmul.bf16.gmra.mxu0 %v981
        %v1518 = vpop.f32.mrf.mxu0
        %v1519 = vadd.f32 0.0, %v1518
        %v1520 = vpop.f32.mrf.mxu0
        %v1521 = vadd.f32 0.0, %v1520
        %1522 = vmatmul.bf16.gmra.mxu0 %v984
        %v1523 = vpop.f32.mrf.mxu0
        %v1524 = vadd.f32 0.0, %v1523
        %v1525 = vpop.f32.mrf.mxu0
        %v1526 = vadd.f32 0.0, %v1525
        %1527 = vmatmul.bf16.gmra.mxu0 %v1439
        %v1528 = vpop.f32.mrf.mxu0
        %v1529 = vadd.f32 0.0, %v1528
        %v1530 = vpop.f32.mrf.mxu0
        %v1531 = vadd.f32 0.0, %v1530
        %1532 = vdwg.mxu0
        %v1533 = vadd.f32 %v1399, %v1454
        %v1534 = vadd.f32 %v1400, %v1456
        %v1535 = vadd.f32 %v1401, %v1459
        %v1536 = vadd.f32 %v1402, %v1461
        %v1537 = vadd.f32 %v1403, %v1464
        %v1538 = vadd.f32 %v1404, %v1466
        %v1539 = vadd.f32 %v1405, %v1469
        %v1540 = vadd.f32 %v1406, %v1471
        %v1541 = vadd.f32 %v1407, %v1474
        %v1542 = vadd.f32 %v1408, %v1476
        %v1543 = vadd.f32 %v1409, %v1479
        %v1544 = vadd.f32 %v1410, %v1481
        %v1545 = vadd.f32 %v1411, %v1484
        %v1546 = vadd.f32 %v1412, %v1486
        %v1547 = vadd.f32 %v1413, %v1489
        %v1548 = vadd.f32 %v1414, %v1491
        %v1549 = vadd.f32 %v1415, %v1494
        %v1550 = vadd.f32 %v1416, %v1496
        %v1551 = vadd.f32 %v1417, %v1499
        %v1552 = vadd.f32 %v1418, %v1501
        %v1553 = vadd.f32 %v1419, %v1504
        %v1554 = vadd.f32 %v1420, %v1506
        %v1555 = vadd.f32 %v1421, %v1509
        %v1556 = vadd.f32 %v1422, %v1511
        %v1557 = vadd.f32 %v1423, %v1514
        %v1558 = vadd.f32 %v1424, %v1516
        %v1559 = vadd.f32 %v1425, %v1519
        %v1560 = vadd.f32 %v1426, %v1521
        %v1561 = vadd.f32 %v1427, %v1524
        %v1562 = vadd.f32 %v1428, %v1526
        %v1563 = vadd.f32 %v1429, %v1529
        %v1564 = vadd.f32 %v1430, %v1531
        %v1566 = vshrl.u32 %v272, 16
        %v1568 = vrot.slane %v1566, 4
        %v1569 = vshll.u32 %v272, 16
        %v1571 = vrot.slane %v1569, 5
        %v1572 = vor.u32 %v1568, %v1571
        %v1573 = vrot.slane %v1572, 4
        %v1575 = vshll.u32 %v273, 16
        %v1577 = vrot.slane %v1575, 5
        %v1578 = vsel %vm281, %v1573, %v1577
        %v1579 = vshrl.u32 %v273, 16
        %v1581 = vrot.slane %v1579, 4
        %v1582 = vor.u32 %v1581, %v1577
        %v1583 = vrot.slane %v1582, 4
        %v1585 = vshll.u32 %v274, 16
        %v1587 = vrot.slane %v1585, 5
        %v1588 = vsel %vm281, %v1583, %v1587
        %s1589 = scalar_lea.vmem %s1, 8
        %v1590 = vld [vmem:[%s1589] sm:$0x3]
        %v1591 = vunpack.c.l.b16 %v1578
        %v1592 = vunpack.c.l.b16 %v1588
        %v1593 = vpack.c.b16 %v1592, %v1591
        %v1595 = vsel %vm716, %v1593, 0
        %v1598 = vsel %vm765, %v1590, 0
        %1600 = vmatpush.bf16.msra.mxu0 0
        %1601 = vmatpush.bf16.msra.mxu0 0
        %1602 = vmatpush.bf16.msra.mxu0 0
        %1603 = vmatpush.bf16.msra.mxu0 0
        %1604 = vmatpush.bf16.msra.mxu0 0
        %1605 = vmatpush.bf16.msra.mxu0 0
        %1606 = vmatpush.bf16.msra.mxu0 0
        %1607 = vmatpush.bf16.msra.mxu0 %v1598
        %1608 = vmatmul.bf16.gmra.mxu0 %v721
        %v1609 = vpop.f32.mrf.mxu0
        %v1610 = vadd.f32 0.0, %v1609
        %v1611 = vpop.f32.mrf.mxu0
        %v1612 = vadd.f32 0.0, %v1611
        %1613 = vmatmul.bf16.gmra.mxu0 %v724
        %v1614 = vpop.f32.mrf.mxu0
        %v1615 = vadd.f32 0.0, %v1614
        %v1616 = vpop.f32.mrf.mxu0
        %v1617 = vadd.f32 0.0, %v1616
        %1618 = vmatmul.bf16.gmra.mxu0 %v727
        %v1619 = vpop.f32.mrf.mxu0
        %v1620 = vadd.f32 0.0, %v1619
        %v1621 = vpop.f32.mrf.mxu0
        %v1622 = vadd.f32 0.0, %v1621
        %1623 = vmatmul.bf16.gmra.mxu0 %v730
        %v1624 = vpop.f32.mrf.mxu0
        %v1625 = vadd.f32 0.0, %v1624
        %v1626 = vpop.f32.mrf.mxu0
        %v1627 = vadd.f32 0.0, %v1626
        %1628 = vmatmul.bf16.gmra.mxu0 %v733
        %v1629 = vpop.f32.mrf.mxu0
        %v1630 = vadd.f32 0.0, %v1629
        %v1631 = vpop.f32.mrf.mxu0
        %v1632 = vadd.f32 0.0, %v1631
        %1633 = vmatmul.bf16.gmra.mxu0 %v736
        %v1634 = vpop.f32.mrf.mxu0
        %v1635 = vadd.f32 0.0, %v1634
        %v1636 = vpop.f32.mrf.mxu0
        %v1637 = vadd.f32 0.0, %v1636
        %1638 = vmatmul.bf16.gmra.mxu0 %v739
        %v1639 = vpop.f32.mrf.mxu0
        %v1640 = vadd.f32 0.0, %v1639
        %v1641 = vpop.f32.mrf.mxu0
        %v1642 = vadd.f32 0.0, %v1641
        %1643 = vmatmul.bf16.gmra.mxu0 %v742
        %v1644 = vpop.f32.mrf.mxu0
        %v1645 = vadd.f32 0.0, %v1644
        %v1646 = vpop.f32.mrf.mxu0
        %v1647 = vadd.f32 0.0, %v1646
        %1648 = vmatmul.bf16.gmra.mxu0 %v745
        %v1649 = vpop.f32.mrf.mxu0
        %v1650 = vadd.f32 0.0, %v1649
        %v1651 = vpop.f32.mrf.mxu0
        %v1652 = vadd.f32 0.0, %v1651
        %1653 = vmatmul.bf16.gmra.mxu0 %v748
        %v1654 = vpop.f32.mrf.mxu0
        %v1655 = vadd.f32 0.0, %v1654
        %v1656 = vpop.f32.mrf.mxu0
        %v1657 = vadd.f32 0.0, %v1656
        %1658 = vmatmul.bf16.gmra.mxu0 %v751
        %v1659 = vpop.f32.mrf.mxu0
        %v1660 = vadd.f32 0.0, %v1659
        %v1661 = vpop.f32.mrf.mxu0
        %v1662 = vadd.f32 0.0, %v1661
        %1663 = vmatmul.bf16.gmra.mxu0 %v754
        %v1664 = vpop.f32.mrf.mxu0
        %v1665 = vadd.f32 0.0, %v1664
        %v1666 = vpop.f32.mrf.mxu0
        %v1667 = vadd.f32 0.0, %v1666
        %1668 = vmatmul.bf16.gmra.mxu0 %v757
        %v1669 = vpop.f32.mrf.mxu0
        %v1670 = vadd.f32 0.0, %v1669
        %v1671 = vpop.f32.mrf.mxu0
        %v1672 = vadd.f32 0.0, %v1671
        %1673 = vmatmul.bf16.gmra.mxu0 %v760
        %v1674 = vpop.f32.mrf.mxu0
        %v1675 = vadd.f32 0.0, %v1674
        %v1676 = vpop.f32.mrf.mxu0
        %v1677 = vadd.f32 0.0, %v1676
        %1678 = vmatmul.bf16.gmra.mxu0 %v763
        %v1679 = vpop.f32.mrf.mxu0
        %v1680 = vadd.f32 0.0, %v1679
        %v1681 = vpop.f32.mrf.mxu0
        %v1682 = vadd.f32 0.0, %v1681
        %1683 = vmatmul.bf16.gmra.mxu0 %v1595
        %v1684 = vpop.f32.mrf.mxu0
        %v1685 = vadd.f32 0.0, %v1684
        %v1686 = vpop.f32.mrf.mxu0
        %v1687 = vadd.f32 0.0, %v1686
        %1688 = vdwg.mxu0
        %v1689 = vadd.f32 %v1533, %v1610
        %v1690 = vadd.f32 %v1534, %v1612
        %v1691 = vadd.f32 %v1535, %v1615
        %v1692 = vadd.f32 %v1536, %v1617
        %v1693 = vadd.f32 %v1537, %v1620
        %v1694 = vadd.f32 %v1538, %v1622
        %v1695 = vadd.f32 %v1539, %v1625
        %v1696 = vadd.f32 %v1540, %v1627
        %v1697 = vadd.f32 %v1541, %v1630
        %v1698 = vadd.f32 %v1542, %v1632
        %v1699 = vadd.f32 %v1543, %v1635
        %v1700 = vadd.f32 %v1544, %v1637
        %v1701 = vadd.f32 %v1545, %v1640
        %v1702 = vadd.f32 %v1546, %v1642
        %v1703 = vadd.f32 %v1547, %v1645
        %v1704 = vadd.f32 %v1548, %v1647
        %v1705 = vadd.f32 %v1549, %v1650
        %v1706 = vadd.f32 %v1550, %v1652
        %v1707 = vadd.f32 %v1551, %v1655
        %v1708 = vadd.f32 %v1552, %v1657
        %v1709 = vadd.f32 %v1553, %v1660
        %v1710 = vadd.f32 %v1554, %v1662
        %v1711 = vadd.f32 %v1555, %v1665
        %v1712 = vadd.f32 %v1556, %v1667
        %v1713 = vadd.f32 %v1557, %v1670
        %v1714 = vadd.f32 %v1558, %v1672
        %v1715 = vadd.f32 %v1559, %v1675
        %v1716 = vadd.f32 %v1560, %v1677
        %v1717 = vadd.f32 %v1561, %v1680
        %v1718 = vadd.f32 %v1562, %v1682
        %v1719 = vadd.f32 %v1563, %v1685
        %v1720 = vadd.f32 %v1564, %v1687
        %v1722 = vrot.slane %v272, 5
        %v1723 = vrot.slane %v1722, 4
        %v1724 = vrot.slane %v273, 5
        %v1725 = vsel %vm1096, %v1723, %v1724
        %v1726 = vrot.slane %v1724, 4
        %v1727 = vrot.slane %v274, 5
        %v1728 = vsel %vm1096, %v1726, %v1727
        %s1729 = scalar_lea.vmem %s1, 10
        %v1730 = vld [vmem:[%s1729] sm:$0x3]
        %v1731 = vunpack.c.l.b16 %v1725
        %v1732 = vunpack.c.l.b16 %v1728
        %v1733 = vpack.c.b16 %v1732, %v1731
        %v1735 = vsel %vm716, %v1733, 0
        %v1738 = vsel %vm765, %v1730, 0
        %1740 = vmatpush.bf16.msra.mxu0 0
        %1741 = vmatpush.bf16.msra.mxu0 0
        %1742 = vmatpush.bf16.msra.mxu0 0
        %1743 = vmatpush.bf16.msra.mxu0 0
        %1744 = vmatpush.bf16.msra.mxu0 0
        %1745 = vmatpush.bf16.msra.mxu0 0
        %1746 = vmatpush.bf16.msra.mxu0 0
        %1747 = vmatpush.bf16.msra.mxu0 %v1738
        %1748 = vmatmul.bf16.gmra.mxu0 %v1263
        %v1749 = vpop.f32.mrf.mxu0
        %v1750 = vadd.f32 0.0, %v1749
        %v1751 = vpop.f32.mrf.mxu0
        %v1752 = vadd.f32 0.0, %v1751
        %1753 = vmatmul.bf16.gmra.mxu0 %v1266
        %v1754 = vpop.f32.mrf.mxu0
        %v1755 = vadd.f32 0.0, %v1754
        %v1756 = vpop.f32.mrf.mxu0
        %v1757 = vadd.f32 0.0, %v1756
        %1758 = vmatmul.bf16.gmra.mxu0 %v1269
        %v1759 = vpop.f32.mrf.mxu0
        %v1760 = vadd.f32 0.0, %v1759
        %v1761 = vpop.f32.mrf.mxu0
        %v1762 = vadd.f32 0.0, %v1761
        %1763 = vmatmul.bf16.gmra.mxu0 %v1272
        %v1764 = vpop.f32.mrf.mxu0
        %v1765 = vadd.f32 0.0, %v1764
        %v1766 = vpop.f32.mrf.mxu0
        %v1767 = vadd.f32 0.0, %v1766
        %1768 = vmatmul.bf16.gmra.mxu0 %v1275
        %v1769 = vpop.f32.mrf.mxu0
        %v1770 = vadd.f32 0.0, %v1769
        %v1771 = vpop.f32.mrf.mxu0
        %v1772 = vadd.f32 0.0, %v1771
        %1773 = vmatmul.bf16.gmra.mxu0 %v1278
        %v1774 = vpop.f32.mrf.mxu0
        %v1775 = vadd.f32 0.0, %v1774
        %v1776 = vpop.f32.mrf.mxu0
        %v1777 = vadd.f32 0.0, %v1776
        %1778 = vmatmul.bf16.gmra.mxu0 %v1281
        %v1779 = vpop.f32.mrf.mxu0
        %v1780 = vadd.f32 0.0, %v1779
        %v1781 = vpop.f32.mrf.mxu0
        %v1782 = vadd.f32 0.0, %v1781
        %1783 = vmatmul.bf16.gmra.mxu0 %v1284
        %v1784 = vpop.f32.mrf.mxu0
        %v1785 = vadd.f32 0.0, %v1784
        %v1786 = vpop.f32.mrf.mxu0
        %v1787 = vadd.f32 0.0, %v1786
        %1788 = vmatmul.bf16.gmra.mxu0 %v1287
        %v1789 = vpop.f32.mrf.mxu0
        %v1790 = vadd.f32 0.0, %v1789
        %v1791 = vpop.f32.mrf.mxu0
        %v1792 = vadd.f32 0.0, %v1791
        %1793 = vmatmul.bf16.gmra.mxu0 %v1290
        %v1794 = vpop.f32.mrf.mxu0
        %v1795 = vadd.f32 0.0, %v1794
        %v1796 = vpop.f32.mrf.mxu0
        %v1797 = vadd.f32 0.0, %v1796
        %1798 = vmatmul.bf16.gmra.mxu0 %v1293
        %v1799 = vpop.f32.mrf.mxu0
        %v1800 = vadd.f32 0.0, %v1799
        %v1801 = vpop.f32.mrf.mxu0
        %v1802 = vadd.f32 0.0, %v1801
        %1803 = vmatmul.bf16.gmra.mxu0 %v1296
        %v1804 = vpop.f32.mrf.mxu0
        %v1805 = vadd.f32 0.0, %v1804
        %v1806 = vpop.f32.mrf.mxu0
        %v1807 = vadd.f32 0.0, %v1806
        %1808 = vmatmul.bf16.gmra.mxu0 %v1299
        %v1809 = vpop.f32.mrf.mxu0
        %v1810 = vadd.f32 0.0, %v1809
        %v1811 = vpop.f32.mrf.mxu0
        %v1812 = vadd.f32 0.0, %v1811
        %1813 = vmatmul.bf16.gmra.mxu0 %v1302
        %v1814 = vpop.f32.mrf.mxu0
        %v1815 = vadd.f32 0.0, %v1814
        %v1816 = vpop.f32.mrf.mxu0
        %v1817 = vadd.f32 0.0, %v1816
        %1818 = vmatmul.bf16.gmra.mxu0 %v1305
        %v1819 = vpop.f32.mrf.mxu0
        %v1820 = vadd.f32 0.0, %v1819
        %v1821 = vpop.f32.mrf.mxu0
        %v1822 = vadd.f32 0.0, %v1821
        %1823 = vmatmul.bf16.gmra.mxu0 %v1735
        %v1824 = vpop.f32.mrf.mxu0
        %v1825 = vadd.f32 0.0, %v1824
        %v1826 = vpop.f32.mrf.mxu0
        %v1827 = vadd.f32 0.0, %v1826
        %1828 = vdwg.mxu0
        %v1829 = vadd.f32 %v1689, %v1750
        %v1830 = vadd.f32 %v1690, %v1752
        %v1831 = vadd.f32 %v1691, %v1755
        %v1832 = vadd.f32 %v1692, %v1757
        %v1833 = vadd.f32 %v1693, %v1760
        %v1834 = vadd.f32 %v1694, %v1762
        %v1835 = vadd.f32 %v1695, %v1765
        %v1836 = vadd.f32 %v1696, %v1767
        %v1837 = vadd.f32 %v1697, %v1770
        %v1838 = vadd.f32 %v1698, %v1772
        %v1839 = vadd.f32 %v1699, %v1775
        %v1840 = vadd.f32 %v1700, %v1777
        %v1841 = vadd.f32 %v1701, %v1780
        %v1842 = vadd.f32 %v1702, %v1782
        %v1843 = vadd.f32 %v1703, %v1785
        %v1844 = vadd.f32 %v1704, %v1787
        %v1845 = vadd.f32 %v1705, %v1790
        %v1846 = vadd.f32 %v1706, %v1792
        %v1847 = vadd.f32 %v1707, %v1795
        %v1848 = vadd.f32 %v1708, %v1797
        %v1849 = vadd.f32 %v1709, %v1800
        %v1850 = vadd.f32 %v1710, %v1802
        %v1851 = vadd.f32 %v1711, %v1805
        %v1852 = vadd.f32 %v1712, %v1807
        %v1853 = vadd.f32 %v1713, %v1810
        %v1854 = vadd.f32 %v1714, %v1812
        %v1855 = vadd.f32 %v1715, %v1815
        %v1856 = vadd.f32 %v1716, %v1817
        %v1857 = vadd.f32 %v1717, %v1820
        %v1858 = vadd.f32 %v1718, %v1822
        %v1859 = vadd.f32 %v1719, %v1825
        %v1860 = vadd.f32 %v1720, %v1827
        %s1861 = scalar_lea.vmem %s1, 12
        %v1862 = vld [vmem:[%s1861] sm:$0x3]
        %v1865 = vunpack.c.l.b16 %v275
        %v1866 = vunpack.c.l.b16 %v276
        %v1867 = vpack.c.b16 %v1866, %v1865
        %v1869 = vsel %vm716, %v1867, 0
        %v1872 = vsel %vm765, %v1862, 0
        %1874 = vmatpush.bf16.msra.mxu0 0
        %1875 = vmatpush.bf16.msra.mxu0 0
        %1876 = vmatpush.bf16.msra.mxu0 0
        %1877 = vmatpush.bf16.msra.mxu0 0
        %1878 = vmatpush.bf16.msra.mxu0 0
        %1879 = vmatpush.bf16.msra.mxu0 0
        %1880 = vmatpush.bf16.msra.mxu0 0
        %1881 = vmatpush.bf16.msra.mxu0 %v1872
        %1882 = vmatmul.bf16.gmra.mxu0 %v945
        %v1883 = vpop.f32.mrf.mxu0
        %v1884 = vadd.f32 0.0, %v1883
        %v1885 = vpop.f32.mrf.mxu0
        %v1886 = vadd.f32 0.0, %v1885
        %1887 = vmatmul.bf16.gmra.mxu0 %v948
        %v1888 = vpop.f32.mrf.mxu0
        %v1889 = vadd.f32 0.0, %v1888
        %v1890 = vpop.f32.mrf.mxu0
        %v1891 = vadd.f32 0.0, %v1890
        %1892 = vmatmul.bf16.gmra.mxu0 %v951
        %v1893 = vpop.f32.mrf.mxu0
        %v1894 = vadd.f32 0.0, %v1893
        %v1895 = vpop.f32.mrf.mxu0
        %v1896 = vadd.f32 0.0, %v1895
        %1897 = vmatmul.bf16.gmra.mxu0 %v954
        %v1898 = vpop.f32.mrf.mxu0
        %v1899 = vadd.f32 0.0, %v1898
        %v1900 = vpop.f32.mrf.mxu0
        %v1901 = vadd.f32 0.0, %v1900
        %1902 = vmatmul.bf16.gmra.mxu0 %v957
        %v1903 = vpop.f32.mrf.mxu0
        %v1904 = vadd.f32 0.0, %v1903
        %v1905 = vpop.f32.mrf.mxu0
        %v1906 = vadd.f32 0.0, %v1905
        %1907 = vmatmul.bf16.gmra.mxu0 %v960
        %v1908 = vpop.f32.mrf.mxu0
        %v1909 = vadd.f32 0.0, %v1908
        %v1910 = vpop.f32.mrf.mxu0
        %v1911 = vadd.f32 0.0, %v1910
        %1912 = vmatmul.bf16.gmra.mxu0 %v963
        %v1913 = vpop.f32.mrf.mxu0
        %v1914 = vadd.f32 0.0, %v1913
        %v1915 = vpop.f32.mrf.mxu0
        %v1916 = vadd.f32 0.0, %v1915
        %1917 = vmatmul.bf16.gmra.mxu0 %v966
        %v1918 = vpop.f32.mrf.mxu0
        %v1919 = vadd.f32 0.0, %v1918
        %v1920 = vpop.f32.mrf.mxu0
        %v1921 = vadd.f32 0.0, %v1920
        %1922 = vmatmul.bf16.gmra.mxu0 %v969
        %v1923 = vpop.f32.mrf.mxu0
        %v1924 = vadd.f32 0.0, %v1923
        %v1925 = vpop.f32.mrf.mxu0
        %v1926 = vadd.f32 0.0, %v1925
        %1927 = vmatmul.bf16.gmra.mxu0 %v972
        %v1928 = vpop.f32.mrf.mxu0
        %v1929 = vadd.f32 0.0, %v1928
        %v1930 = vpop.f32.mrf.mxu0
        %v1931 = vadd.f32 0.0, %v1930
        %1932 = vmatmul.bf16.gmra.mxu0 %v975
        %v1933 = vpop.f32.mrf.mxu0
        %v1934 = vadd.f32 0.0, %v1933
        %v1935 = vpop.f32.mrf.mxu0
        %v1936 = vadd.f32 0.0, %v1935
        %1937 = vmatmul.bf16.gmra.mxu0 %v978
        %v1938 = vpop.f32.mrf.mxu0
        %v1939 = vadd.f32 0.0, %v1938
        %v1940 = vpop.f32.mrf.mxu0
        %v1941 = vadd.f32 0.0, %v1940
        %1942 = vmatmul.bf16.gmra.mxu0 %v981
        %v1943 = vpop.f32.mrf.mxu0
        %v1944 = vadd.f32 0.0, %v1943
        %v1945 = vpop.f32.mrf.mxu0
        %v1946 = vadd.f32 0.0, %v1945
        %1947 = vmatmul.bf16.gmra.mxu0 %v984
        %v1948 = vpop.f32.mrf.mxu0
        %v1949 = vadd.f32 0.0, %v1948
        %v1950 = vpop.f32.mrf.mxu0
        %v1951 = vadd.f32 0.0, %v1950
        %1952 = vmatmul.bf16.gmra.mxu0 %v1439
        %v1953 = vpop.f32.mrf.mxu0
        %v1954 = vadd.f32 0.0, %v1953
        %v1955 = vpop.f32.mrf.mxu0
        %v1956 = vadd.f32 0.0, %v1955
        %1957 = vmatmul.bf16.gmra.mxu0 %v1869
        %v1958 = vpop.f32.mrf.mxu0
        %v1959 = vadd.f32 0.0, %v1958
        %v1960 = vpop.f32.mrf.mxu0
        %v1961 = vadd.f32 0.0, %v1960
        %1962 = vdwg.mxu0
        %v1963 = vadd.f32 %v1829, %v1884
        %v1964 = vadd.f32 %v1830, %v1886
        %v1965 = vadd.f32 %v1831, %v1889
        %v1966 = vadd.f32 %v1832, %v1891
        %v1967 = vadd.f32 %v1833, %v1894
        %v1968 = vadd.f32 %v1834, %v1896
        %v1969 = vadd.f32 %v1835, %v1899
        %v1970 = vadd.f32 %v1836, %v1901
        %v1971 = vadd.f32 %v1837, %v1904
        %v1972 = vadd.f32 %v1838, %v1906
        %v1973 = vadd.f32 %v1839, %v1909
        %v1974 = vadd.f32 %v1840, %v1911
        %v1975 = vadd.f32 %v1841, %v1914
        %v1976 = vadd.f32 %v1842, %v1916
        %v1977 = vadd.f32 %v1843, %v1919
        %v1978 = vadd.f32 %v1844, %v1921
        %v1979 = vadd.f32 %v1845, %v1924
        %v1980 = vadd.f32 %v1846, %v1926
        %v1981 = vadd.f32 %v1847, %v1929
        %v1982 = vadd.f32 %v1848, %v1931
        %v1983 = vadd.f32 %v1849, %v1934
        %v1984 = vadd.f32 %v1850, %v1936
        %v1985 = vadd.f32 %v1851, %v1939
        %v1986 = vadd.f32 %v1852, %v1941
        %v1987 = vadd.f32 %v1853, %v1944
        %v1988 = vadd.f32 %v1854, %v1946
        %v1989 = vadd.f32 %v1855, %v1949
        %v1990 = vadd.f32 %v1856, %v1951
        %v1991 = vadd.f32 %v1857, %v1954
        %v1992 = vadd.f32 %v1858, %v1956
        %v1993 = vadd.f32 %v1859, %v1959
        %v1994 = vadd.f32 %v1860, %v1961
        %v1996 = vshrl.u32 %v275, 16
        %v1998 = vrot.slane %v1996, 4
        %v1999 = vshll.u32 %v275, 16
        %v2001 = vrot.slane %v1999, 5
        %v2002 = vor.u32 %v1998, %v2001
        %v2003 = vrot.slane %v2002, 4
        %v2005 = vshll.u32 %v276, 16
        %v2007 = vrot.slane %v2005, 5
        %v2008 = vsel %vm281, %v2003, %v2007
        %v2009 = vshrl.u32 %v276, 16
        %v2011 = vrot.slane %v2009, 4
        %v2012 = vor.u32 %v2011, %v2007
        %v2013 = vrot.slane %v2012, 4
        %v2015 = vshll.u32 %v277, 16
        %v2017 = vrot.slane %v2015, 5
        %v2018 = vsel %vm281, %v2013, %v2017
        %s2019 = scalar_lea.vmem %s1, 14
        %v2020 = vld [vmem:[%s2019] sm:$0x3]
        %v2021 = vunpack.c.l.b16 %v2008
        %v2022 = vunpack.c.l.b16 %v2018
        %v2023 = vpack.c.b16 %v2022, %v2021
        %v2025 = vsel %vm716, %v2023, 0
        %v2028 = vsel %vm765, %v2020, 0
        %2030 = vmatpush.bf16.msra.mxu0 0
        %2031 = vmatpush.bf16.msra.mxu0 0
        %2032 = vmatpush.bf16.msra.mxu0 0
        %2033 = vmatpush.bf16.msra.mxu0 0
        %2034 = vmatpush.bf16.msra.mxu0 0
        %2035 = vmatpush.bf16.msra.mxu0 0
        %2036 = vmatpush.bf16.msra.mxu0 0
        %2037 = vmatpush.bf16.msra.mxu0 %v2028
        %2038 = vmatmul.bf16.gmra.mxu0 %v724
        %v2039 = vpop.f32.mrf.mxu0
        %v2040 = vadd.f32 0.0, %v2039
        %v2041 = vpop.f32.mrf.mxu0
        %v2042 = vadd.f32 0.0, %v2041
        %2043 = vmatmul.bf16.gmra.mxu0 %v727
        %v2044 = vpop.f32.mrf.mxu0
        %v2045 = vadd.f32 0.0, %v2044
        %v2046 = vpop.f32.mrf.mxu0
        %v2047 = vadd.f32 0.0, %v2046
        %2048 = vmatmul.bf16.gmra.mxu0 %v730
        %v2049 = vpop.f32.mrf.mxu0
        %v2050 = vadd.f32 0.0, %v2049
        %v2051 = vpop.f32.mrf.mxu0
        %v2052 = vadd.f32 0.0, %v2051
        %2053 = vmatmul.bf16.gmra.mxu0 %v733
        %v2054 = vpop.f32.mrf.mxu0
        %v2055 = vadd.f32 0.0, %v2054
        %v2056 = vpop.f32.mrf.mxu0
        %v2057 = vadd.f32 0.0, %v2056
        %2058 = vmatmul.bf16.gmra.mxu0 %v736
        %v2059 = vpop.f32.mrf.mxu0
        %v2060 = vadd.f32 0.0, %v2059
        %v2061 = vpop.f32.mrf.mxu0
        %v2062 = vadd.f32 0.0, %v2061
        %2063 = vmatmul.bf16.gmra.mxu0 %v739
        %v2064 = vpop.f32.mrf.mxu0
        %v2065 = vadd.f32 0.0, %v2064
        %v2066 = vpop.f32.mrf.mxu0
        %v2067 = vadd.f32 0.0, %v2066
        %2068 = vmatmul.bf16.gmra.mxu0 %v742
        %v2069 = vpop.f32.mrf.mxu0
        %v2070 = vadd.f32 0.0, %v2069
        %v2071 = vpop.f32.mrf.mxu0
        %v2072 = vadd.f32 0.0, %v2071
        %2073 = vmatmul.bf16.gmra.mxu0 %v745
        %v2074 = vpop.f32.mrf.mxu0
        %v2075 = vadd.f32 0.0, %v2074
        %v2076 = vpop.f32.mrf.mxu0
        %v2077 = vadd.f32 0.0, %v2076
        %2078 = vmatmul.bf16.gmra.mxu0 %v748
        %v2079 = vpop.f32.mrf.mxu0
        %v2080 = vadd.f32 0.0, %v2079
        %v2081 = vpop.f32.mrf.mxu0
        %v2082 = vadd.f32 0.0, %v2081
        %2083 = vmatmul.bf16.gmra.mxu0 %v751
        %v2084 = vpop.f32.mrf.mxu0
        %v2085 = vadd.f32 0.0, %v2084
        %v2086 = vpop.f32.mrf.mxu0
        %v2087 = vadd.f32 0.0, %v2086
        %2088 = vmatmul.bf16.gmra.mxu0 %v754
        %v2089 = vpop.f32.mrf.mxu0
        %v2090 = vadd.f32 0.0, %v2089
        %v2091 = vpop.f32.mrf.mxu0
        %v2092 = vadd.f32 0.0, %v2091
        %2093 = vmatmul.bf16.gmra.mxu0 %v757
        %v2094 = vpop.f32.mrf.mxu0
        %v2095 = vadd.f32 0.0, %v2094
        %v2096 = vpop.f32.mrf.mxu0
        %v2097 = vadd.f32 0.0, %v2096
        %2098 = vmatmul.bf16.gmra.mxu0 %v760
        %v2099 = vpop.f32.mrf.mxu0
        %v2100 = vadd.f32 0.0, %v2099
        %v2101 = vpop.f32.mrf.mxu0
        %v2102 = vadd.f32 0.0, %v2101
        %2103 = vmatmul.bf16.gmra.mxu0 %v763
        %v2104 = vpop.f32.mrf.mxu0
        %v2105 = vadd.f32 0.0, %v2104
        %v2106 = vpop.f32.mrf.mxu0
        %v2107 = vadd.f32 0.0, %v2106
        %2108 = vmatmul.bf16.gmra.mxu0 %v1595
        %v2109 = vpop.f32.mrf.mxu0
        %v2110 = vadd.f32 0.0, %v2109
        %v2111 = vpop.f32.mrf.mxu0
        %v2112 = vadd.f32 0.0, %v2111
        %2113 = vmatmul.bf16.gmra.mxu0 %v2025
        %v2114 = vpop.f32.mrf.mxu0
        %v2115 = vadd.f32 0.0, %v2114
        %v2116 = vpop.f32.mrf.mxu0
        %v2117 = vadd.f32 0.0, %v2116
        %2118 = vdwg.mxu0
        %v2119 = vadd.f32 %v1963, %v2040
        %v2120 = vadd.f32 %v1964, %v2042
        %v2121 = vadd.f32 %v1965, %v2045
        %v2122 = vadd.f32 %v1966, %v2047
        %v2123 = vadd.f32 %v1967, %v2050
        %v2124 = vadd.f32 %v1968, %v2052
        %v2125 = vadd.f32 %v1969, %v2055
        %v2126 = vadd.f32 %v1970, %v2057
        %v2127 = vadd.f32 %v1971, %v2060
        %v2128 = vadd.f32 %v1972, %v2062
        %v2129 = vadd.f32 %v1973, %v2065
        %v2130 = vadd.f32 %v1974, %v2067
        %v2131 = vadd.f32 %v1975, %v2070
        %v2132 = vadd.f32 %v1976, %v2072
        %v2133 = vadd.f32 %v1977, %v2075
        %v2134 = vadd.f32 %v1978, %v2077
        %v2135 = vadd.f32 %v1979, %v2080
        %v2136 = vadd.f32 %v1980, %v2082
        %v2137 = vadd.f32 %v1981, %v2085
        %v2138 = vadd.f32 %v1982, %v2087
        %v2139 = vadd.f32 %v1983, %v2090
        %v2140 = vadd.f32 %v1984, %v2092
        %v2141 = vadd.f32 %v1985, %v2095
        %v2142 = vadd.f32 %v1986, %v2097
        %v2143 = vadd.f32 %v1987, %v2100
        %v2144 = vadd.f32 %v1988, %v2102
        %v2145 = vadd.f32 %v1989, %v2105
        %v2146 = vadd.f32 %v1990, %v2107
        %v2147 = vadd.f32 %v1991, %v2110
        %v2148 = vadd.f32 %v1992, %v2112
        %v2149 = vadd.f32 %v1993, %v2115
        %v2150 = vadd.f32 %v1994, %v2117
        %v2152 = vrot.slane %v275, 5
        %v2153 = vrot.slane %v2152, 4
        %v2154 = vrot.slane %v276, 5
        %v2155 = vsel %vm1096, %v2153, %v2154
        %v2156 = vrot.slane %v2154, 4
        %v2157 = vrot.slane %v277, 5
        %v2158 = vsel %vm1096, %v2156, %v2157
        %s2159 = scalar_lea.vmem %s1, 16
        %v2160 = vld [vmem:[%s2159] sm:$0x3]
        %v2161 = vunpack.c.l.b16 %v2155
        %v2162 = vunpack.c.l.b16 %v2158
        %v2163 = vpack.c.b16 %v2162, %v2161
        %v2165 = vsel %vm716, %v2163, 0
        %v2168 = vsel %vm765, %v2160, 0
        %2170 = vmatpush.bf16.msra.mxu0 0
        %2171 = vmatpush.bf16.msra.mxu0 0
        %2172 = vmatpush.bf16.msra.mxu0 0
        %2173 = vmatpush.bf16.msra.mxu0 0
        %2174 = vmatpush.bf16.msra.mxu0 0
        %2175 = vmatpush.bf16.msra.mxu0 0
        %2176 = vmatpush.bf16.msra.mxu0 0
        %2177 = vmatpush.bf16.msra.mxu0 %v2168
        %2178 = vmatmul.bf16.gmra.mxu0 %v1266
        %v2179 = vpop.f32.mrf.mxu0
        %v2180 = vadd.f32 0.0, %v2179
        %v2181 = vpop.f32.mrf.mxu0
        %v2182 = vadd.f32 0.0, %v2181
        %2183 = vmatmul.bf16.gmra.mxu0 %v1269
        %v2184 = vpop.f32.mrf.mxu0
        %v2185 = vadd.f32 0.0, %v2184
        %v2186 = vpop.f32.mrf.mxu0
        %v2187 = vadd.f32 0.0, %v2186
        %2188 = vmatmul.bf16.gmra.mxu0 %v1272
        %v2189 = vpop.f32.mrf.mxu0
        %v2190 = vadd.f32 0.0, %v2189
        %v2191 = vpop.f32.mrf.mxu0
        %v2192 = vadd.f32 0.0, %v2191
        %2193 = vmatmul.bf16.gmra.mxu0 %v1275
        %v2194 = vpop.f32.mrf.mxu0
        %v2195 = vadd.f32 0.0, %v2194
        %v2196 = vpop.f32.mrf.mxu0
        %v2197 = vadd.f32 0.0, %v2196
        %2198 = vmatmul.bf16.gmra.mxu0 %v1278
        %v2199 = vpop.f32.mrf.mxu0
        %v2200 = vadd.f32 0.0, %v2199
        %v2201 = vpop.f32.mrf.mxu0
        %v2202 = vadd.f32 0.0, %v2201
        %2203 = vmatmul.bf16.gmra.mxu0 %v1281
        %v2204 = vpop.f32.mrf.mxu0
        %v2205 = vadd.f32 0.0, %v2204
        %v2206 = vpop.f32.mrf.mxu0
        %v2207 = vadd.f32 0.0, %v2206
        %2208 = vmatmul.bf16.gmra.mxu0 %v1284
        %v2209 = vpop.f32.mrf.mxu0
        %v2210 = vadd.f32 0.0, %v2209
        %v2211 = vpop.f32.mrf.mxu0
        %v2212 = vadd.f32 0.0, %v2211
        %2213 = vmatmul.bf16.gmra.mxu0 %v1287
        %v2214 = vpop.f32.mrf.mxu0
        %v2215 = vadd.f32 0.0, %v2214
        %v2216 = vpop.f32.mrf.mxu0
        %v2217 = vadd.f32 0.0, %v2216
        %2218 = vmatmul.bf16.gmra.mxu0 %v1290
        %v2219 = vpop.f32.mrf.mxu0
        %v2220 = vadd.f32 0.0, %v2219
        %v2221 = vpop.f32.mrf.mxu0
        %v2222 = vadd.f32 0.0, %v2221
        %2223 = vmatmul.bf16.gmra.mxu0 %v1293
        %v2224 = vpop.f32.mrf.mxu0
        %v2225 = vadd.f32 0.0, %v2224
        %v2226 = vpop.f32.mrf.mxu0
        %v2227 = vadd.f32 0.0, %v2226
        %2228 = vmatmul.bf16.gmra.mxu0 %v1296
        %v2229 = vpop.f32.mrf.mxu0
        %v2230 = vadd.f32 0.0, %v2229
        %v2231 = vpop.f32.mrf.mxu0
        %v2232 = vadd.f32 0.0, %v2231
        %2233 = vmatmul.bf16.gmra.mxu0 %v1299
        %v2234 = vpop.f32.mrf.mxu0
        %v2235 = vadd.f32 0.0, %v2234
        %v2236 = vpop.f32.mrf.mxu0
        %v2237 = vadd.f32 0.0, %v2236
        %2238 = vmatmul.bf16.gmra.mxu0 %v1302
        %v2239 = vpop.f32.mrf.mxu0
        %v2240 = vadd.f32 0.0, %v2239
        %v2241 = vpop.f32.mrf.mxu0
        %v2242 = vadd.f32 0.0, %v2241
        %2243 = vmatmul.bf16.gmra.mxu0 %v1305
        %v2244 = vpop.f32.mrf.mxu0
        %v2245 = vadd.f32 0.0, %v2244
        %v2246 = vpop.f32.mrf.mxu0
        %v2247 = vadd.f32 0.0, %v2246
        %2248 = vmatmul.bf16.gmra.mxu0 %v1735
        %v2249 = vpop.f32.mrf.mxu0
        %v2250 = vadd.f32 0.0, %v2249
        %v2251 = vpop.f32.mrf.mxu0
        %v2252 = vadd.f32 0.0, %v2251
        %2253 = vmatmul.bf16.gmra.mxu0 %v2165
        %v2254 = vpop.f32.mrf.mxu0
        %v2255 = vadd.f32 0.0, %v2254
        %v2256 = vpop.f32.mrf.mxu0
        %v2257 = vadd.f32 0.0, %v2256
        %2258 = vdwg.mxu0
        %v2259 = vadd.f32 %v2119, %v2180
        %v2260 = vadd.f32 %v2120, %v2182
        %v2261 = vadd.f32 %v2121, %v2185
        %v2262 = vadd.f32 %v2122, %v2187
        %v2263 = vadd.f32 %v2123, %v2190
        %v2264 = vadd.f32 %v2124, %v2192
        %v2265 = vadd.f32 %v2125, %v2195
        %v2266 = vadd.f32 %v2126, %v2197
        %v2267 = vadd.f32 %v2127, %v2200
        %v2268 = vadd.f32 %v2128, %v2202
        %v2269 = vadd.f32 %v2129, %v2205
        %v2270 = vadd.f32 %v2130, %v2207
        %v2271 = vadd.f32 %v2131, %v2210
        %v2272 = vadd.f32 %v2132, %v2212
        %v2273 = vadd.f32 %v2133, %v2215
        %v2274 = vadd.f32 %v2134, %v2217
        %v2275 = vadd.f32 %v2135, %v2220
        %v2276 = vadd.f32 %v2136, %v2222
        %v2277 = vadd.f32 %v2137, %v2225
        %v2278 = vadd.f32 %v2138, %v2227
        %v2279 = vadd.f32 %v2139, %v2230
        %v2280 = vadd.f32 %v2140, %v2232
        %v2281 = vadd.f32 %v2141, %v2235
        %v2282 = vadd.f32 %v2142, %v2237
        %v2283 = vadd.f32 %v2143, %v2240
        %v2284 = vadd.f32 %v2144, %v2242
        %v2285 = vadd.f32 %v2145, %v2245
        %v2286 = vadd.f32 %v2146, %v2247
        %v2287 = vadd.f32 %v2147, %v2250
        %v2288 = vadd.f32 %v2148, %v2252
        %v2289 = vadd.f32 %v2149, %v2255
        %v2290 = vadd.f32 %v2150, %v2257
        %vm2291 = vcmask 261120
        %v2292 = vsel %vm2291, %v2259, 0.0
        %v2293 = vsel %vm2291, %v2260, 0.0
        %v2294 = vadd.f32 %v2292, %v2293
        %v2295 = vsel %vm2291, %v2261, 0.0
        %v2296 = vadd.f32 %v2294, %v2295
        %v2297 = vsel %vm2291, %v2262, 0.0
        %v2298 = vadd.f32 %v2296, %v2297
        %v2299 = vsel %vm2291, %v2263, 0.0
        %v2300 = vadd.f32 %v2298, %v2299
        %v2301 = vsel %vm2291, %v2264, 0.0
        %v2302 = vadd.f32 %v2300, %v2301
        %v2303 = vsel %vm2291, %v2265, 0.0
        %v2304 = vadd.f32 %v2302, %v2303
        %v2305 = vsel %vm2291, %v2266, 0.0
        %v2306 = vadd.f32 %v2304, %v2305
        %v2307 = vsel %vm2291, %v2267, 0.0
        %v2308 = vadd.f32 %v2306, %v2307
        %v2309 = vsel %vm2291, %v2268, 0.0
        %v2310 = vadd.f32 %v2308, %v2309
        %v2311 = vsel %vm2291, %v2269, 0.0
        %v2312 = vadd.f32 %v2310, %v2311
        %v2313 = vsel %vm2291, %v2270, 0.0
        %v2314 = vadd.f32 %v2312, %v2313
        %v2315 = vsel %vm2291, %v2271, 0.0
        %v2316 = vadd.f32 %v2314, %v2315
        %v2317 = vsel %vm2291, %v2272, 0.0
        %v2318 = vadd.f32 %v2316, %v2317
        %v2319 = vsel %vm2291, %v2273, 0.0
        %v2320 = vadd.f32 %v2318, %v2319
        %v2321 = vsel %vm2291, %v2274, 0.0
        %v2322 = vadd.f32 %v2320, %v2321
        %v2323 = vsel %vm2291, %v2275, 0.0
        %v2324 = vadd.f32 %v2322, %v2323
        %v2325 = vsel %vm2291, %v2276, 0.0
        %v2326 = vadd.f32 %v2324, %v2325
        %v2327 = vsel %vm2291, %v2277, 0.0
        %v2328 = vadd.f32 %v2326, %v2327
        %v2329 = vsel %vm2291, %v2278, 0.0
        %v2330 = vadd.f32 %v2328, %v2329
        %v2331 = vsel %vm2291, %v2279, 0.0
        %v2332 = vadd.f32 %v2330, %v2331
        %v2333 = vsel %vm2291, %v2280, 0.0
        %v2334 = vadd.f32 %v2332, %v2333
        %v2335 = vsel %vm2291, %v2281, 0.0
        %v2336 = vadd.f32 %v2334, %v2335
        %v2337 = vsel %vm2291, %v2282, 0.0
        %v2338 = vadd.f32 %v2336, %v2337
        %v2339 = vsel %vm2291, %v2283, 0.0
        %v2340 = vadd.f32 %v2338, %v2339
        %v2341 = vsel %vm2291, %v2284, 0.0
        %v2342 = vadd.f32 %v2340, %v2341
        %v2343 = vsel %vm2291, %v2285, 0.0
        %v2344 = vadd.f32 %v2342, %v2343
        %v2345 = vsel %vm2291, %v2286, 0.0
        %v2346 = vadd.f32 %v2344, %v2345
        %v2347 = vsel %vm2291, %v2287, 0.0
        %v2348 = vadd.f32 %v2346, %v2347
        %v2349 = vsel %vm2291, %v2288, 0.0
        %v2350 = vadd.f32 %v2348, %v2349
        %v2351 = vsel %vm2291, %v2289, 0.0
        %v2352 = vadd.f32 %v2350, %v2351
        %v2353 = vsel %vm2291, %v2290, 0.0
        %v2354 = vadd.f32 %v2352, %v2353
        %v2355 = vrot.slane %v2354, 4
        %v2356 = vadd.f32 %v2354, %v2355
        %v2357 = vrot.slane %v2356, 2
        %v2358 = vadd.f32 %v2356, %v2357
        %v2359 = vrot.slane %v2358, 1
        %v2360 = vadd.f32 %v2358, %v2359
        %v2361 = vrcp.pop 256.0
        %v2362 = vmul.f32 256.0, %v2361
        %v2363 = vsub.f32 1.0, %v2362
        %v2364 = vmul.f32 %v2361, %v2363
        %v2365 = vadd.f32 %v2361, %v2364
        %vm2366 = vweird.f32 %v2361
        %v2367 = vsel %vm2366, %v2361, %v2365
        %v2368 = vmul.f32 %v2360, %v2367
        %v2369 = vmul.f32 %v2259, %v2259
        %v2370 = vmul.f32 %v2260, %v2260
        %v2371 = vmul.f32 %v2261, %v2261
        %v2372 = vmul.f32 %v2262, %v2262
        %v2373 = vmul.f32 %v2263, %v2263
        %v2374 = vmul.f32 %v2264, %v2264
        %v2375 = vmul.f32 %v2265, %v2265
        %v2376 = vmul.f32 %v2266, %v2266
        %v2377 = vmul.f32 %v2267, %v2267
        %v2378 = vmul.f32 %v2268, %v2268
        %v2379 = vmul.f32 %v2269, %v2269
        %v2380 = vmul.f32 %v2270, %v2270
        %v2381 = vmul.f32 %v2271, %v2271
        %v2382 = vmul.f32 %v2272, %v2272
        %v2383 = vmul.f32 %v2273, %v2273
        %v2384 = vmul.f32 %v2274, %v2274
        %v2385 = vmul.f32 %v2275, %v2275
        %v2386 = vmul.f32 %v2276, %v2276
        %v2387 = vmul.f32 %v2277, %v2277
        %v2388 = vmul.f32 %v2278, %v2278
        %v2389 = vmul.f32 %v2279, %v2279
        %v2390 = vmul.f32 %v2280, %v2280
        %v2391 = vmul.f32 %v2281, %v2281
        %v2392 = vmul.f32 %v2282, %v2282
        %v2393 = vmul.f32 %v2283, %v2283
        %v2394 = vmul.f32 %v2284, %v2284
        %v2395 = vmul.f32 %v2285, %v2285
        %v2396 = vmul.f32 %v2286, %v2286
        %v2397 = vmul.f32 %v2287, %v2287
        %v2398 = vmul.f32 %v2288, %v2288
        %v2399 = vmul.f32 %v2289, %v2289
        %v2400 = vmul.f32 %v2290, %v2290
        %v2401 = vsel %vm2291, %v2369, 0.0
        %v2402 = vsel %vm2291, %v2370, 0.0
        %v2403 = vadd.f32 %v2401, %v2402
        %v2404 = vsel %vm2291, %v2371, 0.0
        %v2405 = vadd.f32 %v2403, %v2404
        %v2406 = vsel %vm2291, %v2372, 0.0
        %v2407 = vadd.f32 %v2405, %v2406
        %v2408 = vsel %vm2291, %v2373, 0.0
        %v2409 = vadd.f32 %v2407, %v2408
        %v2410 = vsel %vm2291, %v2374, 0.0
        %v2411 = vadd.f32 %v2409, %v2410
        %v2412 = vsel %vm2291, %v2375, 0.0
        %v2413 = vadd.f32 %v2411, %v2412
        %v2414 = vsel %vm2291, %v2376, 0.0
        %v2415 = vadd.f32 %v2413, %v2414
        %v2416 = vsel %vm2291, %v2377, 0.0
        %v2417 = vadd.f32 %v2415, %v2416
        %v2418 = vsel %vm2291, %v2378, 0.0
        %v2419 = vadd.f32 %v2417, %v2418
        %v2420 = vsel %vm2291, %v2379, 0.0
        %v2421 = vadd.f32 %v2419, %v2420
        %v2422 = vsel %vm2291, %v2380, 0.0
        %v2423 = vadd.f32 %v2421, %v2422
        %v2424 = vsel %vm2291, %v2381, 0.0
        %v2425 = vadd.f32 %v2423, %v2424
        %v2426 = vsel %vm2291, %v2382, 0.0
        %v2427 = vadd.f32 %v2425, %v2426
        %v2428 = vsel %vm2291, %v2383, 0.0
        %v2429 = vadd.f32 %v2427, %v2428
        %v2430 = vsel %vm2291, %v2384, 0.0
        %v2431 = vadd.f32 %v2429, %v2430
        %v2432 = vsel %vm2291, %v2385, 0.0
        %v2433 = vadd.f32 %v2431, %v2432
        %v2434 = vsel %vm2291, %v2386, 0.0
        %v2435 = vadd.f32 %v2433, %v2434
        %v2436 = vsel %vm2291, %v2387, 0.0
        %v2437 = vadd.f32 %v2435, %v2436
        %v2438 = vsel %vm2291, %v2388, 0.0
        %v2439 = vadd.f32 %v2437, %v2438
        %v2440 = vsel %vm2291, %v2389, 0.0
        %v2441 = vadd.f32 %v2439, %v2440
        %v2442 = vsel %vm2291, %v2390, 0.0
        %v2443 = vadd.f32 %v2441, %v2442
        %v2444 = vsel %vm2291, %v2391, 0.0
        %v2445 = vadd.f32 %v2443, %v2444
        %v2446 = vsel %vm2291, %v2392, 0.0
        %v2447 = vadd.f32 %v2445, %v2446
        %v2448 = vsel %vm2291, %v2393, 0.0
        %v2449 = vadd.f32 %v2447, %v2448
        %v2450 = vsel %vm2291, %v2394, 0.0
        %v2451 = vadd.f32 %v2449, %v2450
        %v2452 = vsel %vm2291, %v2395, 0.0
        %v2453 = vadd.f32 %v2451, %v2452
        %v2454 = vsel %vm2291, %v2396, 0.0
        %v2455 = vadd.f32 %v2453, %v2454
        %v2456 = vsel %vm2291, %v2397, 0.0
        %v2457 = vadd.f32 %v2455, %v2456
        %v2458 = vsel %vm2291, %v2398, 0.0
        %v2459 = vadd.f32 %v2457, %v2458
        %v2460 = vsel %vm2291, %v2399, 0.0
        %v2461 = vadd.f32 %v2459, %v2460
        %v2462 = vsel %vm2291, %v2400, 0.0
        %v2463 = vadd.f32 %v2461, %v2462
        %v2464 = vrot.slane %v2463, 4
        %v2465 = vadd.f32 %v2463, %v2464
        %v2466 = vrot.slane %v2465, 2
        %v2467 = vadd.f32 %v2465, %v2466
        %v2468 = vrot.slane %v2467, 1
        %v2469 = vadd.f32 %v2467, %v2468
        %v2470 = vmul.f32 %v2469, %v2367
        %v2471 = vmul.f32 %v2368, %v2368
        %v2472 = vsub.f32 %v2470, %v2471
        %v2473 = vsub.f32 %v2259, %v2368
        %v2474 = vsub.f32 %v2260, %v2368
        %v2475 = vsub.f32 %v2261, %v2368
        %v2476 = vsub.f32 %v2262, %v2368
        %v2477 = vsub.f32 %v2263, %v2368
        %v2478 = vsub.f32 %v2264, %v2368
        %v2479 = vsub.f32 %v2265, %v2368
        %v2480 = vsub.f32 %v2266, %v2368
        %v2481 = vsub.f32 %v2267, %v2368
        %v2482 = vsub.f32 %v2268, %v2368
        %v2483 = vsub.f32 %v2269, %v2368
        %v2484 = vsub.f32 %v2270, %v2368
        %v2485 = vsub.f32 %v2271, %v2368
        %v2486 = vsub.f32 %v2272, %v2368
        %v2487 = vsub.f32 %v2273, %v2368
        %v2488 = vsub.f32 %v2274, %v2368
        %v2489 = vsub.f32 %v2275, %v2368
        %v2490 = vsub.f32 %v2276, %v2368
        %v2491 = vsub.f32 %v2277, %v2368
        %v2492 = vsub.f32 %v2278, %v2368
        %v2493 = vsub.f32 %v2279, %v2368
        %v2494 = vsub.f32 %v2280, %v2368
        %v2495 = vsub.f32 %v2281, %v2368
        %v2496 = vsub.f32 %v2282, %v2368
        %v2497 = vsub.f32 %v2283, %v2368
        %v2498 = vsub.f32 %v2284, %v2368
        %v2499 = vsub.f32 %v2285, %v2368
        %v2500 = vsub.f32 %v2286, %v2368
        %v2501 = vsub.f32 %v2287, %v2368
        %v2502 = vsub.f32 %v2288, %v2368
        %v2503 = vsub.f32 %v2289, %v2368
        %v2504 = vsub.f32 %v2290, %v2368
        %v2505 = vadd.f32 %v2472, 1e-05
        %v2506 = vrsqrt.pop %v2505
        %v2507 = vmul.f32 %v2506, %v2505
        %v2508 = vmul.f32 %v2507, %v2506
        %v2509 = vmul.f32 0.5, %v2508
        %v2510 = vsub.f32 1.5, %v2509
        %v2511 = vmul.f32 %v2506, %v2510
        %vm2512 = vweird.f32 %v2505
        %vm2513 = vweird.f32 %v2506
        %vm2514 = vmor %vm2512, %vm2513
        %v2515 = vsel %vm2514, %v2506, %v2511
        %v2516 = vmul.f32 %v2473, %v2515
        %v2517 = vmul.f32 %v2474, %v2515
        %v2518 = vmul.f32 %v2475, %v2515
        %v2519 = vmul.f32 %v2476, %v2515
        %v2520 = vmul.f32 %v2477, %v2515
        %v2521 = vmul.f32 %v2478, %v2515
        %v2522 = vmul.f32 %v2479, %v2515
        %v2523 = vmul.f32 %v2480, %v2515
        %v2524 = vmul.f32 %v2481, %v2515
        %v2525 = vmul.f32 %v2482, %v2515
        %v2526 = vmul.f32 %v2483, %v2515
        %v2527 = vmul.f32 %v2484, %v2515
        %v2528 = vmul.f32 %v2485, %v2515
        %v2529 = vmul.f32 %v2486, %v2515
        %v2530 = vmul.f32 %v2487, %v2515
        %v2531 = vmul.f32 %v2488, %v2515
        %v2532 = vmul.f32 %v2489, %v2515
        %v2533 = vmul.f32 %v2490, %v2515
        %v2534 = vmul.f32 %v2491, %v2515
        %v2535 = vmul.f32 %v2492, %v2515
        %v2536 = vmul.f32 %v2493, %v2515
        %v2537 = vmul.f32 %v2494, %v2515
        %v2538 = vmul.f32 %v2495, %v2515
        %v2539 = vmul.f32 %v2496, %v2515
        %v2540 = vmul.f32 %v2497, %v2515
        %v2541 = vmul.f32 %v2498, %v2515
        %v2542 = vmul.f32 %v2499, %v2515
        %v2543 = vmul.f32 %v2500, %v2515
        %v2544 = vmul.f32 %v2501, %v2515
        %v2545 = vmul.f32 %v2502, %v2515
        %v2546 = vmul.f32 %v2503, %v2515
        %v2547 = vmul.f32 %v2504, %v2515
        %v2548 = vmax.f32 %v2516, 0.0
        %v2549 = vmax.f32 %v2517, 0.0
        %v2550 = vmax.f32 %v2518, 0.0
        %v2551 = vmax.f32 %v2519, 0.0
        %v2552 = vmax.f32 %v2520, 0.0
        %v2553 = vmax.f32 %v2521, 0.0
        %v2554 = vmax.f32 %v2522, 0.0
        %v2555 = vmax.f32 %v2523, 0.0
        %v2556 = vmax.f32 %v2524, 0.0
        %v2557 = vmax.f32 %v2525, 0.0
        %v2558 = vmax.f32 %v2526, 0.0
        %v2559 = vmax.f32 %v2527, 0.0
        %v2560 = vmax.f32 %v2528, 0.0
        %v2561 = vmax.f32 %v2529, 0.0
        %v2562 = vmax.f32 %v2530, 0.0
        %v2563 = vmax.f32 %v2531, 0.0
        %v2564 = vmax.f32 %v2532, 0.0
        %v2565 = vmax.f32 %v2533, 0.0
        %v2566 = vmax.f32 %v2534, 0.0
        %v2567 = vmax.f32 %v2535, 0.0
        %v2568 = vmax.f32 %v2536, 0.0
        %v2569 = vmax.f32 %v2537, 0.0
        %v2570 = vmax.f32 %v2538, 0.0
        %v2571 = vmax.f32 %v2539, 0.0
        %v2572 = vmax.f32 %v2540, 0.0
        %v2573 = vmax.f32 %v2541, 0.0
        %v2574 = vmax.f32 %v2542, 0.0
        %v2575 = vmax.f32 %v2543, 0.0
        %v2576 = vmax.f32 %v2544, 0.0
        %v2577 = vmax.f32 %v2545, 0.0
        %v2578 = vmax.f32 %v2546, 0.0
        %v2579 = vmax.f32 %v2547, 0.0
        %vm2580 = vcmask 257024
        %2581 = vst.msk [vmem:[#allocation2] sm:$0xf] %vm2580, 0
        %2582 = vst.msk [vmem:[#allocation2 + $0x4] sm:$0xf] %vm2580, 0
        %vm2583 = vcmask 253952
        %2584 = vst.msk [vmem:[#allocation2 + $0x8] sm:$0x1] %vm2583, 0
        %2585 = vst.msk [vmem:[#allocation2 + $0xc] sm:$0xf] %vm2580, 0
        %2586 = vst.msk [vmem:[#allocation2 + $0x10] sm:$0xf] %vm2580, 0
        %2587 = vst.msk [vmem:[#allocation2 + $0x14] sm:$0x1] %vm2583, 0
        %2588 = vst.msk [vmem:[#allocation2 + $0x18] sm:$0xf] %vm2580, 0
        %2589 = vst.msk [vmem:[#allocation2 + $0x1c] sm:$0xf] %vm2580, 0
        %2590 = vst.msk [vmem:[#allocation2 + $0x20] sm:$0x1] %vm2583, 0
        %2591 = vst.msk [vmem:[#allocation2 + $0x24] sm:$0xf] %vm2580, 0
        %2592 = vst.msk [vmem:[#allocation2 + $0x28] sm:$0xf] %vm2580, 0
        %2593 = vst.msk [vmem:[#allocation2 + $0x2c] sm:$0x1] %vm2583, 0
        %2594 = vst.msk [vmem:[#allocation2 + $0x30] sm:$0xf] %vm2580, 0
        %2595 = vst.msk [vmem:[#allocation2 + $0x34] sm:$0xf] %vm2580, 0
        %2596 = vst.msk [vmem:[#allocation2 + $0x38] sm:$0x1] %vm2583, 0
        %2597 = vst.msk [vmem:[#allocation2 + $0x3c] sm:$0xf] %vm2580, 0
        %2598 = vst.msk [vmem:[#allocation2 + $0x40] sm:$0xf] %vm2580, 0
        %2599 = vst.msk [vmem:[#allocation2 + $0x44] sm:$0x1] %vm2583, 0
        %2600 = vst.msk [vmem:[#allocation2 + $0x48] sm:$0xf] %vm2580, 0
        %2601 = vst.msk [vmem:[#allocation2 + $0x4c] sm:$0xf] %vm2580, 0
        %2602 = vst.msk [vmem:[#allocation2 + $0x50] sm:$0x1] %vm2583, 0
        %2603 = vst.msk [vmem:[#allocation2 + $0x54] sm:$0xf] %vm2580, 0
        %2604 = vst.msk [vmem:[#allocation2 + $0x58] sm:$0xf] %vm2580, 0
        %2605 = vst.msk [vmem:[#allocation2 + $0x5c] sm:$0x1] %vm2583, 0
        %2606 = vst.msk [vmem:[#allocation2 + $0x60] sm:$0xf] %vm2580, 0
        %2607 = vst.msk [vmem:[#allocation2 + $0x64] sm:$0xf] %vm2580, 0
        %2608 = vst.msk [vmem:[#allocation2 + $0x68] sm:$0x1] %vm2583, 0
        %2609 = vst.msk [vmem:[#allocation2 + $0x6c] sm:$0xf] %vm2580, 0
        %2610 = vst.msk [vmem:[#allocation2 + $0x70] sm:$0xf] %vm2580, 0
        %2611 = vst.msk [vmem:[#allocation2 + $0x74] sm:$0x1] %vm2583, 0
        %2612 = vst.msk [vmem:[#allocation2 + $0x78] sm:$0xf] %vm2580, 0
        %2613 = vst.msk [vmem:[#allocation2 + $0x7c] sm:$0xf] %vm2580, 0
        %2614 = vst.msk [vmem:[#allocation2 + $0x80] sm:$0x1] %vm2583, 0
        %2615 = vst.msk [vmem:[#allocation2 + $0x84] sm:$0xf] %vm2580, 0
        %2616 = vst.msk [vmem:[#allocation2 + $0x88] sm:$0xf] %vm2580, 0
        %2617 = vst.msk [vmem:[#allocation2 + $0x8c] sm:$0x1] %vm2583, 0
        %2618 = vst.msk [vmem:[#allocation2 + $0x90] sm:$0xf] %vm2580, 0
        %2619 = vst.msk [vmem:[#allocation2 + $0x94] sm:$0xf] %vm2580, 0
        %2620 = vst.msk [vmem:[#allocation2 + $0x98] sm:$0x1] %vm2583, 0
        %2621 = vst.msk [vmem:[#allocation2 + $0x9c] sm:$0xf] %vm2580, 0
        %2622 = vst.msk [vmem:[#allocation2 + $0xa0] sm:$0xf] %vm2580, 0
        %2623 = vst.msk [vmem:[#allocation2 + $0xa4] sm:$0x1] %vm2583, 0
        %2624 = vst.msk [vmem:[#allocation2 + $0xa8] sm:$0xf] %vm2580, 0
        %2625 = vst.msk [vmem:[#allocation2 + $0xac] sm:$0xf] %vm2580, 0
        %2626 = vst.msk [vmem:[#allocation2 + $0xb0] sm:$0x1] %vm2583, 0
        %2627 = vst.msk [vmem:[#allocation2 + $0xb4] sm:$0xf] %vm2580, 0
        %2628 = vst.msk [vmem:[#allocation2 + $0xb8] sm:$0xf] %vm2580, 0
        %2629 = vst.msk [vmem:[#allocation2 + $0xbc] sm:$0x1] %vm2583, 0
        %2630 = vst.msk [vmem:[#allocation2 + $0xc0] sm:$0xf] %vm2580, 0
        %2631 = vst.msk [vmem:[#allocation2 + $0xc4] sm:$0xf] %vm2580, 0
        %2632 = vst.msk [vmem:[#allocation2 + $0xc8] sm:$0x1] %vm2583, 0
        %2633 = vst.msk [vmem:[#allocation2 + $0xcc] sm:$0xf] %vm2580, 0
        %2634 = vst.msk [vmem:[#allocation2 + $0xd0] sm:$0xf] %vm2580, 0
        %2635 = vst.msk [vmem:[#allocation2 + $0xd4] sm:$0x1] %vm2583, 0
        %v2636 = vpack.c.bf16 %v2548, %v2548
        %v2637 = vpack.c.bf16 %v2549, %v2549
        %v2638 = vpack.c.bf16 %v2550, %v2550
        %v2639 = vpack.c.bf16 %v2551, %v2551
        %v2640 = vpack.c.bf16 %v2552, %v2552
        %v2641 = vpack.c.bf16 %v2553, %v2553
        %v2642 = vpack.c.bf16 %v2554, %v2554
        %v2643 = vpack.c.bf16 %v2555, %v2555
        %v2644 = vpack.c.bf16 %v2556, %v2556
        %v2645 = vpack.c.bf16 %v2557, %v2557
        %v2646 = vpack.c.bf16 %v2558, %v2558
        %v2647 = vpack.c.bf16 %v2559, %v2559
        %v2648 = vpack.c.bf16 %v2560, %v2560
        %v2649 = vpack.c.bf16 %v2561, %v2561
        %v2650 = vpack.c.bf16 %v2562, %v2562
        %v2651 = vpack.c.bf16 %v2563, %v2563
        %v2652 = vpack.c.bf16 %v2564, %v2564
        %v2653 = vpack.c.bf16 %v2565, %v2565
        %v2654 = vpack.c.bf16 %v2566, %v2566
        %v2655 = vpack.c.bf16 %v2567, %v2567
        %v2656 = vpack.c.bf16 %v2568, %v2568
        %v2657 = vpack.c.bf16 %v2569, %v2569
        %v2658 = vpack.c.bf16 %v2570, %v2570
        %v2659 = vpack.c.bf16 %v2571, %v2571
        %v2660 = vpack.c.bf16 %v2572, %v2572
        %v2661 = vpack.c.bf16 %v2573, %v2573
        %v2662 = vpack.c.bf16 %v2574, %v2574
        %v2663 = vpack.c.bf16 %v2575, %v2575
        %v2664 = vpack.c.bf16 %v2576, %v2576
        %v2665 = vpack.c.bf16 %v2577, %v2577
        %v2666 = vpack.c.bf16 %v2578, %v2578
        %v2667 = vpack.c.bf16 %v2579, %v2579
        %vm2668 = vsmask.f32 256
        %vm2669 = vsmask.f32 4368
        %vm2670 = vmor %vm2668, %vm2669
        %v2672 = vshrl.u32 %v2636, 16
        %v2674 = vrot.slane %v2672, 7
        %v2675 = vshll.u32 %v2636, 16
        %v2677 = vor.u32 %v2674, %v2675
        %v2678 = vrot.slane %v2674, 4
        %v2680 = vshrl.u32 %v2637, 16
        %v2682 = vrot.slane %v2680, 7
        %v2683 = vshll.u32 %v2637, 16
        %v2685 = vor.u32 %v2682, %v2683
        %v2686 = vsel %vm2670, %v2678, %v2685
        %v2687 = vrot.slane %v2682, 4
        %v2689 = vshrl.u32 %v2638, 16
        %v2691 = vrot.slane %v2689, 7
        %v2692 = vshll.u32 %v2638, 16
        %v2694 = vor.u32 %v2691, %v2692
        %v2695 = vrot.slane %v2691, 4
        %v2697 = vshrl.u32 %v2639, 16
        %v2699 = vrot.slane %v2697, 7
        %v2700 = vshll.u32 %v2639, 16
        %v2702 = vor.u32 %v2699, %v2700
        %v2703 = vsel %vm2670, %v2695, %v2702
        %v2704 = vrot.slane %v2699, 4
        %v2706 = vshrl.u32 %v2640, 16
        %v2708 = vrot.slane %v2706, 7
        %v2709 = vshll.u32 %v2640, 16
        %v2711 = vor.u32 %v2708, %v2709
        %v2712 = vrot.slane %v2708, 4
        %v2714 = vshrl.u32 %v2641, 16
        %v2716 = vrot.slane %v2714, 7
        %v2717 = vshll.u32 %v2641, 16
        %v2719 = vor.u32 %v2716, %v2717
        %v2720 = vsel %vm2670, %v2712, %v2719
        %v2721 = vrot.slane %v2716, 4
        %v2723 = vshrl.u32 %v2642, 16
        %v2725 = vrot.slane %v2723, 7
        %v2726 = vshll.u32 %v2642, 16
        %v2728 = vor.u32 %v2725, %v2726
        %v2729 = vrot.slane %v2725, 4
        %v2731 = vshrl.u32 %v2643, 16
        %v2733 = vrot.slane %v2731, 7
        %v2734 = vshll.u32 %v2643, 16
        %v2736 = vor.u32 %v2733, %v2734
        %v2737 = vsel %vm2670, %v2729, %v2736
        %v2738 = vrot.slane %v2733, 4
        %v2740 = vshrl.u32 %v2644, 16
        %v2742 = vrot.slane %v2740, 7
        %v2743 = vshll.u32 %v2644, 16
        %v2745 = vor.u32 %v2742, %v2743
        %v2746 = vrot.slane %v2742, 4
        %v2748 = vshrl.u32 %v2645, 16
        %v2750 = vrot.slane %v2748, 7
        %v2751 = vshll.u32 %v2645, 16
        %v2753 = vor.u32 %v2750, %v2751
        %v2754 = vsel %vm2670, %v2746, %v2753
        %v2755 = vrot.slane %v2750, 4
        %v2757 = vshrl.u32 %v2646, 16
        %v2759 = vrot.slane %v2757, 7
        %v2760 = vshll.u32 %v2646, 16
        %v2762 = vor.u32 %v2759, %v2760
        %v2763 = vrot.slane %v2759, 4
        %v2765 = vshrl.u32 %v2647, 16
        %v2767 = vrot.slane %v2765, 7
        %v2768 = vshll.u32 %v2647, 16
        %v2770 = vor.u32 %v2767, %v2768
        %v2771 = vsel %vm2670, %v2763, %v2770
        %v2772 = vrot.slane %v2767, 4
        %v2774 = vshrl.u32 %v2648, 16
        %v2776 = vrot.slane %v2774, 7
        %v2777 = vshll.u32 %v2648, 16
        %v2779 = vor.u32 %v2776, %v2777
        %v2780 = vrot.slane %v2776, 4
        %v2782 = vshrl.u32 %v2649, 16
        %v2784 = vrot.slane %v2782, 7
        %v2785 = vshll.u32 %v2649, 16
        %v2787 = vor.u32 %v2784, %v2785
        %v2788 = vsel %vm2670, %v2780, %v2787
        %v2789 = vrot.slane %v2784, 4
        %v2791 = vshrl.u32 %v2650, 16
        %v2793 = vrot.slane %v2791, 7
        %v2794 = vshll.u32 %v2650, 16
        %v2796 = vor.u32 %v2793, %v2794
        %v2797 = vrot.slane %v2793, 4
        %v2799 = vshrl.u32 %v2651, 16
        %v2801 = vrot.slane %v2799, 7
        %v2802 = vshll.u32 %v2651, 16
        %v2804 = vor.u32 %v2801, %v2802
        %v2805 = vsel %vm2670, %v2797, %v2804
        %v2806 = vrot.slane %v2801, 4
        %v2808 = vshrl.u32 %v2652, 16
        %v2810 = vrot.slane %v2808, 7
        %v2811 = vshll.u32 %v2652, 16
        %v2813 = vor.u32 %v2810, %v2811
        %v2814 = vrot.slane %v2810, 4
        %v2816 = vshrl.u32 %v2653, 16
        %v2818 = vrot.slane %v2816, 7
        %v2819 = vshll.u32 %v2653, 16
        %v2821 = vor.u32 %v2818, %v2819
        %v2822 = vsel %vm2670, %v2814, %v2821
        %v2823 = vrot.slane %v2818, 4
        %v2825 = vshrl.u32 %v2654, 16
        %v2827 = vrot.slane %v2825, 7
        %v2828 = vshll.u32 %v2654, 16
        %v2830 = vor.u32 %v2827, %v2828
        %v2831 = vrot.slane %v2827, 4
        %v2833 = vshrl.u32 %v2655, 16
        %v2835 = vrot.slane %v2833, 7
        %v2836 = vshll.u32 %v2655, 16
        %v2838 = vor.u32 %v2835, %v2836
        %v2839 = vsel %vm2670, %v2831, %v2838
        %v2840 = vrot.slane %v2835, 4
        %v2842 = vshrl.u32 %v2656, 16
        %v2844 = vrot.slane %v2842, 7
        %v2845 = vshll.u32 %v2656, 16
        %v2847 = vor.u32 %v2844, %v2845
        %v2848 = vrot.slane %v2844, 4
        %v2850 = vshrl.u32 %v2657, 16
        %v2852 = vrot.slane %v2850, 7
        %v2853 = vshll.u32 %v2657, 16
        %v2855 = vor.u32 %v2852, %v2853
        %v2856 = vsel %vm2670, %v2848, %v2855
        %v2857 = vrot.slane %v2852, 4
        %v2859 = vshrl.u32 %v2658, 16
        %v2861 = vrot.slane %v2859, 7
        %v2862 = vshll.u32 %v2658, 16
        %v2864 = vor.u32 %v2861, %v2862
        %v2865 = vrot.slane %v2861, 4
        %v2867 = vshrl.u32 %v2659, 16
        %v2869 = vrot.slane %v2867, 7
        %v2870 = vshll.u32 %v2659, 16
        %v2872 = vor.u32 %v2869, %v2870
        %v2873 = vsel %vm2670, %v2865, %v2872
        %v2874 = vrot.slane %v2869, 4
        %v2876 = vshrl.u32 %v2660, 16
        %v2878 = vrot.slane %v2876, 7
        %v2879 = vshll.u32 %v2660, 16
        %v2881 = vor.u32 %v2878, %v2879
        %v2882 = vrot.slane %v2878, 4
        %v2884 = vshrl.u32 %v2661, 16
        %v2886 = vrot.slane %v2884, 7
        %v2887 = vshll.u32 %v2661, 16
        %v2889 = vor.u32 %v2886, %v2887
        %v2890 = vsel %vm2670, %v2882, %v2889
        %v2891 = vrot.slane %v2886, 4
        %v2893 = vshrl.u32 %v2662, 16
        %v2895 = vrot.slane %v2893, 7
        %v2896 = vshll.u32 %v2662, 16
        %v2898 = vor.u32 %v2895, %v2896
        %v2899 = vrot.slane %v2895, 4
        %v2901 = vshrl.u32 %v2663, 16
        %v2903 = vrot.slane %v2901, 7
        %v2904 = vshll.u32 %v2663, 16
        %v2906 = vor.u32 %v2903, %v2904
        %v2907 = vsel %vm2670, %v2899, %v2906
        %v2908 = vrot.slane %v2903, 4
        %v2910 = vshrl.u32 %v2664, 16
        %v2912 = vrot.slane %v2910, 7
        %v2913 = vshll.u32 %v2664, 16
        %v2915 = vor.u32 %v2912, %v2913
        %v2916 = vrot.slane %v2912, 4
        %v2918 = vshrl.u32 %v2665, 16
        %v2920 = vrot.slane %v2918, 7
        %v2921 = vshll.u32 %v2665, 16
        %v2923 = vor.u32 %v2920, %v2921
        %v2924 = vsel %vm2670, %v2916, %v2923
        %v2925 = vrot.slane %v2920, 4
        %v2927 = vshrl.u32 %v2666, 16
        %v2929 = vrot.slane %v2927, 7
        %v2930 = vshll.u32 %v2666, 16
        %v2932 = vor.u32 %v2929, %v2930
        %v2933 = vrot.slane %v2929, 4
        %v2935 = vshrl.u32 %v2667, 16
        %v2937 = vrot.slane %v2935, 7
        %v2938 = vshll.u32 %v2667, 16
        %v2940 = vor.u32 %v2937, %v2938
        %v2941 = vsel %vm2670, %v2933, %v2940
        %v2942 = vrot.slane %v2937, 4
        %s2991 = scalar_lea.vmem [#allocation2], 12
        %vm2992 = vcmask 257024
        %vm2993 = vsmask.f32 7938
        %vm2994 = vmand %vm2992, %vm2993
        %v2995 = vld [vmem:[%s2991] sm:$0xf]
        %v2996 = vsel %vm2994, %v2677, %v2995
        %2997 = vst [vmem:[%s2991] sm:$0xf] %v2996
        %2998 = vst.msk [vmem:[%s2991 + $0x4] sm:$0xf] %vm2580, %v2686
        %vm2999 = vcmask 253952
        %vm3000 = vmand %vm2999, %vm2668
        %v3001 = vld [vmem:[%s2991 + $0x8] sm:$0x1]
        %v3002 = vsel %vm3000, %v2687, %v3001
        %3003 = vst [vmem:[%s2991 + $0x8] sm:$0x1] %v3002
        %v3004 = vld [vmem:[%s2991 + $0xc] sm:$0xf]
        %v3005 = vsel %vm2994, %v2694, %v3004
        %3006 = vst [vmem:[%s2991 + $0xc] sm:$0xf] %v3005
        %3007 = vst.msk [vmem:[%s2991 + $0x10] sm:$0xf] %vm2580, %v2703
        %v3008 = vld [vmem:[%s2991 + $0x14] sm:$0x1]
        %v3009 = vsel %vm3000, %v2704, %v3008
        %3010 = vst [vmem:[%s2991 + $0x14] sm:$0x1] %v3009
        %v3011 = vld [vmem:[%s2991 + $0x18] sm:$0xf]
        %v3012 = vsel %vm2994, %v2711, %v3011
        %3013 = vst [vmem:[%s2991 + $0x18] sm:$0xf] %v3012
        %3014 = vst.msk [vmem:[%s2991 + $0x1c] sm:$0xf] %vm2580, %v2720
        %v3015 = vld [vmem:[%s2991 + $0x20] sm:$0x1]
        %v3016 = vsel %vm3000, %v2721, %v3015
        %3017 = vst [vmem:[%s2991 + $0x20] sm:$0x1] %v3016
        %v3018 = vld [vmem:[%s2991 + $0x24] sm:$0xf]
        %v3019 = vsel %vm2994, %v2728, %v3018
        %3020 = vst [vmem:[%s2991 + $0x24] sm:$0xf] %v3019
        %3021 = vst.msk [vmem:[%s2991 + $0x28] sm:$0xf] %vm2580, %v2737
        %v3022 = vld [vmem:[%s2991 + $0x2c] sm:$0x1]
        %v3023 = vsel %vm3000, %v2738, %v3022
        %3024 = vst [vmem:[%s2991 + $0x2c] sm:$0x1] %v3023
        %v3025 = vld [vmem:[%s2991 + $0x30] sm:$0xf]
        %v3026 = vsel %vm2994, %v2745, %v3025
        %3027 = vst [vmem:[%s2991 + $0x30] sm:$0xf] %v3026
        %3028 = vst.msk [vmem:[%s2991 + $0x34] sm:$0xf] %vm2580, %v2754
        %v3029 = vld [vmem:[%s2991 + $0x38] sm:$0x1]
        %v3030 = vsel %vm3000, %v2755, %v3029
        %3031 = vst [vmem:[%s2991 + $0x38] sm:$0x1] %v3030
        %v3032 = vld [vmem:[%s2991 + $0x3c] sm:$0xf]
        %v3033 = vsel %vm2994, %v2762, %v3032
        %3034 = vst [vmem:[%s2991 + $0x3c] sm:$0xf] %v3033
        %3035 = vst.msk [vmem:[%s2991 + $0x40] sm:$0xf] %vm2580, %v2771
        %v3036 = vld [vmem:[%s2991 + $0x44] sm:$0x1]
        %v3037 = vsel %vm3000, %v2772, %v3036
        %3038 = vst [vmem:[%s2991 + $0x44] sm:$0x1] %v3037
        %v3039 = vld [vmem:[%s2991 + $0x48] sm:$0xf]
        %v3040 = vsel %vm2994, %v2779, %v3039
        %3041 = vst [vmem:[%s2991 + $0x48] sm:$0xf] %v3040
        %3042 = vst.msk [vmem:[%s2991 + $0x4c] sm:$0xf] %vm2580, %v2788
        %v3043 = vld [vmem:[%s2991 + $0x50] sm:$0x1]
        %v3044 = vsel %vm3000, %v2789, %v3043
        %3045 = vst [vmem:[%s2991 + $0x50] sm:$0x1] %v3044
        %v3046 = vld [vmem:[%s2991 + $0x54] sm:$0xf]
        %v3047 = vsel %vm2994, %v2796, %v3046
        %3048 = vst [vmem:[%s2991 + $0x54] sm:$0xf] %v3047
        %3049 = vst.msk [vmem:[%s2991 + $0x58] sm:$0xf] %vm2580, %v2805
        %v3050 = vld [vmem:[%s2991 + $0x5c] sm:$0x1]
        %v3051 = vsel %vm3000, %v2806, %v3050
        %3052 = vst [vmem:[%s2991 + $0x5c] sm:$0x1] %v3051
        %v3053 = vld [vmem:[%s2991 + $0x60] sm:$0xf]
        %v3054 = vsel %vm2994, %v2813, %v3053
        %3055 = vst [vmem:[%s2991 + $0x60] sm:$0xf] %v3054
        %3056 = vst.msk [vmem:[%s2991 + $0x64] sm:$0xf] %vm2580, %v2822
        %v3057 = vld [vmem:[%s2991 + $0x68] sm:$0x1]
        %v3058 = vsel %vm3000, %v2823, %v3057
        %3059 = vst [vmem:[%s2991 + $0x68] sm:$0x1] %v3058
        %v3060 = vld [vmem:[%s2991 + $0x6c] sm:$0xf]
        %v3061 = vsel %vm2994, %v2830, %v3060
        %3062 = vst [vmem:[%s2991 + $0x6c] sm:$0xf] %v3061
        %3063 = vst.msk [vmem:[%s2991 + $0x70] sm:$0xf] %vm2580, %v2839
        %v3064 = vld [vmem:[%s2991 + $0x74] sm:$0x1]
        %v3065 = vsel %vm3000, %v2840, %v3064
        %3066 = vst [vmem:[%s2991 + $0x74] sm:$0x1] %v3065
        %v3067 = vld [vmem:[%s2991 + $0x78] sm:$0xf]
        %v3068 = vsel %vm2994, %v2847, %v3067
        %3069 = vst [vmem:[%s2991 + $0x78] sm:$0xf] %v3068
        %3070 = vst.msk [vmem:[%s2991 + $0x7c] sm:$0xf] %vm2580, %v2856
        %v3071 = vld [vmem:[%s2991 + $0x80] sm:$0x1]
        %v3072 = vsel %vm3000, %v2857, %v3071
        %3073 = vst [vmem:[%s2991 + $0x80] sm:$0x1] %v3072
        %v3074 = vld [vmem:[%s2991 + $0x84] sm:$0xf]
        %v3075 = vsel %vm2994, %v2864, %v3074
        %3076 = vst [vmem:[%s2991 + $0x84] sm:$0xf] %v3075
        %3077 = vst.msk [vmem:[%s2991 + $0x88] sm:$0xf] %vm2580, %v2873
        %v3078 = vld [vmem:[%s2991 + $0x8c] sm:$0x1]
        %v3079 = vsel %vm3000, %v2874, %v3078
        %3080 = vst [vmem:[%s2991 + $0x8c] sm:$0x1] %v3079
        %v3081 = vld [vmem:[%s2991 + $0x90] sm:$0xf]
        %v3082 = vsel %vm2994, %v2881, %v3081
        %3083 = vst [vmem:[%s2991 + $0x90] sm:$0xf] %v3082
        %3084 = vst.msk [vmem:[%s2991 + $0x94] sm:$0xf] %vm2580, %v2890
        %v3085 = vld [vmem:[%s2991 + $0x98] sm:$0x1]
        %v3086 = vsel %vm3000, %v2891, %v3085
        %3087 = vst [vmem:[%s2991 + $0x98] sm:$0x1] %v3086
        %v3088 = vld [vmem:[%s2991 + $0x9c] sm:$0xf]
        %v3089 = vsel %vm2994, %v2898, %v3088
        %3090 = vst [vmem:[%s2991 + $0x9c] sm:$0xf] %v3089
        %3091 = vst.msk [vmem:[%s2991 + $0xa0] sm:$0xf] %vm2580, %v2907
        %v3092 = vld [vmem:[%s2991 + $0xa4] sm:$0x1]
        %v3093 = vsel %vm3000, %v2908, %v3092
        %3094 = vst [vmem:[%s2991 + $0xa4] sm:$0x1] %v3093
        %v3095 = vld [vmem:[%s2991 + $0xa8] sm:$0xf]
        %v3096 = vsel %vm2994, %v2915, %v3095
        %3097 = vst [vmem:[%s2991 + $0xa8] sm:$0xf] %v3096
        %3098 = vst.msk [vmem:[%s2991 + $0xac] sm:$0xf] %vm2580, %v2924
        %v3099 = vld [vmem:[%s2991 + $0xb0] sm:$0x1]
        %v3100 = vsel %vm3000, %v2925, %v3099
        %3101 = vst [vmem:[%s2991 + $0xb0] sm:$0x1] %v3100
        %v3102 = vld [vmem:[%s2991 + $0xb4] sm:$0xf]
        %v3103 = vsel %vm2994, %v2932, %v3102
        %3104 = vst [vmem:[%s2991 + $0xb4] sm:$0xf] %v3103
        %3105 = vst.msk [vmem:[%s2991 + $0xb8] sm:$0xf] %vm2580, %v2941
        %v3106 = vld [vmem:[%s2991 + $0xbc] sm:$0x1]
        %v3107 = vsel %vm3000, %v2942, %v3106
        %3108 = vst [vmem:[%s2991 + $0xbc] sm:$0x1] %v3107
        %v3109 = vld [vmem:[#allocation2] sm:$0xf]
        %v3110 = vld [vmem:[#allocation2 + $0x4] sm:$0xf]
        %v3111 = vld [vmem:[#allocation2 + $0x8] sm:$0x1]
        %v3112 = vld [vmem:[#allocation2 + $0xc] sm:$0xf]
        %v3113 = vld [vmem:[#allocation2 + $0x10] sm:$0xf]
        %v3114 = vld [vmem:[#allocation2 + $0x14] sm:$0x1]
        %v3115 = vld [vmem:[#allocation2 + $0x18] sm:$0xf]
        %v3116 = vld [vmem:[#allocation2 + $0x1c] sm:$0xf]
        %v3117 = vld [vmem:[#allocation2 + $0x20] sm:$0x1]
        %v3118 = vld [vmem:[#allocation2 + $0x24] sm:$0xf]
        %v3119 = vld [vmem:[#allocation2 + $0x28] sm:$0xf]
        %v3120 = vld [vmem:[#allocation2 + $0x2c] sm:$0x1]
        %v3121 = vld [vmem:[#allocation2 + $0x30] sm:$0xf]
        %v3122 = vld [vmem:[#allocation2 + $0x34] sm:$0xf]
        %v3123 = vld [vmem:[#allocation2 + $0x38] sm:$0x1]
        %v3124 = vld [vmem:[#allocation2 + $0x3c] sm:$0xf]
        %v3125 = vld [vmem:[#allocation2 + $0x40] sm:$0xf]
        %v3126 = vld [vmem:[#allocation2 + $0x44] sm:$0x1]
        %v3127 = vld [vmem:[#allocation2 + $0x48] sm:$0xf]
        %v3128 = vld [vmem:[#allocation2 + $0x4c] sm:$0xf]
        %v3129 = vld [vmem:[#allocation2 + $0x50] sm:$0x1]
        %v3130 = vld [vmem:[#allocation2 + $0x54] sm:$0xf]
        %v3131 = vld [vmem:[#allocation2 + $0x58] sm:$0xf]
        %v3132 = vld [vmem:[#allocation2 + $0x5c] sm:$0x1]
        %v3133 = vld [vmem:[#allocation2 + $0x60] sm:$0xf]
        %v3134 = vld [vmem:[#allocation2 + $0x64] sm:$0xf]
        %v3135 = vld [vmem:[#allocation2 + $0x68] sm:$0x1]
        %v3136 = vld [vmem:[#allocation2 + $0x6c] sm:$0xf]
        %v3137 = vld [vmem:[#allocation2 + $0x70] sm:$0xf]
        %v3138 = vld [vmem:[#allocation2 + $0x74] sm:$0x1]
        %v3139 = vld [vmem:[#allocation2 + $0x78] sm:$0xf]
        %v3140 = vld [vmem:[#allocation2 + $0x7c] sm:$0xf]
        %v3141 = vld [vmem:[#allocation2 + $0x80] sm:$0x1]
        %v3142 = vld [vmem:[#allocation2 + $0x84] sm:$0xf]
        %v3143 = vld [vmem:[#allocation2 + $0x88] sm:$0xf]
        %v3144 = vld [vmem:[#allocation2 + $0x8c] sm:$0x1]
        %v3145 = vld [vmem:[#allocation2 + $0x90] sm:$0xf]
        %v3146 = vld [vmem:[#allocation2 + $0x94] sm:$0xf]
        %v3147 = vld [vmem:[#allocation2 + $0x98] sm:$0x1]
        %v3148 = vld [vmem:[#allocation2 + $0x9c] sm:$0xf]
        %v3149 = vld [vmem:[#allocation2 + $0xa0] sm:$0xf]
        %v3150 = vld [vmem:[#allocation2 + $0xa4] sm:$0x1]
        %v3151 = vld [vmem:[#allocation2 + $0xa8] sm:$0xf]
        %v3152 = vld [vmem:[#allocation2 + $0xac] sm:$0xf]
        %v3153 = vld [vmem:[#allocation2 + $0xb0] sm:$0x1]
        %v3154 = vld [vmem:[#allocation2 + $0xb4] sm:$0xf]
        %v3155 = vld [vmem:[#allocation2 + $0xb8] sm:$0xf]
        %v3156 = vld [vmem:[#allocation2 + $0xbc] sm:$0x1]
        %v3157 = vld [vmem:[#allocation2 + $0xc0] sm:$0xf]
        %v3158 = vld [vmem:[#allocation2 + $0xc4] sm:$0xf]
        %v3159 = vld [vmem:[#allocation2 + $0xc8] sm:$0x1]
        %v3160 = vld [vmem:[#allocation2 + $0xcc] sm:$0xf]
        %v3161 = vld [vmem:[#allocation2 + $0xd0] sm:$0xf]
        %v3162 = vld [vmem:[#allocation2 + $0xd4] sm:$0x1]
        %v3163 = vld [vmem:[%s2] sm:$0xf]
        %v3164 = vld [vmem:[%s2 + $0x4] sm:$0xf]
        %v3165 = vld [vmem:[%s2 + $0x8] sm:$0xf]
        %v3166 = vld [vmem:[%s2 + $0xc] sm:$0xf]
        %v3168 = vshrl.u32 %v3109, 16
        %v3170 = vrot.slane %v3168, 4
        %v3171 = vshll.u32 %v3109, 16
        %v3173 = vrot.slane %v3171, 5
        %v3174 = vor.u32 %v3170, %v3173
        %v3175 = vrot.slane %v3174, 4
        %v3177 = vshll.u32 %v3110, 16
        %v3179 = vrot.slane %v3177, 5
        %v3180 = vsel %vm281, %v3175, %v3179
        %v3181 = vshrl.u32 %v3110, 16
        %v3183 = vrot.slane %v3181, 4
        %v3184 = vor.u32 %v3183, %v3179
        %v3185 = vrot.slane %v3184, 4
        %v3187 = vshll.u32 %v3111, 16
        %v3189 = vrot.slane %v3187, 5
        %v3190 = vsel %vm281, %v3185, %v3189
        %v3192 = vshrl.u32 %v3112, 16
        %v3194 = vrot.slane %v3192, 4
        %v3195 = vshll.u32 %v3112, 16
        %v3197 = vrot.slane %v3195, 5
        %v3198 = vor.u32 %v3194, %v3197
        %v3199 = vrot.slane %v3198, 4
        %v3201 = vshll.u32 %v3113, 16
        %v3203 = vrot.slane %v3201, 5
        %v3204 = vsel %vm281, %v3199, %v3203
        %v3205 = vshrl.u32 %v3113, 16
        %v3207 = vrot.slane %v3205, 4
        %v3208 = vor.u32 %v3207, %v3203
        %v3209 = vrot.slane %v3208, 4
        %v3211 = vshll.u32 %v3114, 16
        %v3213 = vrot.slane %v3211, 5
        %v3214 = vsel %vm281, %v3209, %v3213
        %v3216 = vshrl.u32 %v3115, 16
        %v3218 = vrot.slane %v3216, 4
        %v3219 = vshll.u32 %v3115, 16
        %v3221 = vrot.slane %v3219, 5
        %v3222 = vor.u32 %v3218, %v3221
        %v3223 = vrot.slane %v3222, 4
        %v3225 = vshll.u32 %v3116, 16
        %v3227 = vrot.slane %v3225, 5
        %v3228 = vsel %vm281, %v3223, %v3227
        %v3229 = vshrl.u32 %v3116, 16
        %v3231 = vrot.slane %v3229, 4
        %v3232 = vor.u32 %v3231, %v3227
        %v3233 = vrot.slane %v3232, 4
        %v3235 = vshll.u32 %v3117, 16
        %v3237 = vrot.slane %v3235, 5
        %v3238 = vsel %vm281, %v3233, %v3237
        %v3240 = vshrl.u32 %v3118, 16
        %v3242 = vrot.slane %v3240, 4
        %v3243 = vshll.u32 %v3118, 16
        %v3245 = vrot.slane %v3243, 5
        %v3246 = vor.u32 %v3242, %v3245
        %v3247 = vrot.slane %v3246, 4
        %v3249 = vshll.u32 %v3119, 16
        %v3251 = vrot.slane %v3249, 5
        %v3252 = vsel %vm281, %v3247, %v3251
        %v3253 = vshrl.u32 %v3119, 16
        %v3255 = vrot.slane %v3253, 4
        %v3256 = vor.u32 %v3255, %v3251
        %v3257 = vrot.slane %v3256, 4
        %v3259 = vshll.u32 %v3120, 16
        %v3261 = vrot.slane %v3259, 5
        %v3262 = vsel %vm281, %v3257, %v3261
        %v3264 = vshrl.u32 %v3121, 16
        %v3266 = vrot.slane %v3264, 4
        %v3267 = vshll.u32 %v3121, 16
        %v3269 = vrot.slane %v3267, 5
        %v3270 = vor.u32 %v3266, %v3269
        %v3271 = vrot.slane %v3270, 4
        %v3273 = vshll.u32 %v3122, 16
        %v3275 = vrot.slane %v3273, 5
        %v3276 = vsel %vm281, %v3271, %v3275
        %v3277 = vshrl.u32 %v3122, 16
        %v3279 = vrot.slane %v3277, 4
        %v3280 = vor.u32 %v3279, %v3275
        %v3281 = vrot.slane %v3280, 4
        %v3283 = vshll.u32 %v3123, 16
        %v3285 = vrot.slane %v3283, 5
        %v3286 = vsel %vm281, %v3281, %v3285
        %v3288 = vshrl.u32 %v3124, 16
        %v3290 = vrot.slane %v3288, 4
        %v3291 = vshll.u32 %v3124, 16
        %v3293 = vrot.slane %v3291, 5
        %v3294 = vor.u32 %v3290, %v3293
        %v3295 = vrot.slane %v3294, 4
        %v3297 = vshll.u32 %v3125, 16
        %v3299 = vrot.slane %v3297, 5
        %v3300 = vsel %vm281, %v3295, %v3299
        %v3301 = vshrl.u32 %v3125, 16
        %v3303 = vrot.slane %v3301, 4
        %v3304 = vor.u32 %v3303, %v3299
        %v3305 = vrot.slane %v3304, 4
        %v3307 = vshll.u32 %v3126, 16
        %v3309 = vrot.slane %v3307, 5
        %v3310 = vsel %vm281, %v3305, %v3309
        %v3312 = vshrl.u32 %v3127, 16
        %v3314 = vrot.slane %v3312, 4
        %v3315 = vshll.u32 %v3127, 16
        %v3317 = vrot.slane %v3315, 5
        %v3318 = vor.u32 %v3314, %v3317
        %v3319 = vrot.slane %v3318, 4
        %v3321 = vshll.u32 %v3128, 16
        %v3323 = vrot.slane %v3321, 5
        %v3324 = vsel %vm281, %v3319, %v3323
        %v3325 = vshrl.u32 %v3128, 16
        %v3327 = vrot.slane %v3325, 4
        %v3328 = vor.u32 %v3327, %v3323
        %v3329 = vrot.slane %v3328, 4
        %v3331 = vshll.u32 %v3129, 16
        %v3333 = vrot.slane %v3331, 5
        %v3334 = vsel %vm281, %v3329, %v3333
        %v3336 = vshrl.u32 %v3130, 16
        %v3338 = vrot.slane %v3336, 4
        %v3339 = vshll.u32 %v3130, 16
        %v3341 = vrot.slane %v3339, 5
        %v3342 = vor.u32 %v3338, %v3341
        %v3343 = vrot.slane %v3342, 4
        %v3345 = vshll.u32 %v3131, 16
        %v3347 = vrot.slane %v3345, 5
        %v3348 = vsel %vm281, %v3343, %v3347
        %v3349 = vshrl.u32 %v3131, 16
        %v3351 = vrot.slane %v3349, 4
        %v3352 = vor.u32 %v3351, %v3347
        %v3353 = vrot.slane %v3352, 4
        %v3355 = vshll.u32 %v3132, 16
        %v3357 = vrot.slane %v3355, 5
        %v3358 = vsel %vm281, %v3353, %v3357
        %v3360 = vshrl.u32 %v3133, 16
        %v3362 = vrot.slane %v3360, 4
        %v3363 = vshll.u32 %v3133, 16
        %v3365 = vrot.slane %v3363, 5
        %v3366 = vor.u32 %v3362, %v3365
        %v3367 = vrot.slane %v3366, 4
        %v3369 = vshll.u32 %v3134, 16
        %v3371 = vrot.slane %v3369, 5
        %v3372 = vsel %vm281, %v3367, %v3371
        %v3373 = vshrl.u32 %v3134, 16
        %v3375 = vrot.slane %v3373, 4
        %v3376 = vor.u32 %v3375, %v3371
        %v3377 = vrot.slane %v3376, 4
        %v3379 = vshll.u32 %v3135, 16
        %v3381 = vrot.slane %v3379, 5
        %v3382 = vsel %vm281, %v3377, %v3381
        %v3384 = vshrl.u32 %v3136, 16
        %v3386 = vrot.slane %v3384, 4
        %v3387 = vshll.u32 %v3136, 16
        %v3389 = vrot.slane %v3387, 5
        %v3390 = vor.u32 %v3386, %v3389
        %v3391 = vrot.slane %v3390, 4
        %v3393 = vshll.u32 %v3137, 16
        %v3395 = vrot.slane %v3393, 5
        %v3396 = vsel %vm281, %v3391, %v3395
        %v3397 = vshrl.u32 %v3137, 16
        %v3399 = vrot.slane %v3397, 4
        %v3400 = vor.u32 %v3399, %v3395
        %v3401 = vrot.slane %v3400, 4
        %v3403 = vshll.u32 %v3138, 16
        %v3405 = vrot.slane %v3403, 5
        %v3406 = vsel %vm281, %v3401, %v3405
        %v3408 = vshrl.u32 %v3139, 16
        %v3410 = vrot.slane %v3408, 4
        %v3411 = vshll.u32 %v3139, 16
        %v3413 = vrot.slane %v3411, 5
        %v3414 = vor.u32 %v3410, %v3413
        %v3415 = vrot.slane %v3414, 4
        %v3417 = vshll.u32 %v3140, 16
        %v3419 = vrot.slane %v3417, 5
        %v3420 = vsel %vm281, %v3415, %v3419
        %v3421 = vshrl.u32 %v3140, 16
        %v3423 = vrot.slane %v3421, 4
        %v3424 = vor.u32 %v3423, %v3419
        %v3425 = vrot.slane %v3424, 4
        %v3427 = vshll.u32 %v3141, 16
        %v3429 = vrot.slane %v3427, 5
        %v3430 = vsel %vm281, %v3425, %v3429
        %v3432 = vshrl.u32 %v3142, 16
        %v3434 = vrot.slane %v3432, 4
        %v3435 = vshll.u32 %v3142, 16
        %v3437 = vrot.slane %v3435, 5
        %v3438 = vor.u32 %v3434, %v3437
        %v3439 = vrot.slane %v3438, 4
        %v3441 = vshll.u32 %v3143, 16
        %v3443 = vrot.slane %v3441, 5
        %v3444 = vsel %vm281, %v3439, %v3443
        %v3445 = vshrl.u32 %v3143, 16
        %v3447 = vrot.slane %v3445, 4
        %v3448 = vor.u32 %v3447, %v3443
        %v3449 = vrot.slane %v3448, 4
        %v3451 = vshll.u32 %v3144, 16
        %v3453 = vrot.slane %v3451, 5
        %v3454 = vsel %vm281, %v3449, %v3453
        %v3456 = vshrl.u32 %v3145, 16
        %v3458 = vrot.slane %v3456, 4
        %v3459 = vshll.u32 %v3145, 16
        %v3461 = vrot.slane %v3459, 5
        %v3462 = vor.u32 %v3458, %v3461
        %v3463 = vrot.slane %v3462, 4
        %v3465 = vshll.u32 %v3146, 16
        %v3467 = vrot.slane %v3465, 5
        %v3468 = vsel %vm281, %v3463, %v3467
        %v3469 = vshrl.u32 %v3146, 16
        %v3471 = vrot.slane %v3469, 4
        %v3472 = vor.u32 %v3471, %v3467
        %v3473 = vrot.slane %v3472, 4
        %v3475 = vshll.u32 %v3147, 16
        %v3477 = vrot.slane %v3475, 5
        %v3478 = vsel %vm281, %v3473, %v3477
        %v3480 = vshrl.u32 %v3148, 16
        %v3482 = vrot.slane %v3480, 4
        %v3483 = vshll.u32 %v3148, 16
        %v3485 = vrot.slane %v3483, 5
        %v3486 = vor.u32 %v3482, %v3485
        %v3487 = vrot.slane %v3486, 4
        %v3489 = vshll.u32 %v3149, 16
        %v3491 = vrot.slane %v3489, 5
        %v3492 = vsel %vm281, %v3487, %v3491
        %v3493 = vshrl.u32 %v3149, 16
        %v3495 = vrot.slane %v3493, 4
        %v3496 = vor.u32 %v3495, %v3491
        %v3497 = vrot.slane %v3496, 4
        %v3499 = vshll.u32 %v3150, 16
        %v3501 = vrot.slane %v3499, 5
        %v3502 = vsel %vm281, %v3497, %v3501
        %v3504 = vshrl.u32 %v3151, 16
        %v3506 = vrot.slane %v3504, 4
        %v3507 = vshll.u32 %v3151, 16
        %v3509 = vrot.slane %v3507, 5
        %v3510 = vor.u32 %v3506, %v3509
        %v3511 = vrot.slane %v3510, 4
        %v3513 = vshll.u32 %v3152, 16
        %v3515 = vrot.slane %v3513, 5
        %v3516 = vsel %vm281, %v3511, %v3515
        %v3517 = vshrl.u32 %v3152, 16
        %v3519 = vrot.slane %v3517, 4
        %v3520 = vor.u32 %v3519, %v3515
        %v3521 = vrot.slane %v3520, 4
        %v3523 = vshll.u32 %v3153, 16
        %v3525 = vrot.slane %v3523, 5
        %v3526 = vsel %vm281, %v3521, %v3525
        %v3528 = vshrl.u32 %v3154, 16
        %v3530 = vrot.slane %v3528, 4
        %v3531 = vshll.u32 %v3154, 16
        %v3533 = vrot.slane %v3531, 5
        %v3534 = vor.u32 %v3530, %v3533
        %v3535 = vrot.slane %v3534, 4
        %v3537 = vshll.u32 %v3155, 16
        %v3539 = vrot.slane %v3537, 5
        %v3540 = vsel %vm281, %v3535, %v3539
        %v3541 = vshrl.u32 %v3155, 16
        %v3543 = vrot.slane %v3541, 4
        %v3544 = vor.u32 %v3543, %v3539
        %v3545 = vrot.slane %v3544, 4
        %v3547 = vshll.u32 %v3156, 16
        %v3549 = vrot.slane %v3547, 5
        %v3550 = vsel %vm281, %v3545, %v3549
        %s3551 = scalar_lea.vmem %s2, 16
        %v3552 = vld [vmem:[%s3551] sm:$0xf]
        %v3553 = vld [vmem:[%s3551 + $0x4] sm:$0xf]
        %v3554 = vld [vmem:[%s3551 + $0x8] sm:$0xf]
        %v3555 = vld [vmem:[%s3551 + $0xc] sm:$0xf]
        %v3556 = vunpack.c.l.b16 %v3180
        %v3557 = vunpack.c.l.b16 %v3190
        %v3558 = vunpack.c.l.b16 %v3204
        %v3559 = vunpack.c.l.b16 %v3214
        %v3560 = vunpack.c.l.b16 %v3228
        %v3561 = vunpack.c.l.b16 %v3238
        %v3562 = vunpack.c.l.b16 %v3252
        %v3563 = vunpack.c.l.b16 %v3262
        %v3564 = vunpack.c.l.b16 %v3276
        %v3565 = vunpack.c.l.b16 %v3286
        %v3566 = vunpack.c.l.b16 %v3300
        %v3567 = vunpack.c.l.b16 %v3310
        %v3568 = vunpack.c.l.b16 %v3324
        %v3569 = vunpack.c.l.b16 %v3334
        %v3570 = vunpack.c.l.b16 %v3348
        %v3571 = vunpack.c.l.b16 %v3358
        %v3572 = vunpack.c.l.b16 %v3372
        %v3573 = vunpack.c.l.b16 %v3382
        %v3574 = vunpack.c.l.b16 %v3396
        %v3575 = vunpack.c.l.b16 %v3406
        %v3576 = vunpack.c.l.b16 %v3420
        %v3577 = vunpack.c.l.b16 %v3430
        %v3578 = vunpack.c.l.b16 %v3444
        %v3579 = vunpack.c.l.b16 %v3454
        %v3580 = vunpack.c.l.b16 %v3468
        %v3581 = vunpack.c.l.b16 %v3478
        %v3582 = vunpack.c.l.b16 %v3492
        %v3583 = vunpack.c.l.b16 %v3502
        %v3584 = vunpack.c.l.b16 %v3516
        %v3585 = vunpack.c.l.b16 %v3526
        %v3586 = vunpack.c.l.b16 %v3540
        %v3587 = vunpack.c.l.b16 %v3550
        %v3588 = vpack.c.b16 %v3557, %v3556
        %v3589 = vpack.c.b16 %v3559, %v3558
        %v3590 = vpack.c.b16 %v3561, %v3560
        %v3591 = vpack.c.b16 %v3563, %v3562
        %v3592 = vpack.c.b16 %v3565, %v3564
        %v3593 = vpack.c.b16 %v3567, %v3566
        %v3594 = vpack.c.b16 %v3569, %v3568
        %v3595 = vpack.c.b16 %v3571, %v3570
        %v3596 = vpack.c.b16 %v3573, %v3572
        %v3597 = vpack.c.b16 %v3575, %v3574
        %v3598 = vpack.c.b16 %v3577, %v3576
        %v3599 = vpack.c.b16 %v3579, %v3578
        %v3600 = vpack.c.b16 %v3581, %v3580
        %v3601 = vpack.c.b16 %v3583, %v3582
        %v3602 = vpack.c.b16 %v3585, %v3584
        %v3603 = vpack.c.b16 %v3587, %v3586
        %v3608 = vunpack.c.l.b16 %v3552
        %v3609 = vunpack.c.l.b16 %v3553
        %v3610 = vunpack.c.l.b16 %v3554
        %v3611 = vunpack.c.l.b16 %v3555
        %v3612 = vpack.c.b16 %v3609, %v3608
        %v3613 = vpack.c.b16 %v3611, %v3610
        %v3617 = vsel %vm2291, %v3588, 0
        %v3620 = vsel %vm2291, %v3589, 0
        %v3623 = vsel %vm2291, %v3590, 0
        %v3626 = vsel %vm2291, %v3591, 0
        %v3629 = vsel %vm2291, %v3592, 0
        %v3632 = vsel %vm2291, %v3593, 0
        %v3635 = vsel %vm2291, %v3594, 0
        %v3638 = vsel %vm2291, %v3595, 0
        %v3641 = vsel %vm2291, %v3596, 0
        %v3644 = vsel %vm2291, %v3597, 0
        %v3647 = vsel %vm2291, %v3598, 0
        %v3650 = vsel %vm2291, %v3599, 0
        %v3653 = vsel %vm2291, %v3600, 0
        %v3656 = vsel %vm2291, %v3601, 0
        %v3659 = vsel %vm2291, %v3602, 0
        %v3662 = vsel %vm2291, %v3603, 0
        %3664 = vmatpush.bf16.msra.mxu0 0
        %3665 = vmatpush.bf16.msra.mxu0 0
        %3666 = vmatpush.bf16.msra.mxu0 0
        %3667 = vmatpush.bf16.msra.mxu0 0
        %3668 = vmatpush.bf16.msra.mxu0 0
        %3669 = vmatpush.bf16.msra.mxu0 0
        %3670 = vmatpush.bf16.msra.mxu0 %v3613
        %3671 = vmatpush.bf16.msra.mxu0 %v3612
        %3672 = vmatmul.bf16.gmra.mxu0 %v3617
        %v3673 = vpop.f32.mrf.mxu0
        %v3674 = vadd.f32 0.0, %v3673
        %v3675 = vpop.f32.mrf.mxu0
        %v3676 = vadd.f32 0.0, %v3675
        %3677 = vmatmul.bf16.gmra.mxu0 %v3620
        %v3678 = vpop.f32.mrf.mxu0
        %v3679 = vadd.f32 0.0, %v3678
        %v3680 = vpop.f32.mrf.mxu0
        %v3681 = vadd.f32 0.0, %v3680
        %3682 = vmatmul.bf16.gmra.mxu0 %v3623
        %v3683 = vpop.f32.mrf.mxu0
        %v3684 = vadd.f32 0.0, %v3683
        %v3685 = vpop.f32.mrf.mxu0
        %v3686 = vadd.f32 0.0, %v3685
        %3687 = vmatmul.bf16.gmra.mxu0 %v3626
        %v3688 = vpop.f32.mrf.mxu0
        %v3689 = vadd.f32 0.0, %v3688
        %v3690 = vpop.f32.mrf.mxu0
        %v3691 = vadd.f32 0.0, %v3690
        %3692 = vmatmul.bf16.gmra.mxu0 %v3629
        %v3693 = vpop.f32.mrf.mxu0
        %v3694 = vadd.f32 0.0, %v3693
        %v3695 = vpop.f32.mrf.mxu0
        %v3696 = vadd.f32 0.0, %v3695
        %3697 = vmatmul.bf16.gmra.mxu0 %v3632
        %v3698 = vpop.f32.mrf.mxu0
        %v3699 = vadd.f32 0.0, %v3698
        %v3700 = vpop.f32.mrf.mxu0
        %v3701 = vadd.f32 0.0, %v3700
        %3702 = vmatmul.bf16.gmra.mxu0 %v3635
        %v3703 = vpop.f32.mrf.mxu0
        %v3704 = vadd.f32 0.0, %v3703
        %v3705 = vpop.f32.mrf.mxu0
        %v3706 = vadd.f32 0.0, %v3705
        %3707 = vmatmul.bf16.gmra.mxu0 %v3638
        %v3708 = vpop.f32.mrf.mxu0
        %v3709 = vadd.f32 0.0, %v3708
        %v3710 = vpop.f32.mrf.mxu0
        %v3711 = vadd.f32 0.0, %v3710
        %3712 = vmatmul.bf16.gmra.mxu0 %v3641
        %v3713 = vpop.f32.mrf.mxu0
        %v3714 = vadd.f32 0.0, %v3713
        %v3715 = vpop.f32.mrf.mxu0
        %v3716 = vadd.f32 0.0, %v3715
        %3717 = vmatmul.bf16.gmra.mxu0 %v3644
        %v3718 = vpop.f32.mrf.mxu0
        %v3719 = vadd.f32 0.0, %v3718
        %v3720 = vpop.f32.mrf.mxu0
        %v3721 = vadd.f32 0.0, %v3720
        %3722 = vmatmul.bf16.gmra.mxu0 %v3647
        %v3723 = vpop.f32.mrf.mxu0
        %v3724 = vadd.f32 0.0, %v3723
        %v3725 = vpop.f32.mrf.mxu0
        %v3726 = vadd.f32 0.0, %v3725
        %3727 = vmatmul.bf16.gmra.mxu0 %v3650
        %v3728 = vpop.f32.mrf.mxu0
        %v3729 = vadd.f32 0.0, %v3728
        %v3730 = vpop.f32.mrf.mxu0
        %v3731 = vadd.f32 0.0, %v3730
        %3732 = vmatmul.bf16.gmra.mxu0 %v3653
        %v3733 = vpop.f32.mrf.mxu0
        %v3734 = vadd.f32 0.0, %v3733
        %v3735 = vpop.f32.mrf.mxu0
        %v3736 = vadd.f32 0.0, %v3735
        %3737 = vmatmul.bf16.gmra.mxu0 %v3656
        %v3738 = vpop.f32.mrf.mxu0
        %v3739 = vadd.f32 0.0, %v3738
        %v3740 = vpop.f32.mrf.mxu0
        %v3741 = vadd.f32 0.0, %v3740
        %3742 = vmatmul.bf16.gmra.mxu0 %v3659
        %v3743 = vpop.f32.mrf.mxu0
        %v3744 = vadd.f32 0.0, %v3743
        %v3745 = vpop.f32.mrf.mxu0
        %v3746 = vadd.f32 0.0, %v3745
        %3747 = vmatmul.bf16.gmra.mxu0 %v3662
        %v3748 = vpop.f32.mrf.mxu0
        %v3749 = vadd.f32 0.0, %v3748
        %v3750 = vpop.f32.mrf.mxu0
        %v3751 = vadd.f32 0.0, %v3750
        %3752 = vdwg.mxu0
        %v3785 = vunpack.c.l.b16 %v3109
        %v3786 = vunpack.c.l.b16 %v3110
        %v3787 = vunpack.c.l.b16 %v3112
        %v3788 = vunpack.c.l.b16 %v3113
        %v3789 = vunpack.c.l.b16 %v3115
        %v3790 = vunpack.c.l.b16 %v3116
        %v3791 = vunpack.c.l.b16 %v3118
        %v3792 = vunpack.c.l.b16 %v3119
        %v3793 = vunpack.c.l.b16 %v3121
        %v3794 = vunpack.c.l.b16 %v3122
        %v3795 = vunpack.c.l.b16 %v3124
        %v3796 = vunpack.c.l.b16 %v3125
        %v3797 = vunpack.c.l.b16 %v3127
        %v3798 = vunpack.c.l.b16 %v3128
        %v3799 = vunpack.c.l.b16 %v3130
        %v3800 = vunpack.c.l.b16 %v3131
        %v3801 = vunpack.c.l.b16 %v3133
        %v3802 = vunpack.c.l.b16 %v3134
        %v3803 = vunpack.c.l.b16 %v3136
        %v3804 = vunpack.c.l.b16 %v3137
        %v3805 = vunpack.c.l.b16 %v3139
        %v3806 = vunpack.c.l.b16 %v3140
        %v3807 = vunpack.c.l.b16 %v3142
        %v3808 = vunpack.c.l.b16 %v3143
        %v3809 = vunpack.c.l.b16 %v3145
        %v3810 = vunpack.c.l.b16 %v3146
        %v3811 = vunpack.c.l.b16 %v3148
        %v3812 = vunpack.c.l.b16 %v3149
        %v3813 = vunpack.c.l.b16 %v3151
        %v3814 = vunpack.c.l.b16 %v3152
        %v3815 = vunpack.c.l.b16 %v3154
        %v3816 = vunpack.c.l.b16 %v3155
        %v3817 = vpack.c.b16 %v3786, %v3785
        %v3818 = vpack.c.b16 %v3788, %v3787
        %v3819 = vpack.c.b16 %v3790, %v3789
        %v3820 = vpack.c.b16 %v3792, %v3791
        %v3821 = vpack.c.b16 %v3794, %v3793
        %v3822 = vpack.c.b16 %v3796, %v3795
        %v3823 = vpack.c.b16 %v3798, %v3797
        %v3824 = vpack.c.b16 %v3800, %v3799
        %v3825 = vpack.c.b16 %v3802, %v3801
        %v3826 = vpack.c.b16 %v3804, %v3803
        %v3827 = vpack.c.b16 %v3806, %v3805
        %v3828 = vpack.c.b16 %v3808, %v3807
        %v3829 = vpack.c.b16 %v3810, %v3809
        %v3830 = vpack.c.b16 %v3812, %v3811
        %v3831 = vpack.c.b16 %v3814, %v3813
        %v3832 = vpack.c.b16 %v3816, %v3815
        %v3837 = vunpack.c.l.b16 %v3163
        %v3838 = vunpack.c.l.b16 %v3164
        %v3839 = vunpack.c.l.b16 %v3165
        %v3840 = vunpack.c.l.b16 %v3166
        %v3841 = vpack.c.b16 %v3838, %v3837
        %v3842 = vpack.c.b16 %v3840, %v3839
        %v3846 = vsel %vm2291, %v3817, 0
        %v3849 = vsel %vm2291, %v3818, 0
        %v3852 = vsel %vm2291, %v3819, 0
        %v3855 = vsel %vm2291, %v3820, 0
        %v3858 = vsel %vm2291, %v3821, 0
        %v3861 = vsel %vm2291, %v3822, 0
        %v3864 = vsel %vm2291, %v3823, 0
        %v3867 = vsel %vm2291, %v3824, 0
        %v3870 = vsel %vm2291, %v3825, 0
        %v3873 = vsel %vm2291, %v3826, 0
        %v3876 = vsel %vm2291, %v3827, 0
        %v3879 = vsel %vm2291, %v3828, 0
        %v3882 = vsel %vm2291, %v3829, 0
        %v3885 = vsel %vm2291, %v3830, 0
        %v3888 = vsel %vm2291, %v3831, 0
        %v3891 = vsel %vm2291, %v3832, 0
        %3893 = vmatpush.bf16.msra.mxu0 0
        %3894 = vmatpush.bf16.msra.mxu0 0
        %3895 = vmatpush.bf16.msra.mxu0 0
        %3896 = vmatpush.bf16.msra.mxu0 0
        %3897 = vmatpush.bf16.msra.mxu0 0
        %3898 = vmatpush.bf16.msra.mxu0 0
        %3899 = vmatpush.bf16.msra.mxu0 %v3842
        %3900 = vmatpush.bf16.msra.mxu0 %v3841
        %3901 = vmatmul.bf16.gmra.mxu0 %v3846
        %v3902 = vpop.f32.mrf.mxu0
        %v3903 = vadd.f32 %v3674, %v3902
        %v3904 = vpop.f32.mrf.mxu0
        %v3905 = vadd.f32 %v3676, %v3904
        %3906 = vmatmul.bf16.gmra.mxu0 %v3849
        %v3907 = vpop.f32.mrf.mxu0
        %v3908 = vadd.f32 %v3679, %v3907
        %v3909 = vpop.f32.mrf.mxu0
        %v3910 = vadd.f32 %v3681, %v3909
        %3911 = vmatmul.bf16.gmra.mxu0 %v3852
        %v3912 = vpop.f32.mrf.mxu0
        %v3913 = vadd.f32 %v3684, %v3912
        %v3914 = vpop.f32.mrf.mxu0
        %v3915 = vadd.f32 %v3686, %v3914
        %3916 = vmatmul.bf16.gmra.mxu0 %v3855
        %v3917 = vpop.f32.mrf.mxu0
        %v3918 = vadd.f32 %v3689, %v3917
        %v3919 = vpop.f32.mrf.mxu0
        %v3920 = vadd.f32 %v3691, %v3919
        %3921 = vmatmul.bf16.gmra.mxu0 %v3858
        %v3922 = vpop.f32.mrf.mxu0
        %v3923 = vadd.f32 %v3694, %v3922
        %v3924 = vpop.f32.mrf.mxu0
        %v3925 = vadd.f32 %v3696, %v3924
        %3926 = vmatmul.bf16.gmra.mxu0 %v3861
        %v3927 = vpop.f32.mrf.mxu0
        %v3928 = vadd.f32 %v3699, %v3927
        %v3929 = vpop.f32.mrf.mxu0
        %v3930 = vadd.f32 %v3701, %v3929
        %3931 = vmatmul.bf16.gmra.mxu0 %v3864
        %v3932 = vpop.f32.mrf.mxu0
        %v3933 = vadd.f32 %v3704, %v3932
        %v3934 = vpop.f32.mrf.mxu0
        %v3935 = vadd.f32 %v3706, %v3934
        %3936 = vmatmul.bf16.gmra.mxu0 %v3867
        %v3937 = vpop.f32.mrf.mxu0
        %v3938 = vadd.f32 %v3709, %v3937
        %v3939 = vpop.f32.mrf.mxu0
        %v3940 = vadd.f32 %v3711, %v3939
        %3941 = vmatmul.bf16.gmra.mxu0 %v3870
        %v3942 = vpop.f32.mrf.mxu0
        %v3943 = vadd.f32 %v3714, %v3942
        %v3944 = vpop.f32.mrf.mxu0
        %v3945 = vadd.f32 %v3716, %v3944
        %3946 = vmatmul.bf16.gmra.mxu0 %v3873
        %v3947 = vpop.f32.mrf.mxu0
        %v3948 = vadd.f32 %v3719, %v3947
        %v3949 = vpop.f32.mrf.mxu0
        %v3950 = vadd.f32 %v3721, %v3949
        %3951 = vmatmul.bf16.gmra.mxu0 %v3876
        %v3952 = vpop.f32.mrf.mxu0
        %v3953 = vadd.f32 %v3724, %v3952
        %v3954 = vpop.f32.mrf.mxu0
        %v3955 = vadd.f32 %v3726, %v3954
        %3956 = vmatmul.bf16.gmra.mxu0 %v3879
        %v3957 = vpop.f32.mrf.mxu0
        %v3958 = vadd.f32 %v3729, %v3957
        %v3959 = vpop.f32.mrf.mxu0
        %v3960 = vadd.f32 %v3731, %v3959
        %3961 = vmatmul.bf16.gmra.mxu0 %v3882
        %v3962 = vpop.f32.mrf.mxu0
        %v3963 = vadd.f32 %v3734, %v3962
        %v3964 = vpop.f32.mrf.mxu0
        %v3965 = vadd.f32 %v3736, %v3964
        %3966 = vmatmul.bf16.gmra.mxu0 %v3885
        %v3967 = vpop.f32.mrf.mxu0
        %v3968 = vadd.f32 %v3739, %v3967
        %v3969 = vpop.f32.mrf.mxu0
        %v3970 = vadd.f32 %v3741, %v3969
        %3971 = vmatmul.bf16.gmra.mxu0 %v3888
        %v3972 = vpop.f32.mrf.mxu0
        %v3973 = vadd.f32 %v3744, %v3972
        %v3974 = vpop.f32.mrf.mxu0
        %v3975 = vadd.f32 %v3746, %v3974
        %3976 = vmatmul.bf16.gmra.mxu0 %v3891
        %v3977 = vpop.f32.mrf.mxu0
        %v3978 = vadd.f32 %v3749, %v3977
        %v3979 = vpop.f32.mrf.mxu0
        %v3980 = vadd.f32 %v3751, %v3979
        %3981 = vdwg.mxu0
        %v3998 = vrot.slane %v3109, 5
        %v3999 = vrot.slane %v3998, 4
        %v4000 = vrot.slane %v3110, 5
        %v4001 = vsel %vm1096, %v3999, %v4000
        %v4002 = vrot.slane %v4000, 4
        %v4003 = vrot.slane %v3111, 5
        %v4004 = vsel %vm1096, %v4002, %v4003
        %v4005 = vrot.slane %v3112, 5
        %v4006 = vrot.slane %v4005, 4
        %v4007 = vrot.slane %v3113, 5
        %v4008 = vsel %vm1096, %v4006, %v4007
        %v4009 = vrot.slane %v4007, 4
        %v4010 = vrot.slane %v3114, 5
        %v4011 = vsel %vm1096, %v4009, %v4010
        %v4012 = vrot.slane %v3115, 5
        %v4013 = vrot.slane %v4012, 4
        %v4014 = vrot.slane %v3116, 5
        %v4015 = vsel %vm1096, %v4013, %v4014
        %v4016 = vrot.slane %v4014, 4
        %v4017 = vrot.slane %v3117, 5
        %v4018 = vsel %vm1096, %v4016, %v4017
        %v4019 = vrot.slane %v3118, 5
        %v4020 = vrot.slane %v4019, 4
        %v4021 = vrot.slane %v3119, 5
        %v4022 = vsel %vm1096, %v4020, %v4021
        %v4023 = vrot.slane %v4021, 4
        %v4024 = vrot.slane %v3120, 5
        %v4025 = vsel %vm1096, %v4023, %v4024
        %v4026 = vrot.slane %v3121, 5
        %v4027 = vrot.slane %v4026, 4
        %v4028 = vrot.slane %v3122, 5
        %v4029 = vsel %vm1096, %v4027, %v4028
        %v4030 = vrot.slane %v4028, 4
        %v4031 = vrot.slane %v3123, 5
        %v4032 = vsel %vm1096, %v4030, %v4031
        %v4033 = vrot.slane %v3124, 5
        %v4034 = vrot.slane %v4033, 4
        %v4035 = vrot.slane %v3125, 5
        %v4036 = vsel %vm1096, %v4034, %v4035
        %v4037 = vrot.slane %v4035, 4
        %v4038 = vrot.slane %v3126, 5
        %v4039 = vsel %vm1096, %v4037, %v4038
        %v4040 = vrot.slane %v3127, 5
        %v4041 = vrot.slane %v4040, 4
        %v4042 = vrot.slane %v3128, 5
        %v4043 = vsel %vm1096, %v4041, %v4042
        %v4044 = vrot.slane %v4042, 4
        %v4045 = vrot.slane %v3129, 5
        %v4046 = vsel %vm1096, %v4044, %v4045
        %v4047 = vrot.slane %v3130, 5
        %v4048 = vrot.slane %v4047, 4
        %v4049 = vrot.slane %v3131, 5
        %v4050 = vsel %vm1096, %v4048, %v4049
        %v4051 = vrot.slane %v4049, 4
        %v4052 = vrot.slane %v3132, 5
        %v4053 = vsel %vm1096, %v4051, %v4052
        %v4054 = vrot.slane %v3133, 5
        %v4055 = vrot.slane %v4054, 4
        %v4056 = vrot.slane %v3134, 5
        %v4057 = vsel %vm1096, %v4055, %v4056
        %v4058 = vrot.slane %v4056, 4
        %v4059 = vrot.slane %v3135, 5
        %v4060 = vsel %vm1096, %v4058, %v4059
        %v4061 = vrot.slane %v3136, 5
        %v4062 = vrot.slane %v4061, 4
        %v4063 = vrot.slane %v3137, 5
        %v4064 = vsel %vm1096, %v4062, %v4063
        %v4065 = vrot.slane %v4063, 4
        %v4066 = vrot.slane %v3138, 5
        %v4067 = vsel %vm1096, %v4065, %v4066
        %v4068 = vrot.slane %v3139, 5
        %v4069 = vrot.slane %v4068, 4
        %v4070 = vrot.slane %v3140, 5
        %v4071 = vsel %vm1096, %v4069, %v4070
        %v4072 = vrot.slane %v4070, 4
        %v4073 = vrot.slane %v3141, 5
        %v4074 = vsel %vm1096, %v4072, %v4073
        %v4075 = vrot.slane %v3142, 5
        %v4076 = vrot.slane %v4075, 4
        %v4077 = vrot.slane %v3143, 5
        %v4078 = vsel %vm1096, %v4076, %v4077
        %v4079 = vrot.slane %v4077, 4
        %v4080 = vrot.slane %v3144, 5
        %v4081 = vsel %vm1096, %v4079, %v4080
        %v4082 = vrot.slane %v3145, 5
        %v4083 = vrot.slane %v4082, 4
        %v4084 = vrot.slane %v3146, 5
        %v4085 = vsel %vm1096, %v4083, %v4084
        %v4086 = vrot.slane %v4084, 4
        %v4087 = vrot.slane %v3147, 5
        %v4088 = vsel %vm1096, %v4086, %v4087
        %v4089 = vrot.slane %v3148, 5
        %v4090 = vrot.slane %v4089, 4
        %v4091 = vrot.slane %v3149, 5
        %v4092 = vsel %vm1096, %v4090, %v4091
        %v4093 = vrot.slane %v4091, 4
        %v4094 = vrot.slane %v3150, 5
        %v4095 = vsel %vm1096, %v4093, %v4094
        %v4096 = vrot.slane %v3151, 5
        %v4097 = vrot.slane %v4096, 4
        %v4098 = vrot.slane %v3152, 5
        %v4099 = vsel %vm1096, %v4097, %v4098
        %v4100 = vrot.slane %v4098, 4
        %v4101 = vrot.slane %v3153, 5
        %v4102 = vsel %vm1096, %v4100, %v4101
        %v4103 = vrot.slane %v3154, 5
        %v4104 = vrot.slane %v4103, 4
        %v4105 = vrot.slane %v3155, 5
        %v4106 = vsel %vm1096, %v4104, %v4105
        %v4107 = vrot.slane %v4105, 4
        %v4108 = vrot.slane %v3156, 5
        %v4109 = vsel %vm1096, %v4107, %v4108
        %s4110 = scalar_lea.vmem %s2, 32
        %v4111 = vld [vmem:[%s4110] sm:$0xf]
        %v4112 = vld [vmem:[%s4110 + $0x4] sm:$0xf]
        %v4113 = vld [vmem:[%s4110 + $0x8] sm:$0xf]
        %v4114 = vld [vmem:[%s4110 + $0xc] sm:$0xf]
        %v4115 = vunpack.c.l.b16 %v4001
        %v4116 = vunpack.c.l.b16 %v4004
        %v4117 = vunpack.c.l.b16 %v4008
        %v4118 = vunpack.c.l.b16 %v4011
        %v4119 = vunpack.c.l.b16 %v4015
        %v4120 = vunpack.c.l.b16 %v4018
        %v4121 = vunpack.c.l.b16 %v4022
        %v4122 = vunpack.c.l.b16 %v4025
        %v4123 = vunpack.c.l.b16 %v4029
        %v4124 = vunpack.c.l.b16 %v4032
        %v4125 = vunpack.c.l.b16 %v4036
        %v4126 = vunpack.c.l.b16 %v4039
        %v4127 = vunpack.c.l.b16 %v4043
        %v4128 = vunpack.c.l.b16 %v4046
        %v4129 = vunpack.c.l.b16 %v4050
        %v4130 = vunpack.c.l.b16 %v4053
        %v4131 = vunpack.c.l.b16 %v4057
        %v4132 = vunpack.c.l.b16 %v4060
        %v4133 = vunpack.c.l.b16 %v4064
        %v4134 = vunpack.c.l.b16 %v4067
        %v4135 = vunpack.c.l.b16 %v4071
        %v4136 = vunpack.c.l.b16 %v4074
        %v4137 = vunpack.c.l.b16 %v4078
        %v4138 = vunpack.c.l.b16 %v4081
        %v4139 = vunpack.c.l.b16 %v4085
        %v4140 = vunpack.c.l.b16 %v4088
        %v4141 = vunpack.c.l.b16 %v4092
        %v4142 = vunpack.c.l.b16 %v4095
        %v4143 = vunpack.c.l.b16 %v4099
        %v4144 = vunpack.c.l.b16 %v4102
        %v4145 = vunpack.c.l.b16 %v4106
        %v4146 = vunpack.c.l.b16 %v4109
        %v4147 = vpack.c.b16 %v4116, %v4115
        %v4148 = vpack.c.b16 %v4118, %v4117
        %v4149 = vpack.c.b16 %v4120, %v4119
        %v4150 = vpack.c.b16 %v4122, %v4121
        %v4151 = vpack.c.b16 %v4124, %v4123
        %v4152 = vpack.c.b16 %v4126, %v4125
        %v4153 = vpack.c.b16 %v4128, %v4127
        %v4154 = vpack.c.b16 %v4130, %v4129
        %v4155 = vpack.c.b16 %v4132, %v4131
        %v4156 = vpack.c.b16 %v4134, %v4133
        %v4157 = vpack.c.b16 %v4136, %v4135
        %v4158 = vpack.c.b16 %v4138, %v4137
        %v4159 = vpack.c.b16 %v4140, %v4139
        %v4160 = vpack.c.b16 %v4142, %v4141
        %v4161 = vpack.c.b16 %v4144, %v4143
        %v4162 = vpack.c.b16 %v4146, %v4145
        %v4167 = vunpack.c.l.b16 %v4111
        %v4168 = vunpack.c.l.b16 %v4112
        %v4169 = vunpack.c.l.b16 %v4113
        %v4170 = vunpack.c.l.b16 %v4114
        %v4171 = vpack.c.b16 %v4168, %v4167
        %v4172 = vpack.c.b16 %v4170, %v4169
        %v4176 = vsel %vm2291, %v4147, 0
        %v4179 = vsel %vm2291, %v4148, 0
        %v4182 = vsel %vm2291, %v4149, 0
        %v4185 = vsel %vm2291, %v4150, 0
        %v4188 = vsel %vm2291, %v4151, 0
        %v4191 = vsel %vm2291, %v4152, 0
        %v4194 = vsel %vm2291, %v4153, 0
        %v4197 = vsel %vm2291, %v4154, 0
        %v4200 = vsel %vm2291, %v4155, 0
        %v4203 = vsel %vm2291, %v4156, 0
        %v4206 = vsel %vm2291, %v4157, 0
        %v4209 = vsel %vm2291, %v4158, 0
        %v4212 = vsel %vm2291, %v4159, 0
        %v4215 = vsel %vm2291, %v4160, 0
        %v4218 = vsel %vm2291, %v4161, 0
        %v4221 = vsel %vm2291, %v4162, 0
        %4223 = vmatpush.bf16.msra.mxu0 0
        %4224 = vmatpush.bf16.msra.mxu0 0
        %4225 = vmatpush.bf16.msra.mxu0 0
        %4226 = vmatpush.bf16.msra.mxu0 0
        %4227 = vmatpush.bf16.msra.mxu0 0
        %4228 = vmatpush.bf16.msra.mxu0 0
        %4229 = vmatpush.bf16.msra.mxu0 %v4172
        %4230 = vmatpush.bf16.msra.mxu0 %v4171
        %4231 = vmatmul.bf16.gmra.mxu0 %v4176
        %v4232 = vpop.f32.mrf.mxu0
        %v4233 = vadd.f32 0.0, %v4232
        %v4234 = vpop.f32.mrf.mxu0
        %v4235 = vadd.f32 0.0, %v4234
        %4236 = vmatmul.bf16.gmra.mxu0 %v4179
        %v4237 = vpop.f32.mrf.mxu0
        %v4238 = vadd.f32 0.0, %v4237
        %v4239 = vpop.f32.mrf.mxu0
        %v4240 = vadd.f32 0.0, %v4239
        %4241 = vmatmul.bf16.gmra.mxu0 %v4182
        %v4242 = vpop.f32.mrf.mxu0
        %v4243 = vadd.f32 0.0, %v4242
        %v4244 = vpop.f32.mrf.mxu0
        %v4245 = vadd.f32 0.0, %v4244
        %4246 = vmatmul.bf16.gmra.mxu0 %v4185
        %v4247 = vpop.f32.mrf.mxu0
        %v4248 = vadd.f32 0.0, %v4247
        %v4249 = vpop.f32.mrf.mxu0
        %v4250 = vadd.f32 0.0, %v4249
        %4251 = vmatmul.bf16.gmra.mxu0 %v4188
        %v4252 = vpop.f32.mrf.mxu0
        %v4253 = vadd.f32 0.0, %v4252
        %v4254 = vpop.f32.mrf.mxu0
        %v4255 = vadd.f32 0.0, %v4254
        %4256 = vmatmul.bf16.gmra.mxu0 %v4191
        %v4257 = vpop.f32.mrf.mxu0
        %v4258 = vadd.f32 0.0, %v4257
        %v4259 = vpop.f32.mrf.mxu0
        %v4260 = vadd.f32 0.0, %v4259
        %4261 = vmatmul.bf16.gmra.mxu0 %v4194
        %v4262 = vpop.f32.mrf.mxu0
        %v4263 = vadd.f32 0.0, %v4262
        %v4264 = vpop.f32.mrf.mxu0
        %v4265 = vadd.f32 0.0, %v4264
        %4266 = vmatmul.bf16.gmra.mxu0 %v4197
        %v4267 = vpop.f32.mrf.mxu0
        %v4268 = vadd.f32 0.0, %v4267
        %v4269 = vpop.f32.mrf.mxu0
        %v4270 = vadd.f32 0.0, %v4269
        %4271 = vmatmul.bf16.gmra.mxu0 %v4200
        %v4272 = vpop.f32.mrf.mxu0
        %v4273 = vadd.f32 0.0, %v4272
        %v4274 = vpop.f32.mrf.mxu0
        %v4275 = vadd.f32 0.0, %v4274
        %4276 = vmatmul.bf16.gmra.mxu0 %v4203
        %v4277 = vpop.f32.mrf.mxu0
        %v4278 = vadd.f32 0.0, %v4277
        %v4279 = vpop.f32.mrf.mxu0
        %v4280 = vadd.f32 0.0, %v4279
        %4281 = vmatmul.bf16.gmra.mxu0 %v4206
        %v4282 = vpop.f32.mrf.mxu0
        %v4283 = vadd.f32 0.0, %v4282
        %v4284 = vpop.f32.mrf.mxu0
        %v4285 = vadd.f32 0.0, %v4284
        %4286 = vmatmul.bf16.gmra.mxu0 %v4209
        %v4287 = vpop.f32.mrf.mxu0
        %v4288 = vadd.f32 0.0, %v4287
        %v4289 = vpop.f32.mrf.mxu0
        %v4290 = vadd.f32 0.0, %v4289
        %4291 = vmatmul.bf16.gmra.mxu0 %v4212
        %v4292 = vpop.f32.mrf.mxu0
        %v4293 = vadd.f32 0.0, %v4292
        %v4294 = vpop.f32.mrf.mxu0
        %v4295 = vadd.f32 0.0, %v4294
        %4296 = vmatmul.bf16.gmra.mxu0 %v4215
        %v4297 = vpop.f32.mrf.mxu0
        %v4298 = vadd.f32 0.0, %v4297
        %v4299 = vpop.f32.mrf.mxu0
        %v4300 = vadd.f32 0.0, %v4299
        %4301 = vmatmul.bf16.gmra.mxu0 %v4218
        %v4302 = vpop.f32.mrf.mxu0
        %v4303 = vadd.f32 0.0, %v4302
        %v4304 = vpop.f32.mrf.mxu0
        %v4305 = vadd.f32 0.0, %v4304
        %4306 = vmatmul.bf16.gmra.mxu0 %v4221
        %v4307 = vpop.f32.mrf.mxu0
        %v4308 = vadd.f32 0.0, %v4307
        %v4309 = vpop.f32.mrf.mxu0
        %v4310 = vadd.f32 0.0, %v4309
        %4311 = vdwg.mxu0
        %v4312 = vadd.f32 %v3903, %v4233
        %v4313 = vadd.f32 %v3905, %v4235
        %v4314 = vadd.f32 %v3908, %v4238
        %v4315 = vadd.f32 %v3910, %v4240
        %v4316 = vadd.f32 %v3913, %v4243
        %v4317 = vadd.f32 %v3915, %v4245
        %v4318 = vadd.f32 %v3918, %v4248
        %v4319 = vadd.f32 %v3920, %v4250
        %v4320 = vadd.f32 %v3923, %v4253
        %v4321 = vadd.f32 %v3925, %v4255
        %v4322 = vadd.f32 %v3928, %v4258
        %v4323 = vadd.f32 %v3930, %v4260
        %v4324 = vadd.f32 %v3933, %v4263
        %v4325 = vadd.f32 %v3935, %v4265
        %v4326 = vadd.f32 %v3938, %v4268
        %v4327 = vadd.f32 %v3940, %v4270
        %v4328 = vadd.f32 %v3943, %v4273
        %v4329 = vadd.f32 %v3945, %v4275
        %v4330 = vadd.f32 %v3948, %v4278
        %v4331 = vadd.f32 %v3950, %v4280
        %v4332 = vadd.f32 %v3953, %v4283
        %v4333 = vadd.f32 %v3955, %v4285
        %v4334 = vadd.f32 %v3958, %v4288
        %v4335 = vadd.f32 %v3960, %v4290
        %v4336 = vadd.f32 %v3963, %v4293
        %v4337 = vadd.f32 %v3965, %v4295
        %v4338 = vadd.f32 %v3968, %v4298
        %v4339 = vadd.f32 %v3970, %v4300
        %v4340 = vadd.f32 %v3973, %v4303
        %v4341 = vadd.f32 %v3975, %v4305
        %v4342 = vadd.f32 %v3978, %v4308
        %v4343 = vadd.f32 %v3980, %v4310
        %s4344 = scalar_lea.vmem %s2, 48
        %v4345 = vld [vmem:[%s4344] sm:$0xf]
        %v4346 = vld [vmem:[%s4344 + $0x4] sm:$0xf]
        %v4347 = vld [vmem:[%s4344 + $0x8] sm:$0xf]
        %v4348 = vld [vmem:[%s4344 + $0xc] sm:$0xf]
        %v4351 = vunpack.c.l.b16 %v3157
        %v4352 = vunpack.c.l.b16 %v3158
        %v4353 = vpack.c.b16 %v4352, %v4351
        %v4358 = vunpack.c.l.b16 %v4345
        %v4359 = vunpack.c.l.b16 %v4346
        %v4360 = vunpack.c.l.b16 %v4347
        %v4361 = vunpack.c.l.b16 %v4348
        %v4362 = vpack.c.b16 %v4359, %v4358
        %v4363 = vpack.c.b16 %v4361, %v4360
        %v4367 = vsel %vm2291, %v4353, 0
        %4369 = vmatpush.bf16.msra.mxu0 0
        %4370 = vmatpush.bf16.msra.mxu0 0
        %4371 = vmatpush.bf16.msra.mxu0 0
        %4372 = vmatpush.bf16.msra.mxu0 0
        %4373 = vmatpush.bf16.msra.mxu0 0
        %4374 = vmatpush.bf16.msra.mxu0 0
        %4375 = vmatpush.bf16.msra.mxu0 %v4363
        %4376 = vmatpush.bf16.msra.mxu0 %v4362
        %4377 = vmatmul.bf16.gmra.mxu0 %v3849
        %v4378 = vpop.f32.mrf.mxu0
        %v4379 = vadd.f32 0.0, %v4378
        %v4380 = vpop.f32.mrf.mxu0
        %v4381 = vadd.f32 0.0, %v4380
        %4382 = vmatmul.bf16.gmra.mxu0 %v3852
        %v4383 = vpop.f32.mrf.mxu0
        %v4384 = vadd.f32 0.0, %v4383
        %v4385 = vpop.f32.mrf.mxu0
        %v4386 = vadd.f32 0.0, %v4385
        %4387 = vmatmul.bf16.gmra.mxu0 %v3855
        %v4388 = vpop.f32.mrf.mxu0
        %v4389 = vadd.f32 0.0, %v4388
        %v4390 = vpop.f32.mrf.mxu0
        %v4391 = vadd.f32 0.0, %v4390
        %4392 = vmatmul.bf16.gmra.mxu0 %v3858
        %v4393 = vpop.f32.mrf.mxu0
        %v4394 = vadd.f32 0.0, %v4393
        %v4395 = vpop.f32.mrf.mxu0
        %v4396 = vadd.f32 0.0, %v4395
        %4397 = vmatmul.bf16.gmra.mxu0 %v3861
        %v4398 = vpop.f32.mrf.mxu0
        %v4399 = vadd.f32 0.0, %v4398
        %v4400 = vpop.f32.mrf.mxu0
        %v4401 = vadd.f32 0.0, %v4400
        %4402 = vmatmul.bf16.gmra.mxu0 %v3864
        %v4403 = vpop.f32.mrf.mxu0
        %v4404 = vadd.f32 0.0, %v4403
        %v4405 = vpop.f32.mrf.mxu0
        %v4406 = vadd.f32 0.0, %v4405
        %4407 = vmatmul.bf16.gmra.mxu0 %v3867
        %v4408 = vpop.f32.mrf.mxu0
        %v4409 = vadd.f32 0.0, %v4408
        %v4410 = vpop.f32.mrf.mxu0
        %v4411 = vadd.f32 0.0, %v4410
        %4412 = vmatmul.bf16.gmra.mxu0 %v3870
        %v4413 = vpop.f32.mrf.mxu0
        %v4414 = vadd.f32 0.0, %v4413
        %v4415 = vpop.f32.mrf.mxu0
        %v4416 = vadd.f32 0.0, %v4415
        %4417 = vmatmul.bf16.gmra.mxu0 %v3873
        %v4418 = vpop.f32.mrf.mxu0
        %v4419 = vadd.f32 0.0, %v4418
        %v4420 = vpop.f32.mrf.mxu0
        %v4421 = vadd.f32 0.0, %v4420
        %4422 = vmatmul.bf16.gmra.mxu0 %v3876
        %v4423 = vpop.f32.mrf.mxu0
        %v4424 = vadd.f32 0.0, %v4423
        %v4425 = vpop.f32.mrf.mxu0
        %v4426 = vadd.f32 0.0, %v4425
        %4427 = vmatmul.bf16.gmra.mxu0 %v3879
        %v4428 = vpop.f32.mrf.mxu0
        %v4429 = vadd.f32 0.0, %v4428
        %v4430 = vpop.f32.mrf.mxu0
        %v4431 = vadd.f32 0.0, %v4430
        %4432 = vmatmul.bf16.gmra.mxu0 %v3882
        %v4433 = vpop.f32.mrf.mxu0
        %v4434 = vadd.f32 0.0, %v4433
        %v4435 = vpop.f32.mrf.mxu0
        %v4436 = vadd.f32 0.0, %v4435
        %4437 = vmatmul.bf16.gmra.mxu0 %v3885
        %v4438 = vpop.f32.mrf.mxu0
        %v4439 = vadd.f32 0.0, %v4438
        %v4440 = vpop.f32.mrf.mxu0
        %v4441 = vadd.f32 0.0, %v4440
        %4442 = vmatmul.bf16.gmra.mxu0 %v3888
        %v4443 = vpop.f32.mrf.mxu0
        %v4444 = vadd.f32 0.0, %v4443
        %v4445 = vpop.f32.mrf.mxu0
        %v4446 = vadd.f32 0.0, %v4445
        %4447 = vmatmul.bf16.gmra.mxu0 %v3891
        %v4448 = vpop.f32.mrf.mxu0
        %v4449 = vadd.f32 0.0, %v4448
        %v4450 = vpop.f32.mrf.mxu0
        %v4451 = vadd.f32 0.0, %v4450
        %4452 = vmatmul.bf16.gmra.mxu0 %v4367
        %v4453 = vpop.f32.mrf.mxu0
        %v4454 = vadd.f32 0.0, %v4453
        %v4455 = vpop.f32.mrf.mxu0
        %v4456 = vadd.f32 0.0, %v4455
        %4457 = vdwg.mxu0
        %v4458 = vadd.f32 %v4312, %v4379
        %v4459 = vadd.f32 %v4313, %v4381
        %v4460 = vadd.f32 %v4314, %v4384
        %v4461 = vadd.f32 %v4315, %v4386
        %v4462 = vadd.f32 %v4316, %v4389
        %v4463 = vadd.f32 %v4317, %v4391
        %v4464 = vadd.f32 %v4318, %v4394
        %v4465 = vadd.f32 %v4319, %v4396
        %v4466 = vadd.f32 %v4320, %v4399
        %v4467 = vadd.f32 %v4321, %v4401
        %v4468 = vadd.f32 %v4322, %v4404
        %v4469 = vadd.f32 %v4323, %v4406
        %v4470 = vadd.f32 %v4324, %v4409
        %v4471 = vadd.f32 %v4325, %v4411
        %v4472 = vadd.f32 %v4326, %v4414
        %v4473 = vadd.f32 %v4327, %v4416
        %v4474 = vadd.f32 %v4328, %v4419
        %v4475 = vadd.f32 %v4329, %v4421
        %v4476 = vadd.f32 %v4330, %v4424
        %v4477 = vadd.f32 %v4331, %v4426
        %v4478 = vadd.f32 %v4332, %v4429
        %v4479 = vadd.f32 %v4333, %v4431
        %v4480 = vadd.f32 %v4334, %v4434
        %v4481 = vadd.f32 %v4335, %v4436
        %v4482 = vadd.f32 %v4336, %v4439
        %v4483 = vadd.f32 %v4337, %v4441
        %v4484 = vadd.f32 %v4338, %v4444
        %v4485 = vadd.f32 %v4339, %v4446
        %v4486 = vadd.f32 %v4340, %v4449
        %v4487 = vadd.f32 %v4341, %v4451
        %v4488 = vadd.f32 %v4342, %v4454
        %v4489 = vadd.f32 %v4343, %v4456
        %v4491 = vshrl.u32 %v3157, 16
        %v4493 = vrot.slane %v4491, 4
        %v4494 = vshll.u32 %v3157, 16
        %v4496 = vrot.slane %v4494, 5
        %v4497 = vor.u32 %v4493, %v4496
        %v4498 = vrot.slane %v4497, 4
        %v4500 = vshll.u32 %v3158, 16
        %v4502 = vrot.slane %v4500, 5
        %v4503 = vsel %vm281, %v4498, %v4502
        %v4504 = vshrl.u32 %v3158, 16
        %v4506 = vrot.slane %v4504, 4
        %v4507 = vor.u32 %v4506, %v4502
        %v4508 = vrot.slane %v4507, 4
        %v4510 = vshll.u32 %v3159, 16
        %v4512 = vrot.slane %v4510, 5
        %v4513 = vsel %vm281, %v4508, %v4512
        %s4514 = scalar_lea.vmem %s2, 64
        %v4515 = vld [vmem:[%s4514] sm:$0xf]
        %v4516 = vld [vmem:[%s4514 + $0x4] sm:$0xf]
        %v4517 = vld [vmem:[%s4514 + $0x8] sm:$0xf]
        %v4518 = vld [vmem:[%s4514 + $0xc] sm:$0xf]
        %v4519 = vunpack.c.l.b16 %v4503
        %v4520 = vunpack.c.l.b16 %v4513
        %v4521 = vpack.c.b16 %v4520, %v4519
        %v4526 = vunpack.c.l.b16 %v4515
        %v4527 = vunpack.c.l.b16 %v4516
        %v4528 = vunpack.c.l.b16 %v4517
        %v4529 = vunpack.c.l.b16 %v4518
        %v4530 = vpack.c.b16 %v4527, %v4526
        %v4531 = vpack.c.b16 %v4529, %v4528
        %v4535 = vsel %vm2291, %v4521, 0
        %4537 = vmatpush.bf16.msra.mxu0 0
        %4538 = vmatpush.bf16.msra.mxu0 0
        %4539 = vmatpush.bf16.msra.mxu0 0
        %4540 = vmatpush.bf16.msra.mxu0 0
        %4541 = vmatpush.bf16.msra.mxu0 0
        %4542 = vmatpush.bf16.msra.mxu0 0
        %4543 = vmatpush.bf16.msra.mxu0 %v4531
        %4544 = vmatpush.bf16.msra.mxu0 %v4530
        %4545 = vmatmul.bf16.gmra.mxu0 %v3620
        %v4546 = vpop.f32.mrf.mxu0
        %v4547 = vadd.f32 0.0, %v4546
        %v4548 = vpop.f32.mrf.mxu0
        %v4549 = vadd.f32 0.0, %v4548
        %4550 = vmatmul.bf16.gmra.mxu0 %v3623
        %v4551 = vpop.f32.mrf.mxu0
        %v4552 = vadd.f32 0.0, %v4551
        %v4553 = vpop.f32.mrf.mxu0
        %v4554 = vadd.f32 0.0, %v4553
        %4555 = vmatmul.bf16.gmra.mxu0 %v3626
        %v4556 = vpop.f32.mrf.mxu0
        %v4557 = vadd.f32 0.0, %v4556
        %v4558 = vpop.f32.mrf.mxu0
        %v4559 = vadd.f32 0.0, %v4558
        %4560 = vmatmul.bf16.gmra.mxu0 %v3629
        %v4561 = vpop.f32.mrf.mxu0
        %v4562 = vadd.f32 0.0, %v4561
        %v4563 = vpop.f32.mrf.mxu0
        %v4564 = vadd.f32 0.0, %v4563
        %4565 = vmatmul.bf16.gmra.mxu0 %v3632
        %v4566 = vpop.f32.mrf.mxu0
        %v4567 = vadd.f32 0.0, %v4566
        %v4568 = vpop.f32.mrf.mxu0
        %v4569 = vadd.f32 0.0, %v4568
        %4570 = vmatmul.bf16.gmra.mxu0 %v3635
        %v4571 = vpop.f32.mrf.mxu0
        %v4572 = vadd.f32 0.0, %v4571
        %v4573 = vpop.f32.mrf.mxu0
        %v4574 = vadd.f32 0.0, %v4573
        %4575 = vmatmul.bf16.gmra.mxu0 %v3638
        %v4576 = vpop.f32.mrf.mxu0
        %v4577 = vadd.f32 0.0, %v4576
        %v4578 = vpop.f32.mrf.mxu0
        %v4579 = vadd.f32 0.0, %v4578
        %4580 = vmatmul.bf16.gmra.mxu0 %v3641
        %v4581 = vpop.f32.mrf.mxu0
        %v4582 = vadd.f32 0.0, %v4581
        %v4583 = vpop.f32.mrf.mxu0
        %v4584 = vadd.f32 0.0, %v4583
        %4585 = vmatmul.bf16.gmra.mxu0 %v3644
        %v4586 = vpop.f32.mrf.mxu0
        %v4587 = vadd.f32 0.0, %v4586
        %v4588 = vpop.f32.mrf.mxu0
        %v4589 = vadd.f32 0.0, %v4588
        %4590 = vmatmul.bf16.gmra.mxu0 %v3647
        %v4591 = vpop.f32.mrf.mxu0
        %v4592 = vadd.f32 0.0, %v4591
        %v4593 = vpop.f32.mrf.mxu0
        %v4594 = vadd.f32 0.0, %v4593
        %4595 = vmatmul.bf16.gmra.mxu0 %v3650
        %v4596 = vpop.f32.mrf.mxu0
        %v4597 = vadd.f32 0.0, %v4596
        %v4598 = vpop.f32.mrf.mxu0
        %v4599 = vadd.f32 0.0, %v4598
        %4600 = vmatmul.bf16.gmra.mxu0 %v3653
        %v4601 = vpop.f32.mrf.mxu0
        %v4602 = vadd.f32 0.0, %v4601
        %v4603 = vpop.f32.mrf.mxu0
        %v4604 = vadd.f32 0.0, %v4603
        %4605 = vmatmul.bf16.gmra.mxu0 %v3656
        %v4606 = vpop.f32.mrf.mxu0
        %v4607 = vadd.f32 0.0, %v4606
        %v4608 = vpop.f32.mrf.mxu0
        %v4609 = vadd.f32 0.0, %v4608
        %4610 = vmatmul.bf16.gmra.mxu0 %v3659
        %v4611 = vpop.f32.mrf.mxu0
        %v4612 = vadd.f32 0.0, %v4611
        %v4613 = vpop.f32.mrf.mxu0
        %v4614 = vadd.f32 0.0, %v4613
        %4615 = vmatmul.bf16.gmra.mxu0 %v3662
        %v4616 = vpop.f32.mrf.mxu0
        %v4617 = vadd.f32 0.0, %v4616
        %v4618 = vpop.f32.mrf.mxu0
        %v4619 = vadd.f32 0.0, %v4618
        %4620 = vmatmul.bf16.gmra.mxu0 %v4535
        %v4621 = vpop.f32.mrf.mxu0
        %v4622 = vadd.f32 0.0, %v4621
        %v4623 = vpop.f32.mrf.mxu0
        %v4624 = vadd.f32 0.0, %v4623
        %4625 = vdwg.mxu0
        %v4626 = vadd.f32 %v4458, %v4547
        %v4627 = vadd.f32 %v4459, %v4549
        %v4628 = vadd.f32 %v4460, %v4552
        %v4629 = vadd.f32 %v4461, %v4554
        %v4630 = vadd.f32 %v4462, %v4557
        %v4631 = vadd.f32 %v4463, %v4559
        %v4632 = vadd.f32 %v4464, %v4562
        %v4633 = vadd.f32 %v4465, %v4564
        %v4634 = vadd.f32 %v4466, %v4567
        %v4635 = vadd.f32 %v4467, %v4569
        %v4636 = vadd.f32 %v4468, %v4572
        %v4637 = vadd.f32 %v4469, %v4574
        %v4638 = vadd.f32 %v4470, %v4577
        %v4639 = vadd.f32 %v4471, %v4579
        %v4640 = vadd.f32 %v4472, %v4582
        %v4641 = vadd.f32 %v4473, %v4584
        %v4642 = vadd.f32 %v4474, %v4587
        %v4643 = vadd.f32 %v4475, %v4589
        %v4644 = vadd.f32 %v4476, %v4592
        %v4645 = vadd.f32 %v4477, %v4594
        %v4646 = vadd.f32 %v4478, %v4597
        %v4647 = vadd.f32 %v4479, %v4599
        %v4648 = vadd.f32 %v4480, %v4602
        %v4649 = vadd.f32 %v4481, %v4604
        %v4650 = vadd.f32 %v4482, %v4607
        %v4651 = vadd.f32 %v4483, %v4609
        %v4652 = vadd.f32 %v4484, %v4612
        %v4653 = vadd.f32 %v4485, %v4614
        %v4654 = vadd.f32 %v4486, %v4617
        %v4655 = vadd.f32 %v4487, %v4619
        %v4656 = vadd.f32 %v4488, %v4622
        %v4657 = vadd.f32 %v4489, %v4624
        %v4659 = vrot.slane %v3157, 5
        %v4660 = vrot.slane %v4659, 4
        %v4661 = vrot.slane %v3158, 5
        %v4662 = vsel %vm1096, %v4660, %v4661
        %v4663 = vrot.slane %v4661, 4
        %v4664 = vrot.slane %v3159, 5
        %v4665 = vsel %vm1096, %v4663, %v4664
        %s4666 = scalar_lea.vmem %s2, 80
        %v4667 = vld [vmem:[%s4666] sm:$0xf]
        %v4668 = vld [vmem:[%s4666 + $0x4] sm:$0xf]
        %v4669 = vld [vmem:[%s4666 + $0x8] sm:$0xf]
        %v4670 = vld [vmem:[%s4666 + $0xc] sm:$0xf]
        %v4671 = vunpack.c.l.b16 %v4662
        %v4672 = vunpack.c.l.b16 %v4665
        %v4673 = vpack.c.b16 %v4672, %v4671
        %v4678 = vunpack.c.l.b16 %v4667
        %v4679 = vunpack.c.l.b16 %v4668
        %v4680 = vunpack.c.l.b16 %v4669
        %v4681 = vunpack.c.l.b16 %v4670
        %v4682 = vpack.c.b16 %v4679, %v4678
        %v4683 = vpack.c.b16 %v4681, %v4680
        %v4687 = vsel %vm2291, %v4673, 0
        %4689 = vmatpush.bf16.msra.mxu0 0
        %4690 = vmatpush.bf16.msra.mxu0 0
        %4691 = vmatpush.bf16.msra.mxu0 0
        %4692 = vmatpush.bf16.msra.mxu0 0
        %4693 = vmatpush.bf16.msra.mxu0 0
        %4694 = vmatpush.bf16.msra.mxu0 0
        %4695 = vmatpush.bf16.msra.mxu0 %v4683
        %4696 = vmatpush.bf16.msra.mxu0 %v4682
        %4697 = vmatmul.bf16.gmra.mxu0 %v4179
        %v4698 = vpop.f32.mrf.mxu0
        %v4699 = vadd.f32 0.0, %v4698
        %v4700 = vpop.f32.mrf.mxu0
        %v4701 = vadd.f32 0.0, %v4700
        %4702 = vmatmul.bf16.gmra.mxu0 %v4182
        %v4703 = vpop.f32.mrf.mxu0
        %v4704 = vadd.f32 0.0, %v4703
        %v4705 = vpop.f32.mrf.mxu0
        %v4706 = vadd.f32 0.0, %v4705
        %4707 = vmatmul.bf16.gmra.mxu0 %v4185
        %v4708 = vpop.f32.mrf.mxu0
        %v4709 = vadd.f32 0.0, %v4708
        %v4710 = vpop.f32.mrf.mxu0
        %v4711 = vadd.f32 0.0, %v4710
        %4712 = vmatmul.bf16.gmra.mxu0 %v4188
        %v4713 = vpop.f32.mrf.mxu0
        %v4714 = vadd.f32 0.0, %v4713
        %v4715 = vpop.f32.mrf.mxu0
        %v4716 = vadd.f32 0.0, %v4715
        %4717 = vmatmul.bf16.gmra.mxu0 %v4191
        %v4718 = vpop.f32.mrf.mxu0
        %v4719 = vadd.f32 0.0, %v4718
        %v4720 = vpop.f32.mrf.mxu0
        %v4721 = vadd.f32 0.0, %v4720
        %4722 = vmatmul.bf16.gmra.mxu0 %v4194
        %v4723 = vpop.f32.mrf.mxu0
        %v4724 = vadd.f32 0.0, %v4723
        %v4725 = vpop.f32.mrf.mxu0
        %v4726 = vadd.f32 0.0, %v4725
        %4727 = vmatmul.bf16.gmra.mxu0 %v4197
        %v4728 = vpop.f32.mrf.mxu0
        %v4729 = vadd.f32 0.0, %v4728
        %v4730 = vpop.f32.mrf.mxu0
        %v4731 = vadd.f32 0.0, %v4730
        %4732 = vmatmul.bf16.gmra.mxu0 %v4200
        %v4733 = vpop.f32.mrf.mxu0
        %v4734 = vadd.f32 0.0, %v4733
        %v4735 = vpop.f32.mrf.mxu0
        %v4736 = vadd.f32 0.0, %v4735
        %4737 = vmatmul.bf16.gmra.mxu0 %v4203
        %v4738 = vpop.f32.mrf.mxu0
        %v4739 = vadd.f32 0.0, %v4738
        %v4740 = vpop.f32.mrf.mxu0
        %v4741 = vadd.f32 0.0, %v4740
        %4742 = vmatmul.bf16.gmra.mxu0 %v4206
        %v4743 = vpop.f32.mrf.mxu0
        %v4744 = vadd.f32 0.0, %v4743
        %v4745 = vpop.f32.mrf.mxu0
        %v4746 = vadd.f32 0.0, %v4745
        %4747 = vmatmul.bf16.gmra.mxu0 %v4209
        %v4748 = vpop.f32.mrf.mxu0
        %v4749 = vadd.f32 0.0, %v4748
        %v4750 = vpop.f32.mrf.mxu0
        %v4751 = vadd.f32 0.0, %v4750
        %4752 = vmatmul.bf16.gmra.mxu0 %v4212
        %v4753 = vpop.f32.mrf.mxu0
        %v4754 = vadd.f32 0.0, %v4753
        %v4755 = vpop.f32.mrf.mxu0
        %v4756 = vadd.f32 0.0, %v4755
        %4757 = vmatmul.bf16.gmra.mxu0 %v4215
        %v4758 = vpop.f32.mrf.mxu0
        %v4759 = vadd.f32 0.0, %v4758
        %v4760 = vpop.f32.mrf.mxu0
        %v4761 = vadd.f32 0.0, %v4760
        %4762 = vmatmul.bf16.gmra.mxu0 %v4218
        %v4763 = vpop.f32.mrf.mxu0
        %v4764 = vadd.f32 0.0, %v4763
        %v4765 = vpop.f32.mrf.mxu0
        %v4766 = vadd.f32 0.0, %v4765
        %4767 = vmatmul.bf16.gmra.mxu0 %v4221
        %v4768 = vpop.f32.mrf.mxu0
        %v4769 = vadd.f32 0.0, %v4768
        %v4770 = vpop.f32.mrf.mxu0
        %v4771 = vadd.f32 0.0, %v4770
        %4772 = vmatmul.bf16.gmra.mxu0 %v4687
        %v4773 = vpop.f32.mrf.mxu0
        %v4774 = vadd.f32 0.0, %v4773
        %v4775 = vpop.f32.mrf.mxu0
        %v4776 = vadd.f32 0.0, %v4775
        %4777 = vdwg.mxu0
        %v4778 = vadd.f32 %v4626, %v4699
        %v4779 = vadd.f32 %v4627, %v4701
        %v4780 = vadd.f32 %v4628, %v4704
        %v4781 = vadd.f32 %v4629, %v4706
        %v4782 = vadd.f32 %v4630, %v4709
        %v4783 = vadd.f32 %v4631, %v4711
        %v4784 = vadd.f32 %v4632, %v4714
        %v4785 = vadd.f32 %v4633, %v4716
        %v4786 = vadd.f32 %v4634, %v4719
        %v4787 = vadd.f32 %v4635, %v4721
        %v4788 = vadd.f32 %v4636, %v4724
        %v4789 = vadd.f32 %v4637, %v4726
        %v4790 = vadd.f32 %v4638, %v4729
        %v4791 = vadd.f32 %v4639, %v4731
        %v4792 = vadd.f32 %v4640, %v4734
        %v4793 = vadd.f32 %v4641, %v4736
        %v4794 = vadd.f32 %v4642, %v4739
        %v4795 = vadd.f32 %v4643, %v4741
        %v4796 = vadd.f32 %v4644, %v4744
        %v4797 = vadd.f32 %v4645, %v4746
        %v4798 = vadd.f32 %v4646, %v4749
        %v4799 = vadd.f32 %v4647, %v4751
        %v4800 = vadd.f32 %v4648, %v4754
        %v4801 = vadd.f32 %v4649, %v4756
        %v4802 = vadd.f32 %v4650, %v4759
        %v4803 = vadd.f32 %v4651, %v4761
        %v4804 = vadd.f32 %v4652, %v4764
        %v4805 = vadd.f32 %v4653, %v4766
        %v4806 = vadd.f32 %v4654, %v4769
        %v4807 = vadd.f32 %v4655, %v4771
        %v4808 = vadd.f32 %v4656, %v4774
        %v4809 = vadd.f32 %v4657, %v4776
        %s4810 = scalar_lea.vmem %s2, 96
        %v4811 = vld [vmem:[%s4810] sm:$0xf]
        %v4812 = vld [vmem:[%s4810 + $0x4] sm:$0xf]
        %v4813 = vld [vmem:[%s4810 + $0x8] sm:$0xf]
        %v4814 = vld [vmem:[%s4810 + $0xc] sm:$0xf]
        %v4817 = vunpack.c.l.b16 %v3160
        %v4818 = vunpack.c.l.b16 %v3161
        %v4819 = vpack.c.b16 %v4818, %v4817
        %v4824 = vunpack.c.l.b16 %v4811
        %v4825 = vunpack.c.l.b16 %v4812
        %v4826 = vunpack.c.l.b16 %v4813
        %v4827 = vunpack.c.l.b16 %v4814
        %v4828 = vpack.c.b16 %v4825, %v4824
        %v4829 = vpack.c.b16 %v4827, %v4826
        %v4833 = vsel %vm2291, %v4819, 0
        %4835 = vmatpush.bf16.msra.mxu0 0
        %4836 = vmatpush.bf16.msra.mxu0 0
        %4837 = vmatpush.bf16.msra.mxu0 0
        %4838 = vmatpush.bf16.msra.mxu0 0
        %4839 = vmatpush.bf16.msra.mxu0 0
        %4840 = vmatpush.bf16.msra.mxu0 0
        %4841 = vmatpush.bf16.msra.mxu0 %v4829
        %4842 = vmatpush.bf16.msra.mxu0 %v4828
        %4843 = vmatmul.bf16.gmra.mxu0 %v3852
        %v4844 = vpop.f32.mrf.mxu0
        %v4845 = vadd.f32 0.0, %v4844
        %v4846 = vpop.f32.mrf.mxu0
        %v4847 = vadd.f32 0.0, %v4846
        %4848 = vmatmul.bf16.gmra.mxu0 %v3855
        %v4849 = vpop.f32.mrf.mxu0
        %v4850 = vadd.f32 0.0, %v4849
        %v4851 = vpop.f32.mrf.mxu0
        %v4852 = vadd.f32 0.0, %v4851
        %4853 = vmatmul.bf16.gmra.mxu0 %v3858
        %v4854 = vpop.f32.mrf.mxu0
        %v4855 = vadd.f32 0.0, %v4854
        %v4856 = vpop.f32.mrf.mxu0
        %v4857 = vadd.f32 0.0, %v4856
        %4858 = vmatmul.bf16.gmra.mxu0 %v3861
        %v4859 = vpop.f32.mrf.mxu0
        %v4860 = vadd.f32 0.0, %v4859
        %v4861 = vpop.f32.mrf.mxu0
        %v4862 = vadd.f32 0.0, %v4861
        %4863 = vmatmul.bf16.gmra.mxu0 %v3864
        %v4864 = vpop.f32.mrf.mxu0
        %v4865 = vadd.f32 0.0, %v4864
        %v4866 = vpop.f32.mrf.mxu0
        %v4867 = vadd.f32 0.0, %v4866
        %4868 = vmatmul.bf16.gmra.mxu0 %v3867
        %v4869 = vpop.f32.mrf.mxu0
        %v4870 = vadd.f32 0.0, %v4869
        %v4871 = vpop.f32.mrf.mxu0
        %v4872 = vadd.f32 0.0, %v4871
        %4873 = vmatmul.bf16.gmra.mxu0 %v3870
        %v4874 = vpop.f32.mrf.mxu0
        %v4875 = vadd.f32 0.0, %v4874
        %v4876 = vpop.f32.mrf.mxu0
        %v4877 = vadd.f32 0.0, %v4876
        %4878 = vmatmul.bf16.gmra.mxu0 %v3873
        %v4879 = vpop.f32.mrf.mxu0
        %v4880 = vadd.f32 0.0, %v4879
        %v4881 = vpop.f32.mrf.mxu0
        %v4882 = vadd.f32 0.0, %v4881
        %4883 = vmatmul.bf16.gmra.mxu0 %v3876
        %v4884 = vpop.f32.mrf.mxu0
        %v4885 = vadd.f32 0.0, %v4884
        %v4886 = vpop.f32.mrf.mxu0
        %v4887 = vadd.f32 0.0, %v4886
        %4888 = vmatmul.bf16.gmra.mxu0 %v3879
        %v4889 = vpop.f32.mrf.mxu0
        %v4890 = vadd.f32 0.0, %v4889
        %v4891 = vpop.f32.mrf.mxu0
        %v4892 = vadd.f32 0.0, %v4891
        %4893 = vmatmul.bf16.gmra.mxu0 %v3882
        %v4894 = vpop.f32.mrf.mxu0
        %v4895 = vadd.f32 0.0, %v4894
        %v4896 = vpop.f32.mrf.mxu0
        %v4897 = vadd.f32 0.0, %v4896
        %4898 = vmatmul.bf16.gmra.mxu0 %v3885
        %v4899 = vpop.f32.mrf.mxu0
        %v4900 = vadd.f32 0.0, %v4899
        %v4901 = vpop.f32.mrf.mxu0
        %v4902 = vadd.f32 0.0, %v4901
        %4903 = vmatmul.bf16.gmra.mxu0 %v3888
        %v4904 = vpop.f32.mrf.mxu0
        %v4905 = vadd.f32 0.0, %v4904
        %v4906 = vpop.f32.mrf.mxu0
        %v4907 = vadd.f32 0.0, %v4906
        %4908 = vmatmul.bf16.gmra.mxu0 %v3891
        %v4909 = vpop.f32.mrf.mxu0
        %v4910 = vadd.f32 0.0, %v4909
        %v4911 = vpop.f32.mrf.mxu0
        %v4912 = vadd.f32 0.0, %v4911
        %4913 = vmatmul.bf16.gmra.mxu0 %v4367
        %v4914 = vpop.f32.mrf.mxu0
        %v4915 = vadd.f32 0.0, %v4914
        %v4916 = vpop.f32.mrf.mxu0
        %v4917 = vadd.f32 0.0, %v4916
        %4918 = vmatmul.bf16.gmra.mxu0 %v4833
        %v4919 = vpop.f32.mrf.mxu0
        %v4920 = vadd.f32 0.0, %v4919
        %v4921 = vpop.f32.mrf.mxu0
        %v4922 = vadd.f32 0.0, %v4921
        %4923 = vdwg.mxu0
        %v4924 = vadd.f32 %v4778, %v4845
        %v4925 = vadd.f32 %v4779, %v4847
        %v4926 = vadd.f32 %v4780, %v4850
        %v4927 = vadd.f32 %v4781, %v4852
        %v4928 = vadd.f32 %v4782, %v4855
        %v4929 = vadd.f32 %v4783, %v4857
        %v4930 = vadd.f32 %v4784, %v4860
        %v4931 = vadd.f32 %v4785, %v4862
        %v4932 = vadd.f32 %v4786, %v4865
        %v4933 = vadd.f32 %v4787, %v4867
        %v4934 = vadd.f32 %v4788, %v4870
        %v4935 = vadd.f32 %v4789, %v4872
        %v4936 = vadd.f32 %v4790, %v4875
        %v4937 = vadd.f32 %v4791, %v4877
        %v4938 = vadd.f32 %v4792, %v4880
        %v4939 = vadd.f32 %v4793, %v4882
        %v4940 = vadd.f32 %v4794, %v4885
        %v4941 = vadd.f32 %v4795, %v4887
        %v4942 = vadd.f32 %v4796, %v4890
        %v4943 = vadd.f32 %v4797, %v4892
        %v4944 = vadd.f32 %v4798, %v4895
        %v4945 = vadd.f32 %v4799, %v4897
        %v4946 = vadd.f32 %v4800, %v4900
        %v4947 = vadd.f32 %v4801, %v4902
        %v4948 = vadd.f32 %v4802, %v4905
        %v4949 = vadd.f32 %v4803, %v4907
        %v4950 = vadd.f32 %v4804, %v4910
        %v4951 = vadd.f32 %v4805, %v4912
        %v4952 = vadd.f32 %v4806, %v4915
        %v4953 = vadd.f32 %v4807, %v4917
        %v4954 = vadd.f32 %v4808, %v4920
        %v4955 = vadd.f32 %v4809, %v4922
        %v4957 = vshrl.u32 %v3160, 16
        %v4959 = vrot.slane %v4957, 4
        %v4960 = vshll.u32 %v3160, 16
        %v4962 = vrot.slane %v4960, 5
        %v4963 = vor.u32 %v4959, %v4962
        %v4964 = vrot.slane %v4963, 4
        %v4966 = vshll.u32 %v3161, 16
        %v4968 = vrot.slane %v4966, 5
        %v4969 = vsel %vm281, %v4964, %v4968
        %v4970 = vshrl.u32 %v3161, 16
        %v4972 = vrot.slane %v4970, 4
        %v4973 = vor.u32 %v4972, %v4968
        %v4974 = vrot.slane %v4973, 4
        %v4976 = vshll.u32 %v3162, 16
        %v4978 = vrot.slane %v4976, 5
        %v4979 = vsel %vm281, %v4974, %v4978
        %s4980 = scalar_lea.vmem %s2, 112
        %v4981 = vld [vmem:[%s4980] sm:$0xf]
        %v4982 = vld [vmem:[%s4980 + $0x4] sm:$0xf]
        %v4983 = vld [vmem:[%s4980 + $0x8] sm:$0xf]
        %v4984 = vld [vmem:[%s4980 + $0xc] sm:$0xf]
        %v4985 = vunpack.c.l.b16 %v4969
        %v4986 = vunpack.c.l.b16 %v4979
        %v4987 = vpack.c.b16 %v4986, %v4985
        %v4992 = vunpack.c.l.b16 %v4981
        %v4993 = vunpack.c.l.b16 %v4982
        %v4994 = vunpack.c.l.b16 %v4983
        %v4995 = vunpack.c.l.b16 %v4984
        %v4996 = vpack.c.b16 %v4993, %v4992
        %v4997 = vpack.c.b16 %v4995, %v4994
        %v5001 = vsel %vm2291, %v4987, 0
        %5003 = vmatpush.bf16.msra.mxu0 0
        %5004 = vmatpush.bf16.msra.mxu0 0
        %5005 = vmatpush.bf16.msra.mxu0 0
        %5006 = vmatpush.bf16.msra.mxu0 0
        %5007 = vmatpush.bf16.msra.mxu0 0
        %5008 = vmatpush.bf16.msra.mxu0 0
        %5009 = vmatpush.bf16.msra.mxu0 %v4997
        %5010 = vmatpush.bf16.msra.mxu0 %v4996
        %5011 = vmatmul.bf16.gmra.mxu0 %v3623
        %v5012 = vpop.f32.mrf.mxu0
        %v5013 = vadd.f32 0.0, %v5012
        %v5014 = vpop.f32.mrf.mxu0
        %v5015 = vadd.f32 0.0, %v5014
        %5016 = vmatmul.bf16.gmra.mxu0 %v3626
        %v5017 = vpop.f32.mrf.mxu0
        %v5018 = vadd.f32 0.0, %v5017
        %v5019 = vpop.f32.mrf.mxu0
        %v5020 = vadd.f32 0.0, %v5019
        %5021 = vmatmul.bf16.gmra.mxu0 %v3629
        %v5022 = vpop.f32.mrf.mxu0
        %v5023 = vadd.f32 0.0, %v5022
        %v5024 = vpop.f32.mrf.mxu0
        %v5025 = vadd.f32 0.0, %v5024
        %5026 = vmatmul.bf16.gmra.mxu0 %v3632
        %v5027 = vpop.f32.mrf.mxu0
        %v5028 = vadd.f32 0.0, %v5027
        %v5029 = vpop.f32.mrf.mxu0
        %v5030 = vadd.f32 0.0, %v5029
        %5031 = vmatmul.bf16.gmra.mxu0 %v3635
        %v5032 = vpop.f32.mrf.mxu0
        %v5033 = vadd.f32 0.0, %v5032
        %v5034 = vpop.f32.mrf.mxu0
        %v5035 = vadd.f32 0.0, %v5034
        %5036 = vmatmul.bf16.gmra.mxu0 %v3638
        %v5037 = vpop.f32.mrf.mxu0
        %v5038 = vadd.f32 0.0, %v5037
        %v5039 = vpop.f32.mrf.mxu0
        %v5040 = vadd.f32 0.0, %v5039
        %5041 = vmatmul.bf16.gmra.mxu0 %v3641
        %v5042 = vpop.f32.mrf.mxu0
        %v5043 = vadd.f32 0.0, %v5042
        %v5044 = vpop.f32.mrf.mxu0
        %v5045 = vadd.f32 0.0, %v5044
        %5046 = vmatmul.bf16.gmra.mxu0 %v3644
        %v5047 = vpop.f32.mrf.mxu0
        %v5048 = vadd.f32 0.0, %v5047
        %v5049 = vpop.f32.mrf.mxu0
        %v5050 = vadd.f32 0.0, %v5049
        %5051 = vmatmul.bf16.gmra.mxu0 %v3647
        %v5052 = vpop.f32.mrf.mxu0
        %v5053 = vadd.f32 0.0, %v5052
        %v5054 = vpop.f32.mrf.mxu0
        %v5055 = vadd.f32 0.0, %v5054
        %5056 = vmatmul.bf16.gmra.mxu0 %v3650
        %v5057 = vpop.f32.mrf.mxu0
        %v5058 = vadd.f32 0.0, %v5057
        %v5059 = vpop.f32.mrf.mxu0
        %v5060 = vadd.f32 0.0, %v5059
        %5061 = vmatmul.bf16.gmra.mxu0 %v3653
        %v5062 = vpop.f32.mrf.mxu0
        %v5063 = vadd.f32 0.0, %v5062
        %v5064 = vpop.f32.mrf.mxu0
        %v5065 = vadd.f32 0.0, %v5064
        %5066 = vmatmul.bf16.gmra.mxu0 %v3656
        %v5067 = vpop.f32.mrf.mxu0
        %v5068 = vadd.f32 0.0, %v5067
        %v5069 = vpop.f32.mrf.mxu0
        %v5070 = vadd.f32 0.0, %v5069
        %5071 = vmatmul.bf16.gmra.mxu0 %v3659
        %v5072 = vpop.f32.mrf.mxu0
        %v5073 = vadd.f32 0.0, %v5072
        %v5074 = vpop.f32.mrf.mxu0
        %v5075 = vadd.f32 0.0, %v5074
        %5076 = vmatmul.bf16.gmra.mxu0 %v3662
        %v5077 = vpop.f32.mrf.mxu0
        %v5078 = vadd.f32 0.0, %v5077
        %v5079 = vpop.f32.mrf.mxu0
        %v5080 = vadd.f32 0.0, %v5079
        %5081 = vmatmul.bf16.gmra.mxu0 %v4535
        %v5082 = vpop.f32.mrf.mxu0
        %v5083 = vadd.f32 0.0, %v5082
        %v5084 = vpop.f32.mrf.mxu0
        %v5085 = vadd.f32 0.0, %v5084
        %5086 = vmatmul.bf16.gmra.mxu0 %v5001
        %v5087 = vpop.f32.mrf.mxu0
        %v5088 = vadd.f32 0.0, %v5087
        %v5089 = vpop.f32.mrf.mxu0
        %v5090 = vadd.f32 0.0, %v5089
        %5091 = vdwg.mxu0
        %v5092 = vadd.f32 %v4924, %v5013
        %v5093 = vadd.f32 %v4925, %v5015
        %v5094 = vadd.f32 %v4926, %v5018
        %v5095 = vadd.f32 %v4927, %v5020
        %v5096 = vadd.f32 %v4928, %v5023
        %v5097 = vadd.f32 %v4929, %v5025
        %v5098 = vadd.f32 %v4930, %v5028
        %v5099 = vadd.f32 %v4931, %v5030
        %v5100 = vadd.f32 %v4932, %v5033
        %v5101 = vadd.f32 %v4933, %v5035
        %v5102 = vadd.f32 %v4934, %v5038
        %v5103 = vadd.f32 %v4935, %v5040
        %v5104 = vadd.f32 %v4936, %v5043
        %v5105 = vadd.f32 %v4937, %v5045
        %v5106 = vadd.f32 %v4938, %v5048
        %v5107 = vadd.f32 %v4939, %v5050
        %v5108 = vadd.f32 %v4940, %v5053
        %v5109 = vadd.f32 %v4941, %v5055
        %v5110 = vadd.f32 %v4942, %v5058
        %v5111 = vadd.f32 %v4943, %v5060
        %v5112 = vadd.f32 %v4944, %v5063
        %v5113 = vadd.f32 %v4945, %v5065
        %v5114 = vadd.f32 %v4946, %v5068
        %v5115 = vadd.f32 %v4947, %v5070
        %v5116 = vadd.f32 %v4948, %v5073
        %v5117 = vadd.f32 %v4949, %v5075
        %v5118 = vadd.f32 %v4950, %v5078
        %v5119 = vadd.f32 %v4951, %v5080
        %v5120 = vadd.f32 %v4952, %v5083
        %v5121 = vadd.f32 %v4953, %v5085
        %v5122 = vadd.f32 %v4954, %v5088
        %v5123 = vadd.f32 %v4955, %v5090
        %v5125 = vrot.slane %v3160, 5
        %v5126 = vrot.slane %v5125, 4
        %v5127 = vrot.slane %v3161, 5
        %v5128 = vsel %vm1096, %v5126, %v5127
        %v5129 = vrot.slane %v5127, 4
        %v5130 = vrot.slane %v3162, 5
        %v5131 = vsel %vm1096, %v5129, %v5130
        %s5132 = scalar_lea.vmem %s2, 128
        %v5133 = vld [vmem:[%s5132] sm:$0xf]
        %v5134 = vld [vmem:[%s5132 + $0x4] sm:$0xf]
        %v5135 = vld [vmem:[%s5132 + $0x8] sm:$0xf]
        %v5136 = vld [vmem:[%s5132 + $0xc] sm:$0xf]
        %v5137 = vunpack.c.l.b16 %v5128
        %v5138 = vunpack.c.l.b16 %v5131
        %v5139 = vpack.c.b16 %v5138, %v5137
        %v5144 = vunpack.c.l.b16 %v5133
        %v5145 = vunpack.c.l.b16 %v5134
        %v5146 = vunpack.c.l.b16 %v5135
        %v5147 = vunpack.c.l.b16 %v5136
        %v5148 = vpack.c.b16 %v5145, %v5144
        %v5149 = vpack.c.b16 %v5147, %v5146
        %v5153 = vsel %vm2291, %v5139, 0
        %5155 = vmatpush.bf16.msra.mxu0 0
        %5156 = vmatpush.bf16.msra.mxu0 0
        %5157 = vmatpush.bf16.msra.mxu0 0
        %5158 = vmatpush.bf16.msra.mxu0 0
        %5159 = vmatpush.bf16.msra.mxu0 0
        %5160 = vmatpush.bf16.msra.mxu0 0
        %5161 = vmatpush.bf16.msra.mxu0 %v5149
        %5162 = vmatpush.bf16.msra.mxu0 %v5148
        %5163 = vmatmul.bf16.gmra.mxu0 %v4182
        %v5164 = vpop.f32.mrf.mxu0
        %v5165 = vadd.f32 0.0, %v5164
        %v5166 = vpop.f32.mrf.mxu0
        %v5167 = vadd.f32 0.0, %v5166
        %5168 = vmatmul.bf16.gmra.mxu0 %v4185
        %v5169 = vpop.f32.mrf.mxu0
        %v5170 = vadd.f32 0.0, %v5169
        %v5171 = vpop.f32.mrf.mxu0
        %v5172 = vadd.f32 0.0, %v5171
        %5173 = vmatmul.bf16.gmra.mxu0 %v4188
        %v5174 = vpop.f32.mrf.mxu0
        %v5175 = vadd.f32 0.0, %v5174
        %v5176 = vpop.f32.mrf.mxu0
        %v5177 = vadd.f32 0.0, %v5176
        %5178 = vmatmul.bf16.gmra.mxu0 %v4191
        %v5179 = vpop.f32.mrf.mxu0
        %v5180 = vadd.f32 0.0, %v5179
        %v5181 = vpop.f32.mrf.mxu0
        %v5182 = vadd.f32 0.0, %v5181
        %5183 = vmatmul.bf16.gmra.mxu0 %v4194
        %v5184 = vpop.f32.mrf.mxu0
        %v5185 = vadd.f32 0.0, %v5184
        %v5186 = vpop.f32.mrf.mxu0
        %v5187 = vadd.f32 0.0, %v5186
        %5188 = vmatmul.bf16.gmra.mxu0 %v4197
        %v5189 = vpop.f32.mrf.mxu0
        %v5190 = vadd.f32 0.0, %v5189
        %v5191 = vpop.f32.mrf.mxu0
        %v5192 = vadd.f32 0.0, %v5191
        %5193 = vmatmul.bf16.gmra.mxu0 %v4200
        %v5194 = vpop.f32.mrf.mxu0
        %v5195 = vadd.f32 0.0, %v5194
        %v5196 = vpop.f32.mrf.mxu0
        %v5197 = vadd.f32 0.0, %v5196
        %5198 = vmatmul.bf16.gmra.mxu0 %v4203
        %v5199 = vpop.f32.mrf.mxu0
        %v5200 = vadd.f32 0.0, %v5199
        %v5201 = vpop.f32.mrf.mxu0
        %v5202 = vadd.f32 0.0, %v5201
        %5203 = vmatmul.bf16.gmra.mxu0 %v4206
        %v5204 = vpop.f32.mrf.mxu0
        %v5205 = vadd.f32 0.0, %v5204
        %v5206 = vpop.f32.mrf.mxu0
        %v5207 = vadd.f32 0.0, %v5206
        %5208 = vmatmul.bf16.gmra.mxu0 %v4209
        %v5209 = vpop.f32.mrf.mxu0
        %v5210 = vadd.f32 0.0, %v5209
        %v5211 = vpop.f32.mrf.mxu0
        %v5212 = vadd.f32 0.0, %v5211
        %5213 = vmatmul.bf16.gmra.mxu0 %v4212
        %v5214 = vpop.f32.mrf.mxu0
        %v5215 = vadd.f32 0.0, %v5214
        %v5216 = vpop.f32.mrf.mxu0
        %v5217 = vadd.f32 0.0, %v5216
        %5218 = vmatmul.bf16.gmra.mxu0 %v4215
        %v5219 = vpop.f32.mrf.mxu0
        %v5220 = vadd.f32 0.0, %v5219
        %v5221 = vpop.f32.mrf.mxu0
        %v5222 = vadd.f32 0.0, %v5221
        %5223 = vmatmul.bf16.gmra.mxu0 %v4218
        %v5224 = vpop.f32.mrf.mxu0
        %v5225 = vadd.f32 0.0, %v5224
        %v5226 = vpop.f32.mrf.mxu0
        %v5227 = vadd.f32 0.0, %v5226
        %5228 = vmatmul.bf16.gmra.mxu0 %v4221
        %v5229 = vpop.f32.mrf.mxu0
        %v5230 = vadd.f32 0.0, %v5229
        %v5231 = vpop.f32.mrf.mxu0
        %v5232 = vadd.f32 0.0, %v5231
        %5233 = vmatmul.bf16.gmra.mxu0 %v4687
        %v5234 = vpop.f32.mrf.mxu0
        %v5235 = vadd.f32 0.0, %v5234
        %v5236 = vpop.f32.mrf.mxu0
        %v5237 = vadd.f32 0.0, %v5236
        %5238 = vmatmul.bf16.gmra.mxu0 %v5153
        %v5239 = vpop.f32.mrf.mxu0
        %v5240 = vadd.f32 0.0, %v5239
        %v5241 = vpop.f32.mrf.mxu0
        %v5242 = vadd.f32 0.0, %v5241
        %5243 = vdwg.mxu0
        %v5244 = vadd.f32 %v5092, %v5165
        %v5245 = vadd.f32 %v5093, %v5167
        %v5246 = vadd.f32 %v5094, %v5170
        %v5247 = vadd.f32 %v5095, %v5172
        %v5248 = vadd.f32 %v5096, %v5175
        %v5249 = vadd.f32 %v5097, %v5177
        %v5250 = vadd.f32 %v5098, %v5180
        %v5251 = vadd.f32 %v5099, %v5182
        %v5252 = vadd.f32 %v5100, %v5185
        %v5253 = vadd.f32 %v5101, %v5187
        %v5254 = vadd.f32 %v5102, %v5190
        %v5255 = vadd.f32 %v5103, %v5192
        %v5256 = vadd.f32 %v5104, %v5195
        %v5257 = vadd.f32 %v5105, %v5197
        %v5258 = vadd.f32 %v5106, %v5200
        %v5259 = vadd.f32 %v5107, %v5202
        %v5260 = vadd.f32 %v5108, %v5205
        %v5261 = vadd.f32 %v5109, %v5207
        %v5262 = vadd.f32 %v5110, %v5210
        %v5263 = vadd.f32 %v5111, %v5212
        %v5264 = vadd.f32 %v5112, %v5215
        %v5265 = vadd.f32 %v5113, %v5217
        %v5266 = vadd.f32 %v5114, %v5220
        %v5267 = vadd.f32 %v5115, %v5222
        %v5268 = vadd.f32 %v5116, %v5225
        %v5269 = vadd.f32 %v5117, %v5227
        %v5270 = vadd.f32 %v5118, %v5230
        %v5271 = vadd.f32 %v5119, %v5232
        %v5272 = vadd.f32 %v5120, %v5235
        %v5273 = vadd.f32 %v5121, %v5237
        %v5274 = vadd.f32 %v5122, %v5240
        %v5275 = vadd.f32 %v5123, %v5242
        %v5276 = vsel %vm2291, %v5244, 0.0
        %v5277 = vsel %vm2291, %v5245, 0.0
        %v5278 = vadd.f32 %v5276, %v5277
        %v5279 = vsel %vm2291, %v5246, 0.0
        %v5280 = vadd.f32 %v5278, %v5279
        %v5281 = vsel %vm2291, %v5247, 0.0
        %v5282 = vadd.f32 %v5280, %v5281
        %v5283 = vsel %vm2291, %v5248, 0.0
        %v5284 = vadd.f32 %v5282, %v5283
        %v5285 = vsel %vm2291, %v5249, 0.0
        %v5286 = vadd.f32 %v5284, %v5285
        %v5287 = vsel %vm2291, %v5250, 0.0
        %v5288 = vadd.f32 %v5286, %v5287
        %v5289 = vsel %vm2291, %v5251, 0.0
        %v5290 = vadd.f32 %v5288, %v5289
        %v5291 = vsel %vm2291, %v5252, 0.0
        %v5292 = vadd.f32 %v5290, %v5291
        %v5293 = vsel %vm2291, %v5253, 0.0
        %v5294 = vadd.f32 %v5292, %v5293
        %v5295 = vsel %vm2291, %v5254, 0.0
        %v5296 = vadd.f32 %v5294, %v5295
        %v5297 = vsel %vm2291, %v5255, 0.0
        %v5298 = vadd.f32 %v5296, %v5297
        %v5299 = vsel %vm2291, %v5256, 0.0
        %v5300 = vadd.f32 %v5298, %v5299
        %v5301 = vsel %vm2291, %v5257, 0.0
        %v5302 = vadd.f32 %v5300, %v5301
        %v5303 = vsel %vm2291, %v5258, 0.0
        %v5304 = vadd.f32 %v5302, %v5303
        %v5305 = vsel %vm2291, %v5259, 0.0
        %v5306 = vadd.f32 %v5304, %v5305
        %v5307 = vsel %vm2291, %v5260, 0.0
        %v5308 = vadd.f32 %v5306, %v5307
        %v5309 = vsel %vm2291, %v5261, 0.0
        %v5310 = vadd.f32 %v5308, %v5309
        %v5311 = vsel %vm2291, %v5262, 0.0
        %v5312 = vadd.f32 %v5310, %v5311
        %v5313 = vsel %vm2291, %v5263, 0.0
        %v5314 = vadd.f32 %v5312, %v5313
        %v5315 = vsel %vm2291, %v5264, 0.0
        %v5316 = vadd.f32 %v5314, %v5315
        %v5317 = vsel %vm2291, %v5265, 0.0
        %v5318 = vadd.f32 %v5316, %v5317
        %v5319 = vsel %vm2291, %v5266, 0.0
        %v5320 = vadd.f32 %v5318, %v5319
        %v5321 = vsel %vm2291, %v5267, 0.0
        %v5322 = vadd.f32 %v5320, %v5321
        %v5323 = vsel %vm2291, %v5268, 0.0
        %v5324 = vadd.f32 %v5322, %v5323
        %v5325 = vsel %vm2291, %v5269, 0.0
        %v5326 = vadd.f32 %v5324, %v5325
        %v5327 = vsel %vm2291, %v5270, 0.0
        %v5328 = vadd.f32 %v5326, %v5327
        %v5329 = vsel %vm2291, %v5271, 0.0
        %v5330 = vadd.f32 %v5328, %v5329
        %v5331 = vsel %vm2291, %v5272, 0.0
        %v5332 = vadd.f32 %v5330, %v5331
        %v5333 = vsel %vm2291, %v5273, 0.0
        %v5334 = vadd.f32 %v5332, %v5333
        %v5335 = vsel %vm2291, %v5274, 0.0
        %v5336 = vadd.f32 %v5334, %v5335
        %v5337 = vsel %vm2291, %v5275, 0.0
        %v5338 = vadd.f32 %v5336, %v5337
        %v5339 = vrot.slane %v5338, 4
        %v5340 = vadd.f32 %v5338, %v5339
        %v5341 = vrot.slane %v5340, 2
        %v5342 = vadd.f32 %v5340, %v5341
        %v5343 = vrot.slane %v5342, 1
        %v5344 = vadd.f32 %v5342, %v5343
        %v5345 = vmul.f32 %v5344, %v2367
        %v5346 = vmul.f32 %v5244, %v5244
        %v5347 = vmul.f32 %v5245, %v5245
        %v5348 = vmul.f32 %v5246, %v5246
        %v5349 = vmul.f32 %v5247, %v5247
        %v5350 = vmul.f32 %v5248, %v5248
        %v5351 = vmul.f32 %v5249, %v5249
        %v5352 = vmul.f32 %v5250, %v5250
        %v5353 = vmul.f32 %v5251, %v5251
        %v5354 = vmul.f32 %v5252, %v5252
        %v5355 = vmul.f32 %v5253, %v5253
        %v5356 = vmul.f32 %v5254, %v5254
        %v5357 = vmul.f32 %v5255, %v5255
        %v5358 = vmul.f32 %v5256, %v5256
        %v5359 = vmul.f32 %v5257, %v5257
        %v5360 = vmul.f32 %v5258, %v5258
        %v5361 = vmul.f32 %v5259, %v5259
        %v5362 = vmul.f32 %v5260, %v5260
        %v5363 = vmul.f32 %v5261, %v5261
        %v5364 = vmul.f32 %v5262, %v5262
        %v5365 = vmul.f32 %v5263, %v5263
        %v5366 = vmul.f32 %v5264, %v5264
        %v5367 = vmul.f32 %v5265, %v5265
        %v5368 = vmul.f32 %v5266, %v5266
        %v5369 = vmul.f32 %v5267, %v5267
        %v5370 = vmul.f32 %v5268, %v5268
        %v5371 = vmul.f32 %v5269, %v5269
        %v5372 = vmul.f32 %v5270, %v5270
        %v5373 = vmul.f32 %v5271, %v5271
        %v5374 = vmul.f32 %v5272, %v5272
        %v5375 = vmul.f32 %v5273, %v5273
        %v5376 = vmul.f32 %v5274, %v5274
        %v5377 = vmul.f32 %v5275, %v5275
        %v5378 = vsel %vm2291, %v5346, 0.0
        %v5379 = vsel %vm2291, %v5347, 0.0
        %v5380 = vadd.f32 %v5378, %v5379
        %v5381 = vsel %vm2291, %v5348, 0.0
        %v5382 = vadd.f32 %v5380, %v5381
        %v5383 = vsel %vm2291, %v5349, 0.0
        %v5384 = vadd.f32 %v5382, %v5383
        %v5385 = vsel %vm2291, %v5350, 0.0
        %v5386 = vadd.f32 %v5384, %v5385
        %v5387 = vsel %vm2291, %v5351, 0.0
        %v5388 = vadd.f32 %v5386, %v5387
        %v5389 = vsel %vm2291, %v5352, 0.0
        %v5390 = vadd.f32 %v5388, %v5389
        %v5391 = vsel %vm2291, %v5353, 0.0
        %v5392 = vadd.f32 %v5390, %v5391
        %v5393 = vsel %vm2291, %v5354, 0.0
        %v5394 = vadd.f32 %v5392, %v5393
        %v5395 = vsel %vm2291, %v5355, 0.0
        %v5396 = vadd.f32 %v5394, %v5395
        %v5397 = vsel %vm2291, %v5356, 0.0
        %v5398 = vadd.f32 %v5396, %v5397
        %v5399 = vsel %vm2291, %v5357, 0.0
        %v5400 = vadd.f32 %v5398, %v5399
        %v5401 = vsel %vm2291, %v5358, 0.0
        %v5402 = vadd.f32 %v5400, %v5401
        %v5403 = vsel %vm2291, %v5359, 0.0
        %v5404 = vadd.f32 %v5402, %v5403
        %v5405 = vsel %vm2291, %v5360, 0.0
        %v5406 = vadd.f32 %v5404, %v5405
        %v5407 = vsel %vm2291, %v5361, 0.0
        %v5408 = vadd.f32 %v5406, %v5407
        %v5409 = vsel %vm2291, %v5362, 0.0
        %v5410 = vadd.f32 %v5408, %v5409
        %v5411 = vsel %vm2291, %v5363, 0.0
        %v5412 = vadd.f32 %v5410, %v5411
        %v5413 = vsel %vm2291, %v5364, 0.0
        %v5414 = vadd.f32 %v5412, %v5413
        %v5415 = vsel %vm2291, %v5365, 0.0
        %v5416 = vadd.f32 %v5414, %v5415
        %v5417 = vsel %vm2291, %v5366, 0.0
        %v5418 = vadd.f32 %v5416, %v5417
        %v5419 = vsel %vm2291, %v5367, 0.0
        %v5420 = vadd.f32 %v5418, %v5419
        %v5421 = vsel %vm2291, %v5368, 0.0
        %v5422 = vadd.f32 %v5420, %v5421
        %v5423 = vsel %vm2291, %v5369, 0.0
        %v5424 = vadd.f32 %v5422, %v5423
        %v5425 = vsel %vm2291, %v5370, 0.0
        %v5426 = vadd.f32 %v5424, %v5425
        %v5427 = vsel %vm2291, %v5371, 0.0
        %v5428 = vadd.f32 %v5426, %v5427
        %v5429 = vsel %vm2291, %v5372, 0.0
        %v5430 = vadd.f32 %v5428, %v5429
        %v5431 = vsel %vm2291, %v5373, 0.0
        %v5432 = vadd.f32 %v5430, %v5431
        %v5433 = vsel %vm2291, %v5374, 0.0
        %v5434 = vadd.f32 %v5432, %v5433
        %v5435 = vsel %vm2291, %v5375, 0.0
        %v5436 = vadd.f32 %v5434, %v5435
        %v5437 = vsel %vm2291, %v5376, 0.0
        %v5438 = vadd.f32 %v5436, %v5437
        %v5439 = vsel %vm2291, %v5377, 0.0
        %v5440 = vadd.f32 %v5438, %v5439
        %v5441 = vrot.slane %v5440, 4
        %v5442 = vadd.f32 %v5440, %v5441
        %v5443 = vrot.slane %v5442, 2
        %v5444 = vadd.f32 %v5442, %v5443
        %v5445 = vrot.slane %v5444, 1
        %v5446 = vadd.f32 %v5444, %v5445
        %v5447 = vmul.f32 %v5446, %v2367
        %v5448 = vmul.f32 %v5345, %v5345
        %v5449 = vsub.f32 %v5447, %v5448
        %v5450 = vsub.f32 %v5244, %v5345
        %v5451 = vsub.f32 %v5245, %v5345
        %v5452 = vsub.f32 %v5246, %v5345
        %v5453 = vsub.f32 %v5247, %v5345
        %v5454 = vsub.f32 %v5248, %v5345
        %v5455 = vsub.f32 %v5249, %v5345
        %v5456 = vsub.f32 %v5250, %v5345
        %v5457 = vsub.f32 %v5251, %v5345
        %v5458 = vsub.f32 %v5252, %v5345
        %v5459 = vsub.f32 %v5253, %v5345
        %v5460 = vsub.f32 %v5254, %v5345
        %v5461 = vsub.f32 %v5255, %v5345
        %v5462 = vsub.f32 %v5256, %v5345
        %v5463 = vsub.f32 %v5257, %v5345
        %v5464 = vsub.f32 %v5258, %v5345
        %v5465 = vsub.f32 %v5259, %v5345
        %v5466 = vsub.f32 %v5260, %v5345
        %v5467 = vsub.f32 %v5261, %v5345
        %v5468 = vsub.f32 %v5262, %v5345
        %v5469 = vsub.f32 %v5263, %v5345
        %v5470 = vsub.f32 %v5264, %v5345
        %v5471 = vsub.f32 %v5265, %v5345
        %v5472 = vsub.f32 %v5266, %v5345
        %v5473 = vsub.f32 %v5267, %v5345
        %v5474 = vsub.f32 %v5268, %v5345
        %v5475 = vsub.f32 %v5269, %v5345
        %v5476 = vsub.f32 %v5270, %v5345
        %v5477 = vsub.f32 %v5271, %v5345
        %v5478 = vsub.f32 %v5272, %v5345
        %v5479 = vsub.f32 %v5273, %v5345
        %v5480 = vsub.f32 %v5274, %v5345
        %v5481 = vsub.f32 %v5275, %v5345
        %v5482 = vadd.f32 %v5449, 1e-05
        %v5483 = vrsqrt.pop %v5482
        %v5484 = vmul.f32 %v5483, %v5482
        %v5485 = vmul.f32 %v5484, %v5483
        %v5486 = vmul.f32 0.5, %v5485
        %v5487 = vsub.f32 1.5, %v5486
        %v5488 = vmul.f32 %v5483, %v5487
        %vm5489 = vweird.f32 %v5482
        %vm5490 = vweird.f32 %v5483
        %vm5491 = vmor %vm5489, %vm5490
        %v5492 = vsel %vm5491, %v5483, %v5488
        %v5493 = vmul.f32 %v5450, %v5492
        %v5494 = vmul.f32 %v5451, %v5492
        %v5495 = vmul.f32 %v5452, %v5492
        %v5496 = vmul.f32 %v5453, %v5492
        %v5497 = vmul.f32 %v5454, %v5492
        %v5498 = vmul.f32 %v5455, %v5492
        %v5499 = vmul.f32 %v5456, %v5492
        %v5500 = vmul.f32 %v5457, %v5492
        %v5501 = vmul.f32 %v5458, %v5492
        %v5502 = vmul.f32 %v5459, %v5492
        %v5503 = vmul.f32 %v5460, %v5492
        %v5504 = vmul.f32 %v5461, %v5492
        %v5505 = vmul.f32 %v5462, %v5492
        %v5506 = vmul.f32 %v5463, %v5492
        %v5507 = vmul.f32 %v5464, %v5492
        %v5508 = vmul.f32 %v5465, %v5492
        %v5509 = vmul.f32 %v5466, %v5492
        %v5510 = vmul.f32 %v5467, %v5492
        %v5511 = vmul.f32 %v5468, %v5492
        %v5512 = vmul.f32 %v5469, %v5492
        %v5513 = vmul.f32 %v5470, %v5492
        %v5514 = vmul.f32 %v5471, %v5492
        %v5515 = vmul.f32 %v5472, %v5492
        %v5516 = vmul.f32 %v5473, %v5492
        %v5517 = vmul.f32 %v5474, %v5492
        %v5518 = vmul.f32 %v5475, %v5492
        %v5519 = vmul.f32 %v5476, %v5492
        %v5520 = vmul.f32 %v5477, %v5492
        %v5521 = vmul.f32 %v5478, %v5492
        %v5522 = vmul.f32 %v5479, %v5492
        %v5523 = vmul.f32 %v5480, %v5492
        %v5524 = vmul.f32 %v5481, %v5492
        %v5525 = vmax.f32 %v5493, 0.0
        %v5526 = vmax.f32 %v5494, 0.0
        %v5527 = vmax.f32 %v5495, 0.0
        %v5528 = vmax.f32 %v5496, 0.0
        %v5529 = vmax.f32 %v5497, 0.0
        %v5530 = vmax.f32 %v5498, 0.0
        %v5531 = vmax.f32 %v5499, 0.0
        %v5532 = vmax.f32 %v5500, 0.0
        %v5533 = vmax.f32 %v5501, 0.0
        %v5534 = vmax.f32 %v5502, 0.0
        %v5535 = vmax.f32 %v5503, 0.0
        %v5536 = vmax.f32 %v5504, 0.0
        %v5537 = vmax.f32 %v5505, 0.0
        %v5538 = vmax.f32 %v5506, 0.0
        %v5539 = vmax.f32 %v5507, 0.0
        %v5540 = vmax.f32 %v5508, 0.0
        %v5541 = vmax.f32 %v5509, 0.0
        %v5542 = vmax.f32 %v5510, 0.0
        %v5543 = vmax.f32 %v5511, 0.0
        %v5544 = vmax.f32 %v5512, 0.0
        %v5545 = vmax.f32 %v5513, 0.0
        %v5546 = vmax.f32 %v5514, 0.0
        %v5547 = vmax.f32 %v5515, 0.0
        %v5548 = vmax.f32 %v5516, 0.0
        %v5549 = vmax.f32 %v5517, 0.0
        %v5550 = vmax.f32 %v5518, 0.0
        %v5551 = vmax.f32 %v5519, 0.0
        %v5552 = vmax.f32 %v5520, 0.0
        %v5553 = vmax.f32 %v5521, 0.0
        %v5554 = vmax.f32 %v5522, 0.0
        %v5555 = vmax.f32 %v5523, 0.0
        %v5556 = vmax.f32 %v5524, 0.0
        %v5557 = vld [vmem:[%s3] sm:$0x3]
        %v5558 = vld [vmem:[%s4] sm:$0x1]
        %v5560 = vperm.slane %v5558, 0
        %v5563 = vsel %vm765, %v5557, 0
        %5565 = vmatpush.bf16.msra.mxu0 0
        %5566 = vmatpush.bf16.msra.mxu0 0
        %5567 = vmatpush.bf16.msra.mxu0 0
        %5568 = vmatpush.bf16.msra.mxu0 0
        %5569 = vmatpush.bf16.msra.mxu0 0
        %5570 = vmatpush.bf16.msra.mxu0 0
        %5571 = vmatpush.bf16.msra.mxu0 0
        %5572 = vmatpush.bf16.msra.mxu0 %v5563
        %5573 = vmatmul.bf16.gmra.mxu0 %v721
        %v5574 = vpop.f32.mrf.mxu0
        %v5575 = vadd.f32 %v5560, %v5574
        %v5576 = vpop.f32.mrf.mxu0
        %v5577 = vadd.f32 %v5560, %v5576
        %5578 = vmatmul.bf16.gmra.mxu0 %v724
        %v5579 = vpop.f32.mrf.mxu0
        %v5580 = vadd.f32 %v5560, %v5579
        %v5581 = vpop.f32.mrf.mxu0
        %v5582 = vadd.f32 %v5560, %v5581
        %5583 = vmatmul.bf16.gmra.mxu0 %v727
        %v5584 = vpop.f32.mrf.mxu0
        %v5585 = vadd.f32 %v5560, %v5584
        %v5586 = vpop.f32.mrf.mxu0
        %v5587 = vadd.f32 %v5560, %v5586
        %5588 = vmatmul.bf16.gmra.mxu0 %v730
        %v5589 = vpop.f32.mrf.mxu0
        %v5590 = vadd.f32 %v5560, %v5589
        %v5591 = vpop.f32.mrf.mxu0
        %v5592 = vadd.f32 %v5560, %v5591
        %5593 = vmatmul.bf16.gmra.mxu0 %v733
        %v5594 = vpop.f32.mrf.mxu0
        %v5595 = vadd.f32 %v5560, %v5594
        %v5596 = vpop.f32.mrf.mxu0
        %v5597 = vadd.f32 %v5560, %v5596
        %5598 = vmatmul.bf16.gmra.mxu0 %v736
        %v5599 = vpop.f32.mrf.mxu0
        %v5600 = vadd.f32 %v5560, %v5599
        %v5601 = vpop.f32.mrf.mxu0
        %v5602 = vadd.f32 %v5560, %v5601
        %5603 = vmatmul.bf16.gmra.mxu0 %v739
        %v5604 = vpop.f32.mrf.mxu0
        %v5605 = vadd.f32 %v5560, %v5604
        %v5606 = vpop.f32.mrf.mxu0
        %v5607 = vadd.f32 %v5560, %v5606
        %5608 = vmatmul.bf16.gmra.mxu0 %v742
        %v5609 = vpop.f32.mrf.mxu0
        %v5610 = vadd.f32 %v5560, %v5609
        %v5611 = vpop.f32.mrf.mxu0
        %v5612 = vadd.f32 %v5560, %v5611
        %5613 = vmatmul.bf16.gmra.mxu0 %v745
        %v5614 = vpop.f32.mrf.mxu0
        %v5615 = vadd.f32 %v5560, %v5614
        %v5616 = vpop.f32.mrf.mxu0
        %v5617 = vadd.f32 %v5560, %v5616
        %5618 = vmatmul.bf16.gmra.mxu0 %v748
        %v5619 = vpop.f32.mrf.mxu0
        %v5620 = vadd.f32 %v5560, %v5619
        %v5621 = vpop.f32.mrf.mxu0
        %v5622 = vadd.f32 %v5560, %v5621
        %5623 = vmatmul.bf16.gmra.mxu0 %v751
        %v5624 = vpop.f32.mrf.mxu0
        %v5625 = vadd.f32 %v5560, %v5624
        %v5626 = vpop.f32.mrf.mxu0
        %v5627 = vadd.f32 %v5560, %v5626
        %5628 = vmatmul.bf16.gmra.mxu0 %v754
        %v5629 = vpop.f32.mrf.mxu0
        %v5630 = vadd.f32 %v5560, %v5629
        %v5631 = vpop.f32.mrf.mxu0
        %v5632 = vadd.f32 %v5560, %v5631
        %5633 = vmatmul.bf16.gmra.mxu0 %v757
        %v5634 = vpop.f32.mrf.mxu0
        %v5635 = vadd.f32 %v5560, %v5634
        %v5636 = vpop.f32.mrf.mxu0
        %v5637 = vadd.f32 %v5560, %v5636
        %5638 = vmatmul.bf16.gmra.mxu0 %v760
        %v5639 = vpop.f32.mrf.mxu0
        %v5640 = vadd.f32 %v5560, %v5639
        %v5641 = vpop.f32.mrf.mxu0
        %v5642 = vadd.f32 %v5560, %v5641
        %5643 = vmatmul.bf16.gmra.mxu0 %v763
        %v5644 = vpop.f32.mrf.mxu0
        %v5645 = vadd.f32 %v5560, %v5644
        %v5646 = vpop.f32.mrf.mxu0
        %v5647 = vadd.f32 %v5560, %v5646
        %5648 = vmatmul.bf16.gmra.mxu0 %v1595
        %v5649 = vpop.f32.mrf.mxu0
        %v5650 = vadd.f32 %v5560, %v5649
        %v5651 = vpop.f32.mrf.mxu0
        %v5652 = vadd.f32 %v5560, %v5651
        %5653 = vdwg.mxu0
        %v5654 = vadd.f32 %v5525, %v5575
        %v5655 = vadd.f32 %v5526, %v5577
        %v5656 = vadd.f32 %v5527, %v5580
        %v5657 = vadd.f32 %v5528, %v5582
        %v5658 = vadd.f32 %v5529, %v5585
        %v5659 = vadd.f32 %v5530, %v5587
        %v5660 = vadd.f32 %v5531, %v5590
        %v5661 = vadd.f32 %v5532, %v5592
        %v5662 = vadd.f32 %v5533, %v5595
        %v5663 = vadd.f32 %v5534, %v5597
        %v5664 = vadd.f32 %v5535, %v5600
        %v5665 = vadd.f32 %v5536, %v5602
        %v5666 = vadd.f32 %v5537, %v5605
        %v5667 = vadd.f32 %v5538, %v5607
        %v5668 = vadd.f32 %v5539, %v5610
        %v5669 = vadd.f32 %v5540, %v5612
        %v5670 = vadd.f32 %v5541, %v5615
        %v5671 = vadd.f32 %v5542, %v5617
        %v5672 = vadd.f32 %v5543, %v5620
        %v5673 = vadd.f32 %v5544, %v5622
        %v5674 = vadd.f32 %v5545, %v5625
        %v5675 = vadd.f32 %v5546, %v5627
        %v5676 = vadd.f32 %v5547, %v5630
        %v5677 = vadd.f32 %v5548, %v5632
        %v5678 = vadd.f32 %v5549, %v5635
        %v5679 = vadd.f32 %v5550, %v5637
        %v5680 = vadd.f32 %v5551, %v5640
        %v5681 = vadd.f32 %v5552, %v5642
        %v5682 = vadd.f32 %v5553, %v5645
        %v5683 = vadd.f32 %v5554, %v5647
        %v5684 = vadd.f32 %v5555, %v5650
        %v5685 = vadd.f32 %v5556, %v5652
        %v5686 = vmax.f32 %v5654, 0.0
        %v5687 = vmax.f32 %v5655, 0.0
        %v5688 = vmax.f32 %v5656, 0.0
        %v5689 = vmax.f32 %v5657, 0.0
        %v5690 = vmax.f32 %v5658, 0.0
        %v5691 = vmax.f32 %v5659, 0.0
        %v5692 = vmax.f32 %v5660, 0.0
        %v5693 = vmax.f32 %v5661, 0.0
        %v5694 = vmax.f32 %v5662, 0.0
        %v5695 = vmax.f32 %v5663, 0.0
        %v5696 = vmax.f32 %v5664, 0.0
        %v5697 = vmax.f32 %v5665, 0.0
        %v5698 = vmax.f32 %v5666, 0.0
        %v5699 = vmax.f32 %v5667, 0.0
        %v5700 = vmax.f32 %v5668, 0.0
        %v5701 = vmax.f32 %v5669, 0.0
        %v5702 = vmax.f32 %v5670, 0.0
        %v5703 = vmax.f32 %v5671, 0.0
        %v5704 = vmax.f32 %v5672, 0.0
        %v5705 = vmax.f32 %v5673, 0.0
        %v5706 = vmax.f32 %v5674, 0.0
        %v5707 = vmax.f32 %v5675, 0.0
        %v5708 = vmax.f32 %v5676, 0.0
        %v5709 = vmax.f32 %v5677, 0.0
        %v5710 = vmax.f32 %v5678, 0.0
        %v5711 = vmax.f32 %v5679, 0.0
        %v5712 = vmax.f32 %v5680, 0.0
        %v5713 = vmax.f32 %v5681, 0.0
        %v5714 = vmax.f32 %v5682, 0.0
        %v5715 = vmax.f32 %v5683, 0.0
        %v5716 = vmax.f32 %v5684, 0.0
        %v5717 = vmax.f32 %v5685, 0.0
        %5718 = vst.msk [vmem:[%s217] sm:$0xff] %vm2291, %v5686
        %5719 = vst.msk [vmem:[%s217 + $0x8] sm:$0xff] %vm2291, %v5687
        %5720 = vst.msk [vmem:[%s217 + $0x10] sm:$0xff] %vm2291, %v5688
        %5721 = vst.msk [vmem:[%s217 + $0x18] sm:$0xff] %vm2291, %v5689
        %5722 = vst.msk [vmem:[%s217 + $0x20] sm:$0xff] %vm2291, %v5690
        %5723 = vst.msk [vmem:[%s217 + $0x28] sm:$0xff] %vm2291, %v5691
        %5724 = vst.msk [vmem:[%s217 + $0x30] sm:$0xff] %vm2291, %v5692
        %5725 = vst.msk [vmem:[%s217 + $0x38] sm:$0xff] %vm2291, %v5693
        %5726 = vst.msk [vmem:[%s217 + $0x40] sm:$0xff] %vm2291, %v5694
        %5727 = vst.msk [vmem:[%s217 + $0x48] sm:$0xff] %vm2291, %v5695
        %5728 = vst.msk [vmem:[%s217 + $0x50] sm:$0xff] %vm2291, %v5696
        %5729 = vst.msk [vmem:[%s217 + $0x58] sm:$0xff] %vm2291, %v5697
        %5730 = vst.msk [vmem:[%s217 + $0x60] sm:$0xff] %vm2291, %v5698
        %5731 = vst.msk [vmem:[%s217 + $0x68] sm:$0xff] %vm2291, %v5699
        %5732 = vst.msk [vmem:[%s217 + $0x70] sm:$0xff] %vm2291, %v5700
        %5733 = vst.msk [vmem:[%s217 + $0x78] sm:$0xff] %vm2291, %v5701
        %5734 = vst.msk [vmem:[%s217 + $0x80] sm:$0xff] %vm2291, %v5702
        %5735 = vst.msk [vmem:[%s217 + $0x88] sm:$0xff] %vm2291, %v5703
        %5736 = vst.msk [vmem:[%s217 + $0x90] sm:$0xff] %vm2291, %v5704
        %5737 = vst.msk [vmem:[%s217 + $0x98] sm:$0xff] %vm2291, %v5705
        %5738 = vst.msk [vmem:[%s217 + $0xa0] sm:$0xff] %vm2291, %v5706
        %5739 = vst.msk [vmem:[%s217 + $0xa8] sm:$0xff] %vm2291, %v5707
        %5740 = vst.msk [vmem:[%s217 + $0xb0] sm:$0xff] %vm2291, %v5708
        %5741 = vst.msk [vmem:[%s217 + $0xb8] sm:$0xff] %vm2291, %v5709
        %5742 = vst.msk [vmem:[%s217 + $0xc0] sm:$0xff] %vm2291, %v5710
        %5743 = vst.msk [vmem:[%s217 + $0xc8] sm:$0xff] %vm2291, %v5711
        %5744 = vst.msk [vmem:[%s217 + $0xd0] sm:$0xff] %vm2291, %v5712
        %5745 = vst.msk [vmem:[%s217 + $0xd8] sm:$0xff] %vm2291, %v5713
        %5746 = vst.msk [vmem:[%s217 + $0xe0] sm:$0xff] %vm2291, %v5714
        %5747 = vst.msk [vmem:[%s217 + $0xe8] sm:$0xff] %vm2291, %v5715
        %5748 = vst.msk [vmem:[%s217 + $0xf0] sm:$0xff] %vm2291, %v5716
        %5749 = vst.msk [vmem:[%s217 + $0xf8] sm:$0xff] %vm2291, %v5717
        %s5750 = sand.u32 %s137, 1
        %s5751 = scalar_lea.sflag [#allocation4], %s5750
        %s5752 = sand.u32 %s137, 1
        %s5753 = smul.addr %s5752, 256
        %s5754 = scalar_lea.vmem [#allocation3], %s5753
        // Predicated region
        $region41: #{tpu_custom_call.1} parent=39 // pred_check
          %p5755 = pneg %p147
        $region42: #{tpu_custom_call.1} parent=39 // pred_check_branch
          %5757 = sbr.rel (%p5755) target = $region44
        $region43: #{tpu_custom_call.1} parent=39 // pred_region
          %5759 = vsyncadd %s5751, 0
          %s5760 = smul.addr %s19, 32
          %s5761 = smul.addr %s5760, 8
          %s5762 = scalar_lea.hbm %s5, %s5761
          %s5763 = sshll.u32 %s5754, 4
          %s5764 = int_to_ptr.vmem [resolvable:$true] %s5763
          %s5765 = sshll.u32 %s5762, 4
          %s5766 = int_to_ptr.hbm [resolvable:$true] %s5765
          %5771 = dma.vmem_to_hbm [thread:$0]  %s5764, 4096, %s5766, %s5751, 128, 128, 8
        $region44: #{tpu_custom_call.1} parent=39 // pred_fallthru
          _
      $region40: #{tpu_custom_call.1} parent=5 // pred_fallthru
        _
      %p5772 = scmp.le.s32.totalorder 2, %s14
      // Predicated region
      $region45: #{tpu_custom_call.1} parent=5 // pred_check
        %p5773 = pneg %p5772
      $region46: #{tpu_custom_call.1} parent=5 // pred_check_branch
        %5775 = sbr.rel (%p5773) target = $region48
      $region47: #{tpu_custom_call.1} parent=5 // pred_region
        %s5776 = ssub.s32 %s14, 2
        // Predicated region
        $region49: #{tpu_custom_call.1} parent=47 // pred_check
          %p5777 = pneg %p153
        $region50: #{tpu_custom_call.1} parent=47 // pred_check_branch
          %5779 = sbr.rel (%p5777) target = $region52
        $region51: #{tpu_custom_call.1} parent=47 // pred_region
          %s5780 = sand.u32 %s138, 1
          %s5781 = scalar_lea.sflag [#allocation4], %s5780
          %s5782 = sand.u32 %s138, 1
          %s5783 = smul.addr %s5782, 256
          %s5784 = scalar_lea.vmem [#allocation3], %s5783
          %5786 = dma.done %s5781, 4096
        $region52: #{tpu_custom_call.1} parent=47 // pred_fallthru
          _
      $region48: #{tpu_custom_call.1} parent=5 // pred_fallthru
        _
    $region6: #{tpu_custom_call.1} parent=1 // loop_footer
      %s18 = sadd.s32 1, %s14
    $region7: #{tpu_custom_call.1} parent=1 // loop_footer_branch
      %13 = sbr.rel target = $region3
    $region8: #{tpu_custom_call.1} parent=1 // loop_exit
      _
    %5787 = vsyncpa [#allocation4], 1
    %s5788 = scalar_lea.sflag [#allocation4], 1
    %5789 = vsyncpa %s5788, 1

</llo_original>
